<compile_context>
chip_gen: v5e
topology: v5e:2x2
jax: 0.10.0
libtpu: 0.0.40
codegen_flags: <defaults>
</compile_context>

<pallas_src>
import functools

import jax
import jax.numpy as jnp
from jax.experimental import pallas as pl
from jax.experimental.pallas import tpu as pltpu

EPS = 1e-5


def _round_up(n, m):
    return -(-n // m) * m


def _slab_layout(kpatch, n_stages, C):
    """Static row layout of the packed (K, C) parameter slab.

    Every section starts at a multiple-of-8 row so the matmul operands
    (w1, wp, wc) are cleanly (8,128)-tile-aligned slices.
    """
    sections = [
        ("b1", 1), ("g1", 1), ("be1", 1),      # stem bias / BN gamma / BN beta
        ("w1", kpatch),                        # stem conv weight (KH*KW, C)
        ("wd", n_stages * 9),                  # depthwise taps, row = st*9 + t
        ("bd", n_stages), ("bp", n_stages),    # depthwise / pointwise biases
        ("g", n_stages), ("be", n_stages),     # per-stage BN gamma / beta
        ("wp", n_stages * C),                  # pointwise weights, (C,C) per stage
        ("wc", C),                             # classifier weight, lane-padded
    ]
    layout, off = {}, 0
    for name, rows in sections:
        layout[name] = (off, rows)
        off += _round_up(rows, 8)
    return layout, off


def _bn_relu_train(y, gamma, beta):
    """Training-mode BatchNorm over rows of (M, C), then ReLU.

    One-pass stats in f32 (v5e has no bf16 VPU/EUP); per-channel scale/shift
    hoisted so the per-element work is one FMA plus a max.
    TODO(synk): switch to a centered/two-pass variance for the full-size model
    (cancellation risk if activation mean >> std).
    """
    m = y.shape[0]
    s1 = jnp.sum(y, axis=0, keepdims=True)
    s2 = jnp.sum(y * y, axis=0, keepdims=True)
    mean = s1 * (1.0 / m)
    var = s2 * (1.0 / m) - mean * mean          # biased var (matches BN2d train)
    scale = gamma * jax.lax.rsqrt(var + EPS)    # (1, C), rsqrt -> EUP
    shift = beta - mean * scale                 # (1, C)
    return jnp.maximum(y * scale + shift, 0.0)


def audio_dscnn_kernel(H1, W1, n_stages, layout,
                       patches_ref, slab_ref, enc_ref, logits_ref):
    M = patches_ref.shape[0]          # N * H1 * W1 flattened (n, i, j) rows
    C = slab_ref.shape[1]             # channels -> 128-lane axis
    N = enc_ref.shape[0]
    HW = H1 * W1

    def rows(name, start, count):     # static (count, C) slice of the slab
        off, _ = layout[name]
        return slab_ref[off + start: off + start + count, :]

    def row(name, i=0):               # single (1, C) parameter row
        return rows(name, i, 1)

    def sec(name):                    # full section
        return rows(name, 0, layout[name][1])

    # ---- stem: Conv2d(1, C, (10,4), stride 2) + bias -> BN -> ReLU ------------
    y = jnp.dot(patches_ref[...], sec("w1"),
                preferred_element_type=jnp.float32) + row("b1")
    a = _bn_relu_train(y, row("g1"), row("be1"))

    # ---- 3x3 depthwise taps: row rolls + (M,1) edge masks (no MXU involved) ---
    # shifted_t[p] = a[p + dh*W1 + dw] when tap (dh,dw) stays inside the H1xW1
    # image flat row p belongs to (zero padding); jnp.roll-style semantics.
    p = jax.lax.broadcasted_iota(jnp.int32, (M, 1), 0)
    pm_hw = p & (HW - 1)              # position inside the H1*W1 image plane
    pm_w = p & (W1 - 1)               # column index j (HW, W1 powers of two)
    tap_masks, tap_shifts = [], []
    for t in range(9):
        dh, dw = t // 3 - 1, t % 3 - 1
        conds = []
        if dh == -1:
            conds.append(pm_hw >= W1)          # row 0 has no row above
        if dh == +1:
            conds.append(pm_hw < HW - W1)      # last row has no row below
        if dw == -1:
            conds.append(pm_w >= 1)            # col 0 has no col to the left
        if dw == +1:
            conds.append(pm_w < W1 - 1)        # last col has no col to the right
        if conds:
            valid = conds[0]
            for c in conds[1:]:
                valid = valid & c
            tap_masks.append(jnp.where(valid, 1.0, 0.0).astype(jnp.float32))
        else:
            tap_masks.append(None)             # centre tap: always valid
        tap_shifts.append((-(dh * W1 + dw)) % M)   # roll amount (static int)

    # ---- 5 x (depthwise 3x3 + bias, pointwise 1x1 + bias, BN, ReLU) -----------
    for st in range(n_stages):
        # accumulator starts from the centre tap with the bias folded in
        d = a * row("wd", st * 9 + 4) + row("bd", st)
        for t in range(9):
            if t == 4:
                continue
            shifted = pltpu.roll(a, tap_shifts[t], axis=0)     # XLU row rotate
            d = d + shifted * (tap_masks[t] * row("wd", st * 9 + t))
        wp = rows("wp", st * C, C)                             # (C_in, C_out)
        y = jnp.dot(d, wp, preferred_element_type=jnp.float32) + row("bp", st)
        a = _bn_relu_train(y, row("g", st), row("be", st))

    # ---- global average pool (tiny MXU matmul) + linear classifier ------------
    rn = jax.lax.broadcasted_iota(jnp.int32, (N, M), 0)
    cm = jax.lax.broadcasted_iota(jnp.int32, (N, M), 1)
    pool = jnp.where((cm >= rn * HW) & (cm < (rn + 1) * HW),
                     1.0 / HW, 0.0).astype(jnp.float32)
    pooled = jnp.dot(pool, a, preferred_element_type=jnp.float32)    # (N, C)
    enc_ref[...] = pooled
    # classifier weight lane-padded to C columns -> unmasked lane-dense store;
    # the wrapper slices back to n_classes.
    logits_ref[...] = jnp.dot(pooled, sec("wc"),
                              preferred_element_type=jnp.float32)


def _conv1_patches(x, kh, kw, sh, sw):
    """im2col of the single-channel stem input: (N, H, W) -> (N*Ho*Wo, kh*kw).

    TODO(synk): at real batch sizes move this gather into the kernel
    (index_map-driven BlockSpec / in-VMEM gather) to avoid the extra HBM
    round trip of the im2col copy.
    """
    N, H, W = x.shape
    Ho = (H - kh) // sh + 1
    Wo = (W - kw) // sw + 1
    ih = (jnp.arange(Ho) * sh)[:, None] + jnp.arange(kh)[None, :]   # (Ho, kh)
    iw = (jnp.arange(Wo) * sw)[:, None] + jnp.arange(kw)[None, :]   # (Wo, kw)
    win = x[:, ih, :][:, :, :, iw]                                  # (N,Ho,kh,Wo,kw)
    win = jnp.transpose(win, (0, 1, 3, 2, 4))                       # (N,Ho,Wo,kh,kw)
    return win.reshape(N * Ho * Wo, kh * kw), Ho, Wo


def _pack_slab(tp, layout, kpatch, n_stages, C, n_classes):
    """Pack every (., C) parameter into one contiguous (K, C) f32 slab
    (one HBM->VMEM DMA instead of twelve small ones)."""
    wc = tp["cls_w"].T.astype(jnp.float32)                           # (C, n_cls)
    wc = jnp.concatenate(
        [wc, jnp.zeros((C, C - n_classes), jnp.float32)], axis=1)    # lane-pad
    sections = {
        "b1": tp["conv1_b"].reshape(1, C),
        "g1": tp["bn1_g"].reshape(1, C),
        "be1": tp["bn1_b"].reshape(1, C),
        "w1": tp["conv1_w"].reshape(C, kpatch).T,
        "wd": jnp.transpose(tp["dw_w"].reshape(n_stages, C, 9),
                            (0, 2, 1)).reshape(n_stages * 9, C),
        "bd": tp["dw_b"].reshape(n_stages, C),
        "bp": tp["pw_b"].reshape(n_stages, C),
        "g": tp["bn_g"].reshape(n_stages, C),
        "be": tp["bn_b"].reshape(n_stages, C),
        "wp": jnp.transpose(tp["pw_w"].reshape(n_stages, C, C),
                            (0, 2, 1)).reshape(n_stages * C, C),
        "wc": wc,
    }
    parts = []
    for name, (_, nrows) in layout.items():     # insertion-ordered
        arr = sections[name].astype(jnp.float32)
        assert arr.shape == (nrows, C)
        pad = _round_up(nrows, 8) - nrows
        if pad:
            arr = jnp.concatenate([arr, jnp.zeros((pad, C), jnp.float32)], 0)
        parts.append(arr)
    return jnp.concatenate(parts, axis=0)


@jax.jit
def audio_dscnn_forward(x, tp):
    """AudioDSCNN forward via one Pallas kernel.

    x : (N, 1, H, W) or (N, H, W) float32 (PyTorch layout).
    tp: dict of PyTorch-layout parameters.
    Returns (encoder_out (N, C), logits (N, n_classes)).
    """
    if x.ndim == 3:                   # mimic the module's unsqueeze(dim=1)
        x = x[:, None]
    N = x.shape[0]
    C = tp["conv1_w"].shape[0]
    n_classes = tp["cls_w"].shape[0]
    KH, KW = tp["conv1_w"].shape[2], tp["conv1_w"].shape[3]
    n_stages = tp["dw_w"].shape[0]

    patches, H1, W1 = _conv1_patches(x[:, 0], KH, KW, 2, 2)
    HW = H1 * W1
    assert HW & (HW - 1) == 0 and W1 & (W1 - 1) == 0, (
        "demo kernel builds the tap masks with bitwise AND; H1*W1 and W1 must "
        "be powers of two")
    # TODO(synk): general H1/W1 needs a divmod-free in-kernel (i, j) index map.
    assert n_classes <= C, "demo packs the lane-padded classifier into the (.,C) slab"

    layout, total_rows = _slab_layout(KH * KW, n_stages, C)
    slab = _pack_slab(tp, layout, KH * KW, n_stages, C, n_classes)
    assert slab.shape == (total_rows, C)

    # TODO(synk): for real batch sizes on v7x, add a "parallel" batch/row grid
    # axis and split train-mode BN into a cross-tile (sum, sumsq) reduction so
    # both TensorCores are used; here the whole problem is ~0.6 MB.
    vmem = pl.BlockSpec(memory_space=pltpu.MemorySpace.VMEM)
    enc, logits_pad = pl.pallas_call(
        functools.partial(audio_dscnn_kernel, H1, W1, n_stages, layout),
        out_shape=(jax.ShapeDtypeStruct((N, C), jnp.float32),
                   jax.ShapeDtypeStruct((N, C), jnp.float32)),
        in_specs=[vmem, vmem],
        out_specs=(vmem, vmem),
    )(patches, slab)
    return enc, logits_pad[:, :n_classes]


def audio_dscnn_reference(x, tp):
    """Pure-JAX (XLA) reference mirroring the PyTorch module exactly."""
    if x.ndim == 3:
        x = x[:, None]
    dn = ("NCHW", "OIHW", "NCHW")
    hp = jax.lax.Precision.HIGHEST
    C = tp["conv1_w"].shape[0]

    def bn_relu(y, gmm, bta):
        mu = jnp.mean(y, axis=(0, 2, 3), keepdims=True)
        var = jnp.mean((y - mu) ** 2, axis=(0, 2, 3), keepdims=True)
        yn = (y - mu) * jax.lax.rsqrt(var + EPS)
        return jax.nn.relu(yn * gmm.reshape(1, -1, 1, 1) + bta.reshape(1, -1, 1, 1))

    y = jax.lax.conv_general_dilated(x, tp["conv1_w"], (2, 2), "VALID",
                                     dimension_numbers=dn, precision=hp)
    y = y + tp["conv1_b"].reshape(1, -1, 1, 1)
    a = bn_relu(y, tp["bn1_g"], tp["bn1_b"])
    for s in range(tp["dw_w"].shape[0]):
        d = jax.lax.conv_general_dilated(a, tp["dw_w"][s], (1, 1),
                                         ((1, 1), (1, 1)), dimension_numbers=dn,
                                         feature_group_count=C, precision=hp)
        d = d + tp["dw_b"][s].reshape(1, -1, 1, 1)
        y = jax.lax.conv_general_dilated(d, tp["pw_w"][s], (1, 1), "VALID",
                                         dimension_numbers=dn, precision=hp)
        y = y + tp["pw_b"][s].reshape(1, -1, 1, 1)
        a = bn_relu(y, tp["bn_g"][s], tp["bn_b"][s])
    pooled = jnp.mean(a, axis=(2, 3))
    logits = jnp.dot(pooled, tp["cls_w"].T, precision=hp)
    return pooled, logits


if __name__ == "__main__":
    # Small AudioDSCNN config: n_channel=128 (fills the 128-lane axis exactly),
    # n_classes=16, MFCC-like input (N=2, 1, 40, 10).
    # Stem (10,4)/stride(2,2) -> 16 x 4 spatial, so M = N*16*4 = 128 rows.
    N, H, W = 2, 40, 10
    C, NCLS, NSTAGES = 128, 16, 5

    key = jax.random.PRNGKey(0)
    ks = jax.random.split(key, 12)

    tp = {  # PyTorch-layout parameters (conv biases included; nn.Conv2d default)
        "conv1_w": 0.15 * jax.random.normal(ks[0], (C, 1, 10, 4), jnp.float32),
        "conv1_b": 0.10 * jax.random.normal(ks[1], (C,), jnp.float32),
        "bn1_g": 1.0 + 0.1 * jax.random.normal(ks[2], (C,), jnp.float32),
        "bn1_b": 0.1 * jax.random.normal(ks[3], (C,), jnp.float32),
        "dw_w": 0.30 * jax.random.normal(ks[4], (NSTAGES, C, 1, 3, 3), jnp.float32),
        "dw_b": 0.10 * jax.random.normal(ks[5], (NSTAGES, C), jnp.float32),
        "pw_w": 0.10 * jax.random.normal(ks[6], (NSTAGES, C, C, 1, 1), jnp.float32),
        "pw_b": 0.10 * jax.random.normal(ks[7], (NSTAGES, C), jnp.float32),
        "bn_g": 1.0 + 0.1 * jax.random.normal(ks[8], (NSTAGES, C), jnp.float32),
        "bn_b": 0.1 * jax.random.normal(ks[9], (NSTAGES, C), jnp.float32),
        "cls_w": 0.10 * jax.random.normal(ks[10], (NCLS, C), jnp.float32),
    }
    x = jax.random.normal(ks[11], (N, 1, H, W), jnp.float32)

    enc, logits = jax.block_until_ready(audio_dscnn_forward(x, tp))
    enc_ref, logits_ref = audio_dscnn_reference(x, tp)

    assert enc.shape == (N, C) and logits.shape == (N, NCLS)
    err_e = float(jnp.max(jnp.abs(enc - enc_ref)))
    err_l = float(jnp.max(jnp.abs(logits - logits_ref)))
    assert bool(jnp.allclose(enc, enc_ref, atol=2e-3, rtol=2e-3)), (
        f"encoder mismatch vs reference: max abs diff = {err_e}")
    assert bool(jnp.allclose(logits, logits_ref, atol=2e-3, rtol=2e-3)), (
        f"logits mismatch vs reference: max abs diff = {err_l}")
    print("KERNEL_OK")
</pallas_src>

<mosaic_0001>
module attributes {stable_mosaic.version = 11 : i64} {
  func.func @audio_dscnn_kernel(%arg0: memref<128x40xf32, #tpu.memory_space<vmem>>, %arg1: memref<912x128xf32, #tpu.memory_space<vmem>>, %arg2: memref<2x128xf32, #tpu.memory_space<vmem>>, %arg3: memref<2x128xf32, #tpu.memory_space<vmem>>) attributes {dimension_semantics = [], scalar_prefetch = 0 : i64, scratch_operands = 0 : i64, tpu.core_type = #tpu.core_type<tc>} {
    %c0 = arith.constant 0 : index
    %c0_0 = arith.constant 0 : index
    %0 = vector.load %arg0[%c0, %c0_0] : memref<128x40xf32, #tpu.memory_space<vmem>>, vector<128x40xf32>
    %c24 = arith.constant 24 : index
    %c0_1 = arith.constant 0 : index
    %1 = vector.load %arg1[%c24, %c0_1] : memref<912x128xf32, #tpu.memory_space<vmem>>, vector<40x128xf32>
    %cst = arith.constant dense<0.000000e+00> : vector<128x128xf32>
    %2 = tpu.matmul %0, %1, %cst {dimension_numbers = #tpu.dot_dimension_numbers<[1], [0], [0], [1], [0, 0, 1, 1], [], []>} : vector<128x40xf32>, vector<40x128xf32>, vector<128x128xf32> -> vector<128x128xf32>
    %c0_2 = arith.constant 0 : index
    %c0_3 = arith.constant 0 : index
    %3 = vector.load %arg1[%c0_2, %c0_3] : memref<912x128xf32, #tpu.memory_space<vmem>>, vector<1x128xf32>
    %4 = vector.broadcast %3 : vector<1x128xf32> to vector<128x128xf32>
    %5 = arith.addf %2, %4 : vector<128x128xf32>
    %c8 = arith.constant 8 : index
    %c0_4 = arith.constant 0 : index
    %6 = vector.load %arg1[%c8, %c0_4] : memref<912x128xf32, #tpu.memory_space<vmem>>, vector<1x128xf32>
    %c16 = arith.constant 16 : index
    %c0_5 = arith.constant 0 : index
    %7 = vector.load %arg1[%c16, %c0_5] : memref<912x128xf32, #tpu.memory_space<vmem>>, vector<1x128xf32>
    %cst_6 = arith.constant dense<0.000000e+00> : vector<128xf32>
    %8 = vector.multi_reduction <add>, %5, %cst_6 [0] : vector<128x128xf32> to vector<128xf32>
    %9 = vector.shape_cast %8 : vector<128xf32> to vector<1x128xf32>
    %10 = arith.mulf %5, %5 : vector<128x128xf32>
    %cst_7 = arith.constant dense<0.000000e+00> : vector<128xf32>
    %11 = vector.multi_reduction <add>, %10, %cst_7 [0] : vector<128x128xf32> to vector<128xf32>
    %12 = vector.shape_cast %11 : vector<128xf32> to vector<1x128xf32>
    %cst_8 = arith.constant 7.812500e-03 : f32
    %13 = vector.broadcast %cst_8 : f32 to vector<1x128xf32>
    %14 = arith.mulf %9, %13 : vector<1x128xf32>
    %cst_9 = arith.constant 7.812500e-03 : f32
    %15 = vector.broadcast %cst_9 : f32 to vector<1x128xf32>
    %16 = arith.mulf %12, %15 : vector<1x128xf32>
    %17 = arith.mulf %14, %14 : vector<1x128xf32>
    %18 = arith.subf %16, %17 : vector<1x128xf32>
    %cst_10 = arith.constant 9.99999974E-6 : f32
    %19 = vector.broadcast %cst_10 : f32 to vector<1x128xf32>
    %20 = arith.addf %18, %19 : vector<1x128xf32>
    %21 = math.rsqrt %20 : vector<1x128xf32>
    %22 = arith.mulf %6, %21 : vector<1x128xf32>
    %23 = arith.mulf %14, %22 : vector<1x128xf32>
    %24 = arith.subf %7, %23 : vector<1x128xf32>
    %25 = vector.broadcast %22 : vector<1x128xf32> to vector<128x128xf32>
    %26 = arith.mulf %5, %25 : vector<128x128xf32>
    %27 = vector.broadcast %24 : vector<1x128xf32> to vector<128x128xf32>
    %28 = arith.addf %26, %27 : vector<128x128xf32>
    %cst_11 = arith.constant 0.000000e+00 : f32
    %29 = vector.broadcast %cst_11 : f32 to vector<128x128xf32>
    %30 = arith.maximumf %28, %29 : vector<128x128xf32>
    %31 = tpu.iota {dimensions = array<i32: 0>} : vector<128x1xi32>
    %c63_i32 = arith.constant 63 : i32
    %32 = vector.broadcast %c63_i32 : i32 to vector<128x1xi32>
    %33 = arith.andi %31, %32 : vector<128x1xi32>
    %c3_i32 = arith.constant 3 : i32
    %34 = vector.broadcast %c3_i32 : i32 to vector<128x1xi32>
    %35 = arith.andi %31, %34 : vector<128x1xi32>
    %c4_i32 = arith.constant 4 : i32
    %36 = vector.broadcast %c4_i32 : i32 to vector<128x1xi32>
    %37 = arith.cmpi sge, %33, %36 : vector<128x1xi32>
    %c1_i32 = arith.constant 1 : i32
    %38 = vector.broadcast %c1_i32 : i32 to vector<128x1xi32>
    %39 = arith.cmpi sge, %35, %38 : vector<128x1xi32>
    %40 = arith.andi %37, %39 : vector<128x1xi1>
    %cst_12 = arith.constant 1.000000e+00 : f32
    %cst_13 = arith.constant 0.000000e+00 : f32
    %41 = vector.broadcast %cst_12 : f32 to vector<128x1xf32>
    %42 = vector.broadcast %cst_13 : f32 to vector<128x1xf32>
    %43 = arith.select %40, %41, %42 : vector<128x1xi1>, vector<128x1xf32>
    %c4_i32_14 = arith.constant 4 : i32
    %44 = vector.broadcast %c4_i32_14 : i32 to vector<128x1xi32>
    %45 = arith.cmpi sge, %33, %44 : vector<128x1xi32>
    %cst_15 = arith.constant 1.000000e+00 : f32
    %cst_16 = arith.constant 0.000000e+00 : f32
    %46 = vector.broadcast %cst_15 : f32 to vector<128x1xf32>
    %47 = vector.broadcast %cst_16 : f32 to vector<128x1xf32>
    %48 = arith.select %45, %46, %47 : vector<128x1xi1>, vector<128x1xf32>
    %c4_i32_17 = arith.constant 4 : i32
    %49 = vector.broadcast %c4_i32_17 : i32 to vector<128x1xi32>
    %50 = arith.cmpi sge, %33, %49 : vector<128x1xi32>
    %c3_i32_18 = arith.constant 3 : i32
    %51 = vector.broadcast %c3_i32_18 : i32 to vector<128x1xi32>
    %52 = arith.cmpi slt, %35, %51 : vector<128x1xi32>
    %53 = arith.andi %50, %52 : vector<128x1xi1>
    %cst_19 = arith.constant 1.000000e+00 : f32
    %cst_20 = arith.constant 0.000000e+00 : f32
    %54 = vector.broadcast %cst_19 : f32 to vector<128x1xf32>
    %55 = vector.broadcast %cst_20 : f32 to vector<128x1xf32>
    %56 = arith.select %53, %54, %55 : vector<128x1xi1>, vector<128x1xf32>
    %c1_i32_21 = arith.constant 1 : i32
    %57 = vector.broadcast %c1_i32_21 : i32 to vector<128x1xi32>
    %58 = arith.cmpi sge, %35, %57 : vector<128x1xi32>
    %cst_22 = arith.constant 1.000000e+00 : f32
    %cst_23 = arith.constant 0.000000e+00 : f32
    %59 = vector.broadcast %cst_22 : f32 to vector<128x1xf32>
    %60 = vector.broadcast %cst_23 : f32 to vector<128x1xf32>
    %61 = arith.select %58, %59, %60 : vector<128x1xi1>, vector<128x1xf32>
    %c3_i32_24 = arith.constant 3 : i32
    %62 = vector.broadcast %c3_i32_24 : i32 to vector<128x1xi32>
    %63 = arith.cmpi slt, %35, %62 : vector<128x1xi32>
    %cst_25 = arith.constant 1.000000e+00 : f32
    %cst_26 = arith.constant 0.000000e+00 : f32
    %64 = vector.broadcast %cst_25 : f32 to vector<128x1xf32>
    %65 = vector.broadcast %cst_26 : f32 to vector<128x1xf32>
    %66 = arith.select %63, %64, %65 : vector<128x1xi1>, vector<128x1xf32>
    %c60_i32 = arith.constant 60 : i32
    %67 = vector.broadcast %c60_i32 : i32 to vector<128x1xi32>
    %68 = arith.cmpi slt, %33, %67 : vector<128x1xi32>
    %c1_i32_27 = arith.constant 1 : i32
    %69 = vector.broadcast %c1_i32_27 : i32 to vector<128x1xi32>
    %70 = arith.cmpi sge, %35, %69 : vector<128x1xi32>
    %71 = arith.andi %68, %70 : vector<128x1xi1>
    %cst_28 = arith.constant 1.000000e+00 : f32
    %cst_29 = arith.constant 0.000000e+00 : f32
    %72 = vector.broadcast %cst_28 : f32 to vector<128x1xf32>
    %73 = vector.broadcast %cst_29 : f32 to vector<128x1xf32>
    %74 = arith.select %71, %72, %73 : vector<128x1xi1>, vector<128x1xf32>
    %c60_i32_30 = arith.constant 60 : i32
    %75 = vector.broadcast %c60_i32_30 : i32 to vector<128x1xi32>
    %76 = arith.cmpi slt, %33, %75 : vector<128x1xi32>
    %cst_31 = arith.constant 1.000000e+00 : f32
    %cst_32 = arith.constant 0.000000e+00 : f32
    %77 = vector.broadcast %cst_31 : f32 to vector<128x1xf32>
    %78 = vector.broadcast %cst_32 : f32 to vector<128x1xf32>
    %79 = arith.select %76, %77, %78 : vector<128x1xi1>, vector<128x1xf32>
    %c60_i32_33 = arith.constant 60 : i32
    %80 = vector.broadcast %c60_i32_33 : i32 to vector<128x1xi32>
    %81 = arith.cmpi slt, %33, %80 : vector<128x1xi32>
    %c3_i32_34 = arith.constant 3 : i32
    %82 = vector.broadcast %c3_i32_34 : i32 to vector<128x1xi32>
    %83 = arith.cmpi slt, %35, %82 : vector<128x1xi32>
    %84 = arith.andi %81, %83 : vector<128x1xi1>
    %cst_35 = arith.constant 1.000000e+00 : f32
    %cst_36 = arith.constant 0.000000e+00 : f32
    %85 = vector.broadcast %cst_35 : f32 to vector<128x1xf32>
    %86 = vector.broadcast %cst_36 : f32 to vector<128x1xf32>
    %87 = arith.select %84, %85, %86 : vector<128x1xi1>, vector<128x1xf32>
    %c68 = arith.constant 68 : index
    %c0_37 = arith.constant 0 : index
    %88 = vector.load %arg1[%c68, %c0_37] : memref<912x128xf32, #tpu.memory_space<vmem>>, vector<1x128xf32>
    %89 = vector.broadcast %88 : vector<1x128xf32> to vector<128x128xf32>
    %90 = arith.mulf %30, %89 : vector<128x128xf32>
    %c112 = arith.constant 112 : index
    %c0_38 = arith.constant 0 : index
    %91 = vector.load %arg1[%c112, %c0_38] : memref<912x128xf32, #tpu.memory_space<vmem>>, vector<1x128xf32>
    %92 = vector.broadcast %91 : vector<1x128xf32> to vector<128x128xf32>
    %93 = arith.addf %90, %92 : vector<128x128xf32>
    %c5_i32 = arith.constant 5 : i32
    %94 = tpu.dynamic_rotate %30 by %c5_i32 dim 0 : vector<128x128xf32>, i32 -> vector<128x128xf32>
    %c64 = arith.constant 64 : index
    %c0_39 = arith.constant 0 : index
    %95 = vector.load %arg1[%c64, %c0_39] : memref<912x128xf32, #tpu.memory_space<vmem>>, vector<1x128xf32>
    %96 = vector.broadcast %43 : vector<128x1xf32> to vector<128x128xf32>
    %97 = vector.broadcast %95 : vector<1x128xf32> to vector<128x128xf32>
    %98 = arith.mulf %96, %97 : vector<128x128xf32>
    %99 = arith.mulf %94, %98 : vector<128x128xf32>
    %100 = arith.addf %93, %99 : vector<128x128xf32>
    %c4_i32_40 = arith.constant 4 : i32
    %101 = tpu.dynamic_rotate %30 by %c4_i32_40 dim 0 : vector<128x128xf32>, i32 -> vector<128x128xf32>
    %c65 = arith.constant 65 : index
    %c0_41 = arith.constant 0 : index
    %102 = vector.load %arg1[%c65, %c0_41] : memref<912x128xf32, #tpu.memory_space<vmem>>, vector<1x128xf32>
    %103 = vector.broadcast %48 : vector<128x1xf32> to vector<128x128xf32>
    %104 = vector.broadcast %102 : vector<1x128xf32> to vector<128x128xf32>
    %105 = arith.mulf %103, %104 : vector<128x128xf32>
    %106 = arith.mulf %101, %105 : vector<128x128xf32>
    %107 = arith.addf %100, %106 : vector<128x128xf32>
    %c3_i32_42 = arith.constant 3 : i32
    %108 = tpu.dynamic_rotate %30 by %c3_i32_42 dim 0 : vector<128x128xf32>, i32 -> vector<128x128xf32>
    %c66 = arith.constant 66 : index
    %c0_43 = arith.constant 0 : index
    %109 = vector.load %arg1[%c66, %c0_43] : memref<912x128xf32, #tpu.memory_space<vmem>>, vector<1x128xf32>
    %110 = vector.broadcast %56 : vector<128x1xf32> to vector<128x128xf32>
    %111 = vector.broadcast %109 : vector<1x128xf32> to vector<128x128xf32>
    %112 = arith.mulf %110, %111 : vector<128x128xf32>
    %113 = arith.mulf %108, %112 : vector<128x128xf32>
    %114 = arith.addf %107, %113 : vector<128x128xf32>
    %c1_i32_44 = arith.constant 1 : i32
    %115 = tpu.dynamic_rotate %30 by %c1_i32_44 dim 0 : vector<128x128xf32>, i32 -> vector<128x128xf32>
    %c67 = arith.constant 67 : index
    %c0_45 = arith.constant 0 : index
    %116 = vector.load %arg1[%c67, %c0_45] : memref<912x128xf32, #tpu.memory_space<vmem>>, vector<1x128xf32>
    %117 = vector.broadcast %61 : vector<128x1xf32> to vector<128x128xf32>
    %118 = vector.broadcast %116 : vector<1x128xf32> to vector<128x128xf32>
    %119 = arith.mulf %117, %118 : vector<128x128xf32>
    %120 = arith.mulf %115, %119 : vector<128x128xf32>
    %121 = arith.addf %114, %120 : vector<128x128xf32>
    %c127_i32 = arith.constant 127 : i32
    %122 = tpu.dynamic_rotate %30 by %c127_i32 dim 0 : vector<128x128xf32>, i32 -> vector<128x128xf32>
    %c69 = arith.constant 69 : index
    %c0_46 = arith.constant 0 : index
    %123 = vector.load %arg1[%c69, %c0_46] : memref<912x128xf32, #tpu.memory_space<vmem>>, vector<1x128xf32>
    %124 = vector.broadcast %66 : vector<128x1xf32> to vector<128x128xf32>
    %125 = vector.broadcast %123 : vector<1x128xf32> to vector<128x128xf32>
    %126 = arith.mulf %124, %125 : vector<128x128xf32>
    %127 = arith.mulf %122, %126 : vector<128x128xf32>
    %128 = arith.addf %121, %127 : vector<128x128xf32>
    %c125_i32 = arith.constant 125 : i32
    %129 = tpu.dynamic_rotate %30 by %c125_i32 dim 0 : vector<128x128xf32>, i32 -> vector<128x128xf32>
    %c70 = arith.constant 70 : index
    %c0_47 = arith.constant 0 : index
    %130 = vector.load %arg1[%c70, %c0_47] : memref<912x128xf32, #tpu.memory_space<vmem>>, vector<1x128xf32>
    %131 = vector.broadcast %74 : vector<128x1xf32> to vector<128x128xf32>
    %132 = vector.broadcast %130 : vector<1x128xf32> to vector<128x128xf32>
    %133 = arith.mulf %131, %132 : vector<128x128xf32>
    %134 = arith.mulf %129, %133 : vector<128x128xf32>
    %135 = arith.addf %128, %134 : vector<128x128xf32>
    %c124_i32 = arith.constant 124 : i32
    %136 = tpu.dynamic_rotate %30 by %c124_i32 dim 0 : vector<128x128xf32>, i32 -> vector<128x128xf32>
    %c71 = arith.constant 71 : index
    %c0_48 = arith.constant 0 : index
    %137 = vector.load %arg1[%c71, %c0_48] : memref<912x128xf32, #tpu.memory_space<vmem>>, vector<1x128xf32>
    %138 = vector.broadcast %79 : vector<128x1xf32> to vector<128x128xf32>
    %139 = vector.broadcast %137 : vector<1x128xf32> to vector<128x128xf32>
    %140 = arith.mulf %138, %139 : vector<128x128xf32>
    %141 = arith.mulf %136, %140 : vector<128x128xf32>
    %142 = arith.addf %135, %141 : vector<128x128xf32>
    %c123_i32 = arith.constant 123 : i32
    %143 = tpu.dynamic_rotate %30 by %c123_i32 dim 0 : vector<128x128xf32>, i32 -> vector<128x128xf32>
    %c72 = arith.constant 72 : index
    %c0_49 = arith.constant 0 : index
    %144 = vector.load %arg1[%c72, %c0_49] : memref<912x128xf32, #tpu.memory_space<vmem>>, vector<1x128xf32>
    %145 = vector.broadcast %87 : vector<128x1xf32> to vector<128x128xf32>
    %146 = vector.broadcast %144 : vector<1x128xf32> to vector<128x128xf32>
    %147 = arith.mulf %145, %146 : vector<128x128xf32>
    %148 = arith.mulf %143, %147 : vector<128x128xf32>
    %149 = arith.addf %142, %148 : vector<128x128xf32>
    %c144 = arith.constant 144 : index
    %c0_50 = arith.constant 0 : index
    %150 = vector.load %arg1[%c144, %c0_50] : memref<912x128xf32, #tpu.memory_space<vmem>>, vector<128x128xf32>
    %cst_51 = arith.constant dense<0.000000e+00> : vector<128x128xf32>
    %151 = tpu.matmul %149, %150, %cst_51 {dimension_numbers = #tpu.dot_dimension_numbers<[1], [0], [0], [1], [0, 0, 1, 1], [], []>} : vector<128x128xf32>, vector<128x128xf32>, vector<128x128xf32> -> vector<128x128xf32>
    %c120 = arith.constant 120 : index
    %c0_52 = arith.constant 0 : index
    %152 = vector.load %arg1[%c120, %c0_52] : memref<912x128xf32, #tpu.memory_space<vmem>>, vector<1x128xf32>
    %153 = vector.broadcast %152 : vector<1x128xf32> to vector<128x128xf32>
    %154 = arith.addf %151, %153 : vector<128x128xf32>
    %c128 = arith.constant 128 : index
    %c0_53 = arith.constant 0 : index
    %155 = vector.load %arg1[%c128, %c0_53] : memref<912x128xf32, #tpu.memory_space<vmem>>, vector<1x128xf32>
    %c136 = arith.constant 136 : index
    %c0_54 = arith.constant 0 : index
    %156 = vector.load %arg1[%c136, %c0_54] : memref<912x128xf32, #tpu.memory_space<vmem>>, vector<1x128xf32>
    %cst_55 = arith.constant dense<0.000000e+00> : vector<128xf32>
    %157 = vector.multi_reduction <add>, %154, %cst_55 [0] : vector<128x128xf32> to vector<128xf32>
    %158 = vector.shape_cast %157 : vector<128xf32> to vector<1x128xf32>
    %159 = arith.mulf %154, %154 : vector<128x128xf32>
    %cst_56 = arith.constant dense<0.000000e+00> : vector<128xf32>
    %160 = vector.multi_reduction <add>, %159, %cst_56 [0] : vector<128x128xf32> to vector<128xf32>
    %161 = vector.shape_cast %160 : vector<128xf32> to vector<1x128xf32>
    %cst_57 = arith.constant 7.812500e-03 : f32
    %162 = vector.broadcast %cst_57 : f32 to vector<1x128xf32>
    %163 = arith.mulf %158, %162 : vector<1x128xf32>
    %cst_58 = arith.constant 7.812500e-03 : f32
    %164 = vector.broadcast %cst_58 : f32 to vector<1x128xf32>
    %165 = arith.mulf %161, %164 : vector<1x128xf32>
    %166 = arith.mulf %163, %163 : vector<1x128xf32>
    %167 = arith.subf %165, %166 : vector<1x128xf32>
    %cst_59 = arith.constant 9.99999974E-6 : f32
    %168 = vector.broadcast %cst_59 : f32 to vector<1x128xf32>
    %169 = arith.addf %167, %168 : vector<1x128xf32>
    %170 = math.rsqrt %169 : vector<1x128xf32>
    %171 = arith.mulf %155, %170 : vector<1x128xf32>
    %172 = arith.mulf %163, %171 : vector<1x128xf32>
    %173 = arith.subf %156, %172 : vector<1x128xf32>
    %174 = vector.broadcast %171 : vector<1x128xf32> to vector<128x128xf32>
    %175 = arith.mulf %154, %174 : vector<128x128xf32>
    %176 = vector.broadcast %173 : vector<1x128xf32> to vector<128x128xf32>
    %177 = arith.addf %175, %176 : vector<128x128xf32>
    %cst_60 = arith.constant 0.000000e+00 : f32
    %178 = vector.broadcast %cst_60 : f32 to vector<128x128xf32>
    %179 = arith.maximumf %177, %178 : vector<128x128xf32>
    %c77 = arith.constant 77 : index
    %c0_61 = arith.constant 0 : index
    %180 = vector.load %arg1[%c77, %c0_61] : memref<912x128xf32, #tpu.memory_space<vmem>>, vector<1x128xf32>
    %181 = vector.broadcast %180 : vector<1x128xf32> to vector<128x128xf32>
    %182 = arith.mulf %179, %181 : vector<128x128xf32>
    %c113 = arith.constant 113 : index
    %c0_62 = arith.constant 0 : index
    %183 = vector.load %arg1[%c113, %c0_62] : memref<912x128xf32, #tpu.memory_space<vmem>>, vector<1x128xf32>
    %184 = vector.broadcast %183 : vector<1x128xf32> to vector<128x128xf32>
    %185 = arith.addf %182, %184 : vector<128x128xf32>
    %c5_i32_63 = arith.constant 5 : i32
    %186 = tpu.dynamic_rotate %179 by %c5_i32_63 dim 0 : vector<128x128xf32>, i32 -> vector<128x128xf32>
    %c73 = arith.constant 73 : index
    %c0_64 = arith.constant 0 : index
    %187 = vector.load %arg1[%c73, %c0_64] : memref<912x128xf32, #tpu.memory_space<vmem>>, vector<1x128xf32>
    %188 = vector.broadcast %43 : vector<128x1xf32> to vector<128x128xf32>
    %189 = vector.broadcast %187 : vector<1x128xf32> to vector<128x128xf32>
    %190 = arith.mulf %188, %189 : vector<128x128xf32>
    %191 = arith.mulf %186, %190 : vector<128x128xf32>
    %192 = arith.addf %185, %191 : vector<128x128xf32>
    %c4_i32_65 = arith.constant 4 : i32
    %193 = tpu.dynamic_rotate %179 by %c4_i32_65 dim 0 : vector<128x128xf32>, i32 -> vector<128x128xf32>
    %c74 = arith.constant 74 : index
    %c0_66 = arith.constant 0 : index
    %194 = vector.load %arg1[%c74, %c0_66] : memref<912x128xf32, #tpu.memory_space<vmem>>, vector<1x128xf32>
    %195 = vector.broadcast %48 : vector<128x1xf32> to vector<128x128xf32>
    %196 = vector.broadcast %194 : vector<1x128xf32> to vector<128x128xf32>
    %197 = arith.mulf %195, %196 : vector<128x128xf32>
    %198 = arith.mulf %193, %197 : vector<128x128xf32>
    %199 = arith.addf %192, %198 : vector<128x128xf32>
    %c3_i32_67 = arith.constant 3 : i32
    %200 = tpu.dynamic_rotate %179 by %c3_i32_67 dim 0 : vector<128x128xf32>, i32 -> vector<128x128xf32>
    %c75 = arith.constant 75 : index
    %c0_68 = arith.constant 0 : index
    %201 = vector.load %arg1[%c75, %c0_68] : memref<912x128xf32, #tpu.memory_space<vmem>>, vector<1x128xf32>
    %202 = vector.broadcast %56 : vector<128x1xf32> to vector<128x128xf32>
    %203 = vector.broadcast %201 : vector<1x128xf32> to vector<128x128xf32>
    %204 = arith.mulf %202, %203 : vector<128x128xf32>
    %205 = arith.mulf %200, %204 : vector<128x128xf32>
    %206 = arith.addf %199, %205 : vector<128x128xf32>
    %c1_i32_69 = arith.constant 1 : i32
    %207 = tpu.dynamic_rotate %179 by %c1_i32_69 dim 0 : vector<128x128xf32>, i32 -> vector<128x128xf32>
    %c76 = arith.constant 76 : index
    %c0_70 = arith.constant 0 : index
    %208 = vector.load %arg1[%c76, %c0_70] : memref<912x128xf32, #tpu.memory_space<vmem>>, vector<1x128xf32>
    %209 = vector.broadcast %61 : vector<128x1xf32> to vector<128x128xf32>
    %210 = vector.broadcast %208 : vector<1x128xf32> to vector<128x128xf32>
    %211 = arith.mulf %209, %210 : vector<128x128xf32>
    %212 = arith.mulf %207, %211 : vector<128x128xf32>
    %213 = arith.addf %206, %212 : vector<128x128xf32>
    %c127_i32_71 = arith.constant 127 : i32
    %214 = tpu.dynamic_rotate %179 by %c127_i32_71 dim 0 : vector<128x128xf32>, i32 -> vector<128x128xf32>
    %c78 = arith.constant 78 : index
    %c0_72 = arith.constant 0 : index
    %215 = vector.load %arg1[%c78, %c0_72] : memref<912x128xf32, #tpu.memory_space<vmem>>, vector<1x128xf32>
    %216 = vector.broadcast %66 : vector<128x1xf32> to vector<128x128xf32>
    %217 = vector.broadcast %215 : vector<1x128xf32> to vector<128x128xf32>
    %218 = arith.mulf %216, %217 : vector<128x128xf32>
    %219 = arith.mulf %214, %218 : vector<128x128xf32>
    %220 = arith.addf %213, %219 : vector<128x128xf32>
    %c125_i32_73 = arith.constant 125 : i32
    %221 = tpu.dynamic_rotate %179 by %c125_i32_73 dim 0 : vector<128x128xf32>, i32 -> vector<128x128xf32>
    %c79 = arith.constant 79 : index
    %c0_74 = arith.constant 0 : index
    %222 = vector.load %arg1[%c79, %c0_74] : memref<912x128xf32, #tpu.memory_space<vmem>>, vector<1x128xf32>
    %223 = vector.broadcast %74 : vector<128x1xf32> to vector<128x128xf32>
    %224 = vector.broadcast %222 : vector<1x128xf32> to vector<128x128xf32>
    %225 = arith.mulf %223, %224 : vector<128x128xf32>
    %226 = arith.mulf %221, %225 : vector<128x128xf32>
    %227 = arith.addf %220, %226 : vector<128x128xf32>
    %c124_i32_75 = arith.constant 124 : i32
    %228 = tpu.dynamic_rotate %179 by %c124_i32_75 dim 0 : vector<128x128xf32>, i32 -> vector<128x128xf32>
    %c80 = arith.constant 80 : index
    %c0_76 = arith.constant 0 : index
    %229 = vector.load %arg1[%c80, %c0_76] : memref<912x128xf32, #tpu.memory_space<vmem>>, vector<1x128xf32>
    %230 = vector.broadcast %79 : vector<128x1xf32> to vector<128x128xf32>
    %231 = vector.broadcast %229 : vector<1x128xf32> to vector<128x128xf32>
    %232 = arith.mulf %230, %231 : vector<128x128xf32>
    %233 = arith.mulf %228, %232 : vector<128x128xf32>
    %234 = arith.addf %227, %233 : vector<128x128xf32>
    %c123_i32_77 = arith.constant 123 : i32
    %235 = tpu.dynamic_rotate %179 by %c123_i32_77 dim 0 : vector<128x128xf32>, i32 -> vector<128x128xf32>
    %c81 = arith.constant 81 : index
    %c0_78 = arith.constant 0 : index
    %236 = vector.load %arg1[%c81, %c0_78] : memref<912x128xf32, #tpu.memory_space<vmem>>, vector<1x128xf32>
    %237 = vector.broadcast %87 : vector<128x1xf32> to vector<128x128xf32>
    %238 = vector.broadcast %236 : vector<1x128xf32> to vector<128x128xf32>
    %239 = arith.mulf %237, %238 : vector<128x128xf32>
    %240 = arith.mulf %235, %239 : vector<128x128xf32>
    %241 = arith.addf %234, %240 : vector<128x128xf32>
    %c272 = arith.constant 272 : index
    %c0_79 = arith.constant 0 : index
    %242 = vector.load %arg1[%c272, %c0_79] : memref<912x128xf32, #tpu.memory_space<vmem>>, vector<128x128xf32>
    %cst_80 = arith.constant dense<0.000000e+00> : vector<128x128xf32>
    %243 = tpu.matmul %241, %242, %cst_80 {dimension_numbers = #tpu.dot_dimension_numbers<[1], [0], [0], [1], [0, 0, 1, 1], [], []>} : vector<128x128xf32>, vector<128x128xf32>, vector<128x128xf32> -> vector<128x128xf32>
    %c121 = arith.constant 121 : index
    %c0_81 = arith.constant 0 : index
    %244 = vector.load %arg1[%c121, %c0_81] : memref<912x128xf32, #tpu.memory_space<vmem>>, vector<1x128xf32>
    %245 = vector.broadcast %244 : vector<1x128xf32> to vector<128x128xf32>
    %246 = arith.addf %243, %245 : vector<128x128xf32>
    %c129 = arith.constant 129 : index
    %c0_82 = arith.constant 0 : index
    %247 = vector.load %arg1[%c129, %c0_82] : memref<912x128xf32, #tpu.memory_space<vmem>>, vector<1x128xf32>
    %c137 = arith.constant 137 : index
    %c0_83 = arith.constant 0 : index
    %248 = vector.load %arg1[%c137, %c0_83] : memref<912x128xf32, #tpu.memory_space<vmem>>, vector<1x128xf32>
    %cst_84 = arith.constant dense<0.000000e+00> : vector<128xf32>
    %249 = vector.multi_reduction <add>, %246, %cst_84 [0] : vector<128x128xf32> to vector<128xf32>
    %250 = vector.shape_cast %249 : vector<128xf32> to vector<1x128xf32>
    %251 = arith.mulf %246, %246 : vector<128x128xf32>
    %cst_85 = arith.constant dense<0.000000e+00> : vector<128xf32>
    %252 = vector.multi_reduction <add>, %251, %cst_85 [0] : vector<128x128xf32> to vector<128xf32>
    %253 = vector.shape_cast %252 : vector<128xf32> to vector<1x128xf32>
    %cst_86 = arith.constant 7.812500e-03 : f32
    %254 = vector.broadcast %cst_86 : f32 to vector<1x128xf32>
    %255 = arith.mulf %250, %254 : vector<1x128xf32>
    %cst_87 = arith.constant 7.812500e-03 : f32
    %256 = vector.broadcast %cst_87 : f32 to vector<1x128xf32>
    %257 = arith.mulf %253, %256 : vector<1x128xf32>
    %258 = arith.mulf %255, %255 : vector<1x128xf32>
    %259 = arith.subf %257, %258 : vector<1x128xf32>
    %cst_88 = arith.constant 9.99999974E-6 : f32
    %260 = vector.broadcast %cst_88 : f32 to vector<1x128xf32>
    %261 = arith.addf %259, %260 : vector<1x128xf32>
    %262 = math.rsqrt %261 : vector<1x128xf32>
    %263 = arith.mulf %247, %262 : vector<1x128xf32>
    %264 = arith.mulf %255, %263 : vector<1x128xf32>
    %265 = arith.subf %248, %264 : vector<1x128xf32>
    %266 = vector.broadcast %263 : vector<1x128xf32> to vector<128x128xf32>
    %267 = arith.mulf %246, %266 : vector<128x128xf32>
    %268 = vector.broadcast %265 : vector<1x128xf32> to vector<128x128xf32>
    %269 = arith.addf %267, %268 : vector<128x128xf32>
    %cst_89 = arith.constant 0.000000e+00 : f32
    %270 = vector.broadcast %cst_89 : f32 to vector<128x128xf32>
    %271 = arith.maximumf %269, %270 : vector<128x128xf32>
    %c86 = arith.constant 86 : index
    %c0_90 = arith.constant 0 : index
    %272 = vector.load %arg1[%c86, %c0_90] : memref<912x128xf32, #tpu.memory_space<vmem>>, vector<1x128xf32>
    %273 = vector.broadcast %272 : vector<1x128xf32> to vector<128x128xf32>
    %274 = arith.mulf %271, %273 : vector<128x128xf32>
    %c114 = arith.constant 114 : index
    %c0_91 = arith.constant 0 : index
    %275 = vector.load %arg1[%c114, %c0_91] : memref<912x128xf32, #tpu.memory_space<vmem>>, vector<1x128xf32>
    %276 = vector.broadcast %275 : vector<1x128xf32> to vector<128x128xf32>
    %277 = arith.addf %274, %276 : vector<128x128xf32>
    %c5_i32_92 = arith.constant 5 : i32
    %278 = tpu.dynamic_rotate %271 by %c5_i32_92 dim 0 : vector<128x128xf32>, i32 -> vector<128x128xf32>
    %c82 = arith.constant 82 : index
    %c0_93 = arith.constant 0 : index
    %279 = vector.load %arg1[%c82, %c0_93] : memref<912x128xf32, #tpu.memory_space<vmem>>, vector<1x128xf32>
    %280 = vector.broadcast %43 : vector<128x1xf32> to vector<128x128xf32>
    %281 = vector.broadcast %279 : vector<1x128xf32> to vector<128x128xf32>
    %282 = arith.mulf %280, %281 : vector<128x128xf32>
    %283 = arith.mulf %278, %282 : vector<128x128xf32>
    %284 = arith.addf %277, %283 : vector<128x128xf32>
    %c4_i32_94 = arith.constant 4 : i32
    %285 = tpu.dynamic_rotate %271 by %c4_i32_94 dim 0 : vector<128x128xf32>, i32 -> vector<128x128xf32>
    %c83 = arith.constant 83 : index
    %c0_95 = arith.constant 0 : index
    %286 = vector.load %arg1[%c83, %c0_95] : memref<912x128xf32, #tpu.memory_space<vmem>>, vector<1x128xf32>
    %287 = vector.broadcast %48 : vector<128x1xf32> to vector<128x128xf32>
    %288 = vector.broadcast %286 : vector<1x128xf32> to vector<128x128xf32>
    %289 = arith.mulf %287, %288 : vector<128x128xf32>
    %290 = arith.mulf %285, %289 : vector<128x128xf32>
    %291 = arith.addf %284, %290 : vector<128x128xf32>
    %c3_i32_96 = arith.constant 3 : i32
    %292 = tpu.dynamic_rotate %271 by %c3_i32_96 dim 0 : vector<128x128xf32>, i32 -> vector<128x128xf32>
    %c84 = arith.constant 84 : index
    %c0_97 = arith.constant 0 : index
    %293 = vector.load %arg1[%c84, %c0_97] : memref<912x128xf32, #tpu.memory_space<vmem>>, vector<1x128xf32>
    %294 = vector.broadcast %56 : vector<128x1xf32> to vector<128x128xf32>
    %295 = vector.broadcast %293 : vector<1x128xf32> to vector<128x128xf32>
    %296 = arith.mulf %294, %295 : vector<128x128xf32>
    %297 = arith.mulf %292, %296 : vector<128x128xf32>
    %298 = arith.addf %291, %297 : vector<128x128xf32>
    %c1_i32_98 = arith.constant 1 : i32
    %299 = tpu.dynamic_rotate %271 by %c1_i32_98 dim 0 : vector<128x128xf32>, i32 -> vector<128x128xf32>
    %c85 = arith.constant 85 : index
    %c0_99 = arith.constant 0 : index
    %300 = vector.load %arg1[%c85, %c0_99] : memref<912x128xf32, #tpu.memory_space<vmem>>, vector<1x128xf32>
    %301 = vector.broadcast %61 : vector<128x1xf32> to vector<128x128xf32>
    %302 = vector.broadcast %300 : vector<1x128xf32> to vector<128x128xf32>
    %303 = arith.mulf %301, %302 : vector<128x128xf32>
    %304 = arith.mulf %299, %303 : vector<128x128xf32>
    %305 = arith.addf %298, %304 : vector<128x128xf32>
    %c127_i32_100 = arith.constant 127 : i32
    %306 = tpu.dynamic_rotate %271 by %c127_i32_100 dim 0 : vector<128x128xf32>, i32 -> vector<128x128xf32>
    %c87 = arith.constant 87 : index
    %c0_101 = arith.constant 0 : index
    %307 = vector.load %arg1[%c87, %c0_101] : memref<912x128xf32, #tpu.memory_space<vmem>>, vector<1x128xf32>
    %308 = vector.broadcast %66 : vector<128x1xf32> to vector<128x128xf32>
    %309 = vector.broadcast %307 : vector<1x128xf32> to vector<128x128xf32>
    %310 = arith.mulf %308, %309 : vector<128x128xf32>
    %311 = arith.mulf %306, %310 : vector<128x128xf32>
    %312 = arith.addf %305, %311 : vector<128x128xf32>
    %c125_i32_102 = arith.constant 125 : i32
    %313 = tpu.dynamic_rotate %271 by %c125_i32_102 dim 0 : vector<128x128xf32>, i32 -> vector<128x128xf32>
    %c88 = arith.constant 88 : index
    %c0_103 = arith.constant 0 : index
    %314 = vector.load %arg1[%c88, %c0_103] : memref<912x128xf32, #tpu.memory_space<vmem>>, vector<1x128xf32>
    %315 = vector.broadcast %74 : vector<128x1xf32> to vector<128x128xf32>
    %316 = vector.broadcast %314 : vector<1x128xf32> to vector<128x128xf32>
    %317 = arith.mulf %315, %316 : vector<128x128xf32>
    %318 = arith.mulf %313, %317 : vector<128x128xf32>
    %319 = arith.addf %312, %318 : vector<128x128xf32>
    %c124_i32_104 = arith.constant 124 : i32
    %320 = tpu.dynamic_rotate %271 by %c124_i32_104 dim 0 : vector<128x128xf32>, i32 -> vector<128x128xf32>
    %c89 = arith.constant 89 : index
    %c0_105 = arith.constant 0 : index
    %321 = vector.load %arg1[%c89, %c0_105] : memref<912x128xf32, #tpu.memory_space<vmem>>, vector<1x128xf32>
    %322 = vector.broadcast %79 : vector<128x1xf32> to vector<128x128xf32>
    %323 = vector.broadcast %321 : vector<1x128xf32> to vector<128x128xf32>
    %324 = arith.mulf %322, %323 : vector<128x128xf32>
    %325 = arith.mulf %320, %324 : vector<128x128xf32>
    %326 = arith.addf %319, %325 : vector<128x128xf32>
    %c123_i32_106 = arith.constant 123 : i32
    %327 = tpu.dynamic_rotate %271 by %c123_i32_106 dim 0 : vector<128x128xf32>, i32 -> vector<128x128xf32>
    %c90 = arith.constant 90 : index
    %c0_107 = arith.constant 0 : index
    %328 = vector.load %arg1[%c90, %c0_107] : memref<912x128xf32, #tpu.memory_space<vmem>>, vector<1x128xf32>
    %329 = vector.broadcast %87 : vector<128x1xf32> to vector<128x128xf32>
    %330 = vector.broadcast %328 : vector<1x128xf32> to vector<128x128xf32>
    %331 = arith.mulf %329, %330 : vector<128x128xf32>
    %332 = arith.mulf %327, %331 : vector<128x128xf32>
    %333 = arith.addf %326, %332 : vector<128x128xf32>
    %c400 = arith.constant 400 : index
    %c0_108 = arith.constant 0 : index
    %334 = vector.load %arg1[%c400, %c0_108] : memref<912x128xf32, #tpu.memory_space<vmem>>, vector<128x128xf32>
    %cst_109 = arith.constant dense<0.000000e+00> : vector<128x128xf32>
    %335 = tpu.matmul %333, %334, %cst_109 {dimension_numbers = #tpu.dot_dimension_numbers<[1], [0], [0], [1], [0, 0, 1, 1], [], []>} : vector<128x128xf32>, vector<128x128xf32>, vector<128x128xf32> -> vector<128x128xf32>
    %c122 = arith.constant 122 : index
    %c0_110 = arith.constant 0 : index
    %336 = vector.load %arg1[%c122, %c0_110] : memref<912x128xf32, #tpu.memory_space<vmem>>, vector<1x128xf32>
    %337 = vector.broadcast %336 : vector<1x128xf32> to vector<128x128xf32>
    %338 = arith.addf %335, %337 : vector<128x128xf32>
    %c130 = arith.constant 130 : index
    %c0_111 = arith.constant 0 : index
    %339 = vector.load %arg1[%c130, %c0_111] : memref<912x128xf32, #tpu.memory_space<vmem>>, vector<1x128xf32>
    %c138 = arith.constant 138 : index
    %c0_112 = arith.constant 0 : index
    %340 = vector.load %arg1[%c138, %c0_112] : memref<912x128xf32, #tpu.memory_space<vmem>>, vector<1x128xf32>
    %cst_113 = arith.constant dense<0.000000e+00> : vector<128xf32>
    %341 = vector.multi_reduction <add>, %338, %cst_113 [0] : vector<128x128xf32> to vector<128xf32>
    %342 = vector.shape_cast %341 : vector<128xf32> to vector<1x128xf32>
    %343 = arith.mulf %338, %338 : vector<128x128xf32>
    %cst_114 = arith.constant dense<0.000000e+00> : vector<128xf32>
    %344 = vector.multi_reduction <add>, %343, %cst_114 [0] : vector<128x128xf32> to vector<128xf32>
    %345 = vector.shape_cast %344 : vector<128xf32> to vector<1x128xf32>
    %cst_115 = arith.constant 7.812500e-03 : f32
    %346 = vector.broadcast %cst_115 : f32 to vector<1x128xf32>
    %347 = arith.mulf %342, %346 : vector<1x128xf32>
    %cst_116 = arith.constant 7.812500e-03 : f32
    %348 = vector.broadcast %cst_116 : f32 to vector<1x128xf32>
    %349 = arith.mulf %345, %348 : vector<1x128xf32>
    %350 = arith.mulf %347, %347 : vector<1x128xf32>
    %351 = arith.subf %349, %350 : vector<1x128xf32>
    %cst_117 = arith.constant 9.99999974E-6 : f32
    %352 = vector.broadcast %cst_117 : f32 to vector<1x128xf32>
    %353 = arith.addf %351, %352 : vector<1x128xf32>
    %354 = math.rsqrt %353 : vector<1x128xf32>
    %355 = arith.mulf %339, %354 : vector<1x128xf32>
    %356 = arith.mulf %347, %355 : vector<1x128xf32>
    %357 = arith.subf %340, %356 : vector<1x128xf32>
    %358 = vector.broadcast %355 : vector<1x128xf32> to vector<128x128xf32>
    %359 = arith.mulf %338, %358 : vector<128x128xf32>
    %360 = vector.broadcast %357 : vector<1x128xf32> to vector<128x128xf32>
    %361 = arith.addf %359, %360 : vector<128x128xf32>
    %cst_118 = arith.constant 0.000000e+00 : f32
    %362 = vector.broadcast %cst_118 : f32 to vector<128x128xf32>
    %363 = arith.maximumf %361, %362 : vector<128x128xf32>
    %c95 = arith.constant 95 : index
    %c0_119 = arith.constant 0 : index
    %364 = vector.load %arg1[%c95, %c0_119] : memref<912x128xf32, #tpu.memory_space<vmem>>, vector<1x128xf32>
    %365 = vector.broadcast %364 : vector<1x128xf32> to vector<128x128xf32>
    %366 = arith.mulf %363, %365 : vector<128x128xf32>
    %c115 = arith.constant 115 : index
    %c0_120 = arith.constant 0 : index
    %367 = vector.load %arg1[%c115, %c0_120] : memref<912x128xf32, #tpu.memory_space<vmem>>, vector<1x128xf32>
    %368 = vector.broadcast %367 : vector<1x128xf32> to vector<128x128xf32>
    %369 = arith.addf %366, %368 : vector<128x128xf32>
    %c5_i32_121 = arith.constant 5 : i32
    %370 = tpu.dynamic_rotate %363 by %c5_i32_121 dim 0 : vector<128x128xf32>, i32 -> vector<128x128xf32>
    %c91 = arith.constant 91 : index
    %c0_122 = arith.constant 0 : index
    %371 = vector.load %arg1[%c91, %c0_122] : memref<912x128xf32, #tpu.memory_space<vmem>>, vector<1x128xf32>
    %372 = vector.broadcast %43 : vector<128x1xf32> to vector<128x128xf32>
    %373 = vector.broadcast %371 : vector<1x128xf32> to vector<128x128xf32>
    %374 = arith.mulf %372, %373 : vector<128x128xf32>
    %375 = arith.mulf %370, %374 : vector<128x128xf32>
    %376 = arith.addf %369, %375 : vector<128x128xf32>
    %c4_i32_123 = arith.constant 4 : i32
    %377 = tpu.dynamic_rotate %363 by %c4_i32_123 dim 0 : vector<128x128xf32>, i32 -> vector<128x128xf32>
    %c92 = arith.constant 92 : index
    %c0_124 = arith.constant 0 : index
    %378 = vector.load %arg1[%c92, %c0_124] : memref<912x128xf32, #tpu.memory_space<vmem>>, vector<1x128xf32>
    %379 = vector.broadcast %48 : vector<128x1xf32> to vector<128x128xf32>
    %380 = vector.broadcast %378 : vector<1x128xf32> to vector<128x128xf32>
    %381 = arith.mulf %379, %380 : vector<128x128xf32>
    %382 = arith.mulf %377, %381 : vector<128x128xf32>
    %383 = arith.addf %376, %382 : vector<128x128xf32>
    %c3_i32_125 = arith.constant 3 : i32
    %384 = tpu.dynamic_rotate %363 by %c3_i32_125 dim 0 : vector<128x128xf32>, i32 -> vector<128x128xf32>
    %c93 = arith.constant 93 : index
    %c0_126 = arith.constant 0 : index
    %385 = vector.load %arg1[%c93, %c0_126] : memref<912x128xf32, #tpu.memory_space<vmem>>, vector<1x128xf32>
    %386 = vector.broadcast %56 : vector<128x1xf32> to vector<128x128xf32>
    %387 = vector.broadcast %385 : vector<1x128xf32> to vector<128x128xf32>
    %388 = arith.mulf %386, %387 : vector<128x128xf32>
    %389 = arith.mulf %384, %388 : vector<128x128xf32>
    %390 = arith.addf %383, %389 : vector<128x128xf32>
    %c1_i32_127 = arith.constant 1 : i32
    %391 = tpu.dynamic_rotate %363 by %c1_i32_127 dim 0 : vector<128x128xf32>, i32 -> vector<128x128xf32>
    %c94 = arith.constant 94 : index
    %c0_128 = arith.constant 0 : index
    %392 = vector.load %arg1[%c94, %c0_128] : memref<912x128xf32, #tpu.memory_space<vmem>>, vector<1x128xf32>
    %393 = vector.broadcast %61 : vector<128x1xf32> to vector<128x128xf32>
    %394 = vector.broadcast %392 : vector<1x128xf32> to vector<128x128xf32>
    %395 = arith.mulf %393, %394 : vector<128x128xf32>
    %396 = arith.mulf %391, %395 : vector<128x128xf32>
    %397 = arith.addf %390, %396 : vector<128x128xf32>
    %c127_i32_129 = arith.constant 127 : i32
    %398 = tpu.dynamic_rotate %363 by %c127_i32_129 dim 0 : vector<128x128xf32>, i32 -> vector<128x128xf32>
    %c96 = arith.constant 96 : index
    %c0_130 = arith.constant 0 : index
    %399 = vector.load %arg1[%c96, %c0_130] : memref<912x128xf32, #tpu.memory_space<vmem>>, vector<1x128xf32>
    %400 = vector.broadcast %66 : vector<128x1xf32> to vector<128x128xf32>
    %401 = vector.broadcast %399 : vector<1x128xf32> to vector<128x128xf32>
    %402 = arith.mulf %400, %401 : vector<128x128xf32>
    %403 = arith.mulf %398, %402 : vector<128x128xf32>
    %404 = arith.addf %397, %403 : vector<128x128xf32>
    %c125_i32_131 = arith.constant 125 : i32
    %405 = tpu.dynamic_rotate %363 by %c125_i32_131 dim 0 : vector<128x128xf32>, i32 -> vector<128x128xf32>
    %c97 = arith.constant 97 : index
    %c0_132 = arith.constant 0 : index
    %406 = vector.load %arg1[%c97, %c0_132] : memref<912x128xf32, #tpu.memory_space<vmem>>, vector<1x128xf32>
    %407 = vector.broadcast %74 : vector<128x1xf32> to vector<128x128xf32>
    %408 = vector.broadcast %406 : vector<1x128xf32> to vector<128x128xf32>
    %409 = arith.mulf %407, %408 : vector<128x128xf32>
    %410 = arith.mulf %405, %409 : vector<128x128xf32>
    %411 = arith.addf %404, %410 : vector<128x128xf32>
    %c124_i32_133 = arith.constant 124 : i32
    %412 = tpu.dynamic_rotate %363 by %c124_i32_133 dim 0 : vector<128x128xf32>, i32 -> vector<128x128xf32>
    %c98 = arith.constant 98 : index
    %c0_134 = arith.constant 0 : index
    %413 = vector.load %arg1[%c98, %c0_134] : memref<912x128xf32, #tpu.memory_space<vmem>>, vector<1x128xf32>
    %414 = vector.broadcast %79 : vector<128x1xf32> to vector<128x128xf32>
    %415 = vector.broadcast %413 : vector<1x128xf32> to vector<128x128xf32>
    %416 = arith.mulf %414, %415 : vector<128x128xf32>
    %417 = arith.mulf %412, %416 : vector<128x128xf32>
    %418 = arith.addf %411, %417 : vector<128x128xf32>
    %c123_i32_135 = arith.constant 123 : i32
    %419 = tpu.dynamic_rotate %363 by %c123_i32_135 dim 0 : vector<128x128xf32>, i32 -> vector<128x128xf32>
    %c99 = arith.constant 99 : index
    %c0_136 = arith.constant 0 : index
    %420 = vector.load %arg1[%c99, %c0_136] : memref<912x128xf32, #tpu.memory_space<vmem>>, vector<1x128xf32>
    %421 = vector.broadcast %87 : vector<128x1xf32> to vector<128x128xf32>
    %422 = vector.broadcast %420 : vector<1x128xf32> to vector<128x128xf32>
    %423 = arith.mulf %421, %422 : vector<128x128xf32>
    %424 = arith.mulf %419, %423 : vector<128x128xf32>
    %425 = arith.addf %418, %424 : vector<128x128xf32>
    %c528 = arith.constant 528 : index
    %c0_137 = arith.constant 0 : index
    %426 = vector.load %arg1[%c528, %c0_137] : memref<912x128xf32, #tpu.memory_space<vmem>>, vector<128x128xf32>
    %cst_138 = arith.constant dense<0.000000e+00> : vector<128x128xf32>
    %427 = tpu.matmul %425, %426, %cst_138 {dimension_numbers = #tpu.dot_dimension_numbers<[1], [0], [0], [1], [0, 0, 1, 1], [], []>} : vector<128x128xf32>, vector<128x128xf32>, vector<128x128xf32> -> vector<128x128xf32>
    %c123 = arith.constant 123 : index
    %c0_139 = arith.constant 0 : index
    %428 = vector.load %arg1[%c123, %c0_139] : memref<912x128xf32, #tpu.memory_space<vmem>>, vector<1x128xf32>
    %429 = vector.broadcast %428 : vector<1x128xf32> to vector<128x128xf32>
    %430 = arith.addf %427, %429 : vector<128x128xf32>
    %c131 = arith.constant 131 : index
    %c0_140 = arith.constant 0 : index
    %431 = vector.load %arg1[%c131, %c0_140] : memref<912x128xf32, #tpu.memory_space<vmem>>, vector<1x128xf32>
    %c139 = arith.constant 139 : index
    %c0_141 = arith.constant 0 : index
    %432 = vector.load %arg1[%c139, %c0_141] : memref<912x128xf32, #tpu.memory_space<vmem>>, vector<1x128xf32>
    %cst_142 = arith.constant dense<0.000000e+00> : vector<128xf32>
    %433 = vector.multi_reduction <add>, %430, %cst_142 [0] : vector<128x128xf32> to vector<128xf32>
    %434 = vector.shape_cast %433 : vector<128xf32> to vector<1x128xf32>
    %435 = arith.mulf %430, %430 : vector<128x128xf32>
    %cst_143 = arith.constant dense<0.000000e+00> : vector<128xf32>
    %436 = vector.multi_reduction <add>, %435, %cst_143 [0] : vector<128x128xf32> to vector<128xf32>
    %437 = vector.shape_cast %436 : vector<128xf32> to vector<1x128xf32>
    %cst_144 = arith.constant 7.812500e-03 : f32
    %438 = vector.broadcast %cst_144 : f32 to vector<1x128xf32>
    %439 = arith.mulf %434, %438 : vector<1x128xf32>
    %cst_145 = arith.constant 7.812500e-03 : f32
    %440 = vector.broadcast %cst_145 : f32 to vector<1x128xf32>
    %441 = arith.mulf %437, %440 : vector<1x128xf32>
    %442 = arith.mulf %439, %439 : vector<1x128xf32>
    %443 = arith.subf %441, %442 : vector<1x128xf32>
    %cst_146 = arith.constant 9.99999974E-6 : f32
    %444 = vector.broadcast %cst_146 : f32 to vector<1x128xf32>
    %445 = arith.addf %443, %444 : vector<1x128xf32>
    %446 = math.rsqrt %445 : vector<1x128xf32>
    %447 = arith.mulf %431, %446 : vector<1x128xf32>
    %448 = arith.mulf %439, %447 : vector<1x128xf32>
    %449 = arith.subf %432, %448 : vector<1x128xf32>
    %450 = vector.broadcast %447 : vector<1x128xf32> to vector<128x128xf32>
    %451 = arith.mulf %430, %450 : vector<128x128xf32>
    %452 = vector.broadcast %449 : vector<1x128xf32> to vector<128x128xf32>
    %453 = arith.addf %451, %452 : vector<128x128xf32>
    %cst_147 = arith.constant 0.000000e+00 : f32
    %454 = vector.broadcast %cst_147 : f32 to vector<128x128xf32>
    %455 = arith.maximumf %453, %454 : vector<128x128xf32>
    %c104 = arith.constant 104 : index
    %c0_148 = arith.constant 0 : index
    %456 = vector.load %arg1[%c104, %c0_148] : memref<912x128xf32, #tpu.memory_space<vmem>>, vector<1x128xf32>
    %457 = vector.broadcast %456 : vector<1x128xf32> to vector<128x128xf32>
    %458 = arith.mulf %455, %457 : vector<128x128xf32>
    %c116 = arith.constant 116 : index
    %c0_149 = arith.constant 0 : index
    %459 = vector.load %arg1[%c116, %c0_149] : memref<912x128xf32, #tpu.memory_space<vmem>>, vector<1x128xf32>
    %460 = vector.broadcast %459 : vector<1x128xf32> to vector<128x128xf32>
    %461 = arith.addf %458, %460 : vector<128x128xf32>
    %c5_i32_150 = arith.constant 5 : i32
    %462 = tpu.dynamic_rotate %455 by %c5_i32_150 dim 0 : vector<128x128xf32>, i32 -> vector<128x128xf32>
    %c100 = arith.constant 100 : index
    %c0_151 = arith.constant 0 : index
    %463 = vector.load %arg1[%c100, %c0_151] : memref<912x128xf32, #tpu.memory_space<vmem>>, vector<1x128xf32>
    %464 = vector.broadcast %43 : vector<128x1xf32> to vector<128x128xf32>
    %465 = vector.broadcast %463 : vector<1x128xf32> to vector<128x128xf32>
    %466 = arith.mulf %464, %465 : vector<128x128xf32>
    %467 = arith.mulf %462, %466 : vector<128x128xf32>
    %468 = arith.addf %461, %467 : vector<128x128xf32>
    %c4_i32_152 = arith.constant 4 : i32
    %469 = tpu.dynamic_rotate %455 by %c4_i32_152 dim 0 : vector<128x128xf32>, i32 -> vector<128x128xf32>
    %c101 = arith.constant 101 : index
    %c0_153 = arith.constant 0 : index
    %470 = vector.load %arg1[%c101, %c0_153] : memref<912x128xf32, #tpu.memory_space<vmem>>, vector<1x128xf32>
    %471 = vector.broadcast %48 : vector<128x1xf32> to vector<128x128xf32>
    %472 = vector.broadcast %470 : vector<1x128xf32> to vector<128x128xf32>
    %473 = arith.mulf %471, %472 : vector<128x128xf32>
    %474 = arith.mulf %469, %473 : vector<128x128xf32>
    %475 = arith.addf %468, %474 : vector<128x128xf32>
    %c3_i32_154 = arith.constant 3 : i32
    %476 = tpu.dynamic_rotate %455 by %c3_i32_154 dim 0 : vector<128x128xf32>, i32 -> vector<128x128xf32>
    %c102 = arith.constant 102 : index
    %c0_155 = arith.constant 0 : index
    %477 = vector.load %arg1[%c102, %c0_155] : memref<912x128xf32, #tpu.memory_space<vmem>>, vector<1x128xf32>
    %478 = vector.broadcast %56 : vector<128x1xf32> to vector<128x128xf32>
    %479 = vector.broadcast %477 : vector<1x128xf32> to vector<128x128xf32>
    %480 = arith.mulf %478, %479 : vector<128x128xf32>
    %481 = arith.mulf %476, %480 : vector<128x128xf32>
    %482 = arith.addf %475, %481 : vector<128x128xf32>
    %c1_i32_156 = arith.constant 1 : i32
    %483 = tpu.dynamic_rotate %455 by %c1_i32_156 dim 0 : vector<128x128xf32>, i32 -> vector<128x128xf32>
    %c103 = arith.constant 103 : index
    %c0_157 = arith.constant 0 : index
    %484 = vector.load %arg1[%c103, %c0_157] : memref<912x128xf32, #tpu.memory_space<vmem>>, vector<1x128xf32>
    %485 = vector.broadcast %61 : vector<128x1xf32> to vector<128x128xf32>
    %486 = vector.broadcast %484 : vector<1x128xf32> to vector<128x128xf32>
    %487 = arith.mulf %485, %486 : vector<128x128xf32>
    %488 = arith.mulf %483, %487 : vector<128x128xf32>
    %489 = arith.addf %482, %488 : vector<128x128xf32>
    %c127_i32_158 = arith.constant 127 : i32
    %490 = tpu.dynamic_rotate %455 by %c127_i32_158 dim 0 : vector<128x128xf32>, i32 -> vector<128x128xf32>
    %c105 = arith.constant 105 : index
    %c0_159 = arith.constant 0 : index
    %491 = vector.load %arg1[%c105, %c0_159] : memref<912x128xf32, #tpu.memory_space<vmem>>, vector<1x128xf32>
    %492 = vector.broadcast %66 : vector<128x1xf32> to vector<128x128xf32>
    %493 = vector.broadcast %491 : vector<1x128xf32> to vector<128x128xf32>
    %494 = arith.mulf %492, %493 : vector<128x128xf32>
    %495 = arith.mulf %490, %494 : vector<128x128xf32>
    %496 = arith.addf %489, %495 : vector<128x128xf32>
    %c125_i32_160 = arith.constant 125 : i32
    %497 = tpu.dynamic_rotate %455 by %c125_i32_160 dim 0 : vector<128x128xf32>, i32 -> vector<128x128xf32>
    %c106 = arith.constant 106 : index
    %c0_161 = arith.constant 0 : index
    %498 = vector.load %arg1[%c106, %c0_161] : memref<912x128xf32, #tpu.memory_space<vmem>>, vector<1x128xf32>
    %499 = vector.broadcast %74 : vector<128x1xf32> to vector<128x128xf32>
    %500 = vector.broadcast %498 : vector<1x128xf32> to vector<128x128xf32>
    %501 = arith.mulf %499, %500 : vector<128x128xf32>
    %502 = arith.mulf %497, %501 : vector<128x128xf32>
    %503 = arith.addf %496, %502 : vector<128x128xf32>
    %c124_i32_162 = arith.constant 124 : i32
    %504 = tpu.dynamic_rotate %455 by %c124_i32_162 dim 0 : vector<128x128xf32>, i32 -> vector<128x128xf32>
    %c107 = arith.constant 107 : index
    %c0_163 = arith.constant 0 : index
    %505 = vector.load %arg1[%c107, %c0_163] : memref<912x128xf32, #tpu.memory_space<vmem>>, vector<1x128xf32>
    %506 = vector.broadcast %79 : vector<128x1xf32> to vector<128x128xf32>
    %507 = vector.broadcast %505 : vector<1x128xf32> to vector<128x128xf32>
    %508 = arith.mulf %506, %507 : vector<128x128xf32>
    %509 = arith.mulf %504, %508 : vector<128x128xf32>
    %510 = arith.addf %503, %509 : vector<128x128xf32>
    %c123_i32_164 = arith.constant 123 : i32
    %511 = tpu.dynamic_rotate %455 by %c123_i32_164 dim 0 : vector<128x128xf32>, i32 -> vector<128x128xf32>
    %c108 = arith.constant 108 : index
    %c0_165 = arith.constant 0 : index
    %512 = vector.load %arg1[%c108, %c0_165] : memref<912x128xf32, #tpu.memory_space<vmem>>, vector<1x128xf32>
    %513 = vector.broadcast %87 : vector<128x1xf32> to vector<128x128xf32>
    %514 = vector.broadcast %512 : vector<1x128xf32> to vector<128x128xf32>
    %515 = arith.mulf %513, %514 : vector<128x128xf32>
    %516 = arith.mulf %511, %515 : vector<128x128xf32>
    %517 = arith.addf %510, %516 : vector<128x128xf32>
    %c656 = arith.constant 656 : index
    %c0_166 = arith.constant 0 : index
    %518 = vector.load %arg1[%c656, %c0_166] : memref<912x128xf32, #tpu.memory_space<vmem>>, vector<128x128xf32>
    %cst_167 = arith.constant dense<0.000000e+00> : vector<128x128xf32>
    %519 = tpu.matmul %517, %518, %cst_167 {dimension_numbers = #tpu.dot_dimension_numbers<[1], [0], [0], [1], [0, 0, 1, 1], [], []>} : vector<128x128xf32>, vector<128x128xf32>, vector<128x128xf32> -> vector<128x128xf32>
    %c124 = arith.constant 124 : index
    %c0_168 = arith.constant 0 : index
    %520 = vector.load %arg1[%c124, %c0_168] : memref<912x128xf32, #tpu.memory_space<vmem>>, vector<1x128xf32>
    %521 = vector.broadcast %520 : vector<1x128xf32> to vector<128x128xf32>
    %522 = arith.addf %519, %521 : vector<128x128xf32>
    %c132 = arith.constant 132 : index
    %c0_169 = arith.constant 0 : index
    %523 = vector.load %arg1[%c132, %c0_169] : memref<912x128xf32, #tpu.memory_space<vmem>>, vector<1x128xf32>
    %c140 = arith.constant 140 : index
    %c0_170 = arith.constant 0 : index
    %524 = vector.load %arg1[%c140, %c0_170] : memref<912x128xf32, #tpu.memory_space<vmem>>, vector<1x128xf32>
    %cst_171 = arith.constant dense<0.000000e+00> : vector<128xf32>
    %525 = vector.multi_reduction <add>, %522, %cst_171 [0] : vector<128x128xf32> to vector<128xf32>
    %526 = vector.shape_cast %525 : vector<128xf32> to vector<1x128xf32>
    %527 = arith.mulf %522, %522 : vector<128x128xf32>
    %cst_172 = arith.constant dense<0.000000e+00> : vector<128xf32>
    %528 = vector.multi_reduction <add>, %527, %cst_172 [0] : vector<128x128xf32> to vector<128xf32>
    %529 = vector.shape_cast %528 : vector<128xf32> to vector<1x128xf32>
    %cst_173 = arith.constant 7.812500e-03 : f32
    %530 = vector.broadcast %cst_173 : f32 to vector<1x128xf32>
    %531 = arith.mulf %526, %530 : vector<1x128xf32>
    %cst_174 = arith.constant 7.812500e-03 : f32
    %532 = vector.broadcast %cst_174 : f32 to vector<1x128xf32>
    %533 = arith.mulf %529, %532 : vector<1x128xf32>
    %534 = arith.mulf %531, %531 : vector<1x128xf32>
    %535 = arith.subf %533, %534 : vector<1x128xf32>
    %cst_175 = arith.constant 9.99999974E-6 : f32
    %536 = vector.broadcast %cst_175 : f32 to vector<1x128xf32>
    %537 = arith.addf %535, %536 : vector<1x128xf32>
    %538 = math.rsqrt %537 : vector<1x128xf32>
    %539 = arith.mulf %523, %538 : vector<1x128xf32>
    %540 = arith.mulf %531, %539 : vector<1x128xf32>
    %541 = arith.subf %524, %540 : vector<1x128xf32>
    %542 = vector.broadcast %539 : vector<1x128xf32> to vector<128x128xf32>
    %543 = arith.mulf %522, %542 : vector<128x128xf32>
    %544 = vector.broadcast %541 : vector<1x128xf32> to vector<128x128xf32>
    %545 = arith.addf %543, %544 : vector<128x128xf32>
    %cst_176 = arith.constant 0.000000e+00 : f32
    %546 = vector.broadcast %cst_176 : f32 to vector<128x128xf32>
    %547 = arith.maximumf %545, %546 : vector<128x128xf32>
    %548 = tpu.iota {dimensions = array<i32: 0>} : vector<2x128xi32>
    %549 = tpu.iota {dimensions = array<i32: 1>} : vector<2x128xi32>
    %c64_i32 = arith.constant 64 : i32
    %550 = vector.broadcast %c64_i32 : i32 to vector<2x128xi32>
    %551 = arith.muli %548, %550 : vector<2x128xi32>
    %552 = arith.cmpi sge, %549, %551 : vector<2x128xi32>
    %c1_i32_177 = arith.constant 1 : i32
    %553 = vector.broadcast %c1_i32_177 : i32 to vector<2x128xi32>
    %554 = arith.addi %548, %553 : vector<2x128xi32>
    %c64_i32_178 = arith.constant 64 : i32
    %555 = vector.broadcast %c64_i32_178 : i32 to vector<2x128xi32>
    %556 = arith.muli %554, %555 : vector<2x128xi32>
    %557 = arith.cmpi slt, %549, %556 : vector<2x128xi32>
    %558 = arith.andi %552, %557 : vector<2x128xi1>
    %cst_179 = arith.constant 1.562500e-02 : f32
    %cst_180 = arith.constant 0.000000e+00 : f32
    %559 = vector.broadcast %cst_179 : f32 to vector<2x128xf32>
    %560 = vector.broadcast %cst_180 : f32 to vector<2x128xf32>
    %561 = arith.select %558, %559, %560 : vector<2x128xi1>, vector<2x128xf32>
    %cst_181 = arith.constant dense<0.000000e+00> : vector<2x128xf32>
    %562 = tpu.matmul %561, %547, %cst_181 {dimension_numbers = #tpu.dot_dimension_numbers<[1], [0], [0], [1], [0, 0, 1, 1], [], []>} : vector<2x128xf32>, vector<128x128xf32>, vector<2x128xf32> -> vector<2x128xf32>
    %c0_182 = arith.constant 0 : index
    %c0_183 = arith.constant 0 : index
    %563 = vector.load %arg2[%c0_182, %c0_183] : memref<2x128xf32, #tpu.memory_space<vmem>>, vector<2x128xf32>
    tpu.vector_store %arg2[%c0_182, %c0_183], %562 {strides = array<i32>} : memref<2x128xf32, #tpu.memory_space<vmem>>, vector<2x128xf32>,
    %c784 = arith.constant 784 : index
    %c0_184 = arith.constant 0 : index
    %564 = vector.load %arg1[%c784, %c0_184] : memref<912x128xf32, #tpu.memory_space<vmem>>, vector<128x128xf32>
    %cst_185 = arith.constant dense<0.000000e+00> : vector<2x128xf32>
    %565 = tpu.matmul %562, %564, %cst_185 {dimension_numbers = #tpu.dot_dimension_numbers<[1], [0], [0], [1], [0, 0, 1, 1], [], []>} : vector<2x128xf32>, vector<128x128xf32>, vector<2x128xf32> -> vector<2x128xf32>
    %c0_186 = arith.constant 0 : index
    %c0_187 = arith.constant 0 : index
    %566 = vector.load %arg3[%c0_186, %c0_187] : memref<2x128xf32, #tpu.memory_space<vmem>>, vector<2x128xf32>
    tpu.vector_store %arg3[%c0_186, %c0_187], %565 {strides = array<i32>} : memref<2x128xf32, #tpu.memory_space<vmem>>, vector<2x128xf32>,
    return
  }
}

</mosaic_0001>

<llo_original>
// kernel: audio_dscnn_forward.1
$region0: #{audio_dscnn_forward.1}
  #allocation0 [shape = 'u32[]', space=smem, size = 0x4, offset = 0x4, fixed_abs, tag = 'smem constant byte address 0x4 - core index']
  #allocation1 [shape = 'u32[72,128]{1,0:T(1,128)}', space=vmem, size = 0x9000, scoped, tag = 'internal scratch']
  %s0 = inlined_call_operand.vmem [shape: f32[128,40], index: 0, kind: input, shape index: {}]
  %s1 = inlined_call_operand.vmem [shape: f32[912,128], index: 1, kind: input, shape index: {}]
  %s2 = inlined_call_operand.hbm [shape: f32[2,128], index: 2, kind: output, shape index: {0}]
  %s3 = inlined_call_operand.hbm [shape: f32[2,128], index: 3, kind: output, shape index: {1}]
  %4 = xla_tuple %s2, %s3
  %s5 = sld [smem:[#allocation0]]
  $region26: #{audio_dscnn_forward.1} parent=0
    _
  %s7 = ssub.s32 1, %s5
  %s8 = scalar_select 0, %s7, %s5
  $region1: #{audio_dscnn_forward.1} parent=0
    #allocation2 [shape = 'u8[1024]{0}', space=vmem, size = 0x400, scoped, tag = 'output window, operand 0, single buffered']
    #allocation3 [shape = 's32[1]{0}', space=sflag, size = 0x4, scoped, tag = 'scoped memory for audio_dscnn_forward.1']
    #allocation4 [shape = 'u8[1024]{0}', space=vmem, size = 0x400, scoped, tag = 'output window, operand 1, single buffered']
    #allocation5 [shape = 's32[1]{0}', space=sflag, size = 0x4, scoped, tag = 'scoped memory for audio_dscnn_forward.1']
    %9 = vsyncpa [#allocation3], 0
    %10 = vsyncpa [#allocation5], 0
    // Predicated region
    $region2: #{audio_dscnn_forward.1} parent=1 // pred_check
      _
    $region3: #{audio_dscnn_forward.1} parent=1 // pred_check_branch
      %12 = sbr.rel (0) target = $region5
    $region4: #{audio_dscnn_forward.1} parent=1 // pred_region
      _
    $region5: #{audio_dscnn_forward.1} parent=1 // pred_fallthru
      _
    // Predicated region
    $region6: #{audio_dscnn_forward.1} parent=1 // pred_check
      _
    $region7: #{audio_dscnn_forward.1} parent=1 // pred_check_branch
      %14 = sbr.rel (0) target = $region9
    $region8: #{audio_dscnn_forward.1} parent=1 // pred_region
      _
    $region9: #{audio_dscnn_forward.1} parent=1 // pred_fallthru
      _
    %v15 = vld [vmem:[%s0] sm:$0xff]
    %v16 = vld [vmem:[%s0 + $0x8] sm:$0xff]
    %v17 = vld [vmem:[%s0 + $0x10] sm:$0xff]
    %v18 = vld [vmem:[%s0 + $0x18] sm:$0xff]
    %v19 = vld [vmem:[%s0 + $0x20] sm:$0xff]
    %v20 = vld [vmem:[%s0 + $0x28] sm:$0xff]
    %v21 = vld [vmem:[%s0 + $0x30] sm:$0xff]
    %v22 = vld [vmem:[%s0 + $0x38] sm:$0xff]
    %v23 = vld [vmem:[%s0 + $0x40] sm:$0xff]
    %v24 = vld [vmem:[%s0 + $0x48] sm:$0xff]
    %v25 = vld [vmem:[%s0 + $0x50] sm:$0xff]
    %v26 = vld [vmem:[%s0 + $0x58] sm:$0xff]
    %v27 = vld [vmem:[%s0 + $0x60] sm:$0xff]
    %v28 = vld [vmem:[%s0 + $0x68] sm:$0xff]
    %v29 = vld [vmem:[%s0 + $0x70] sm:$0xff]
    %v30 = vld [vmem:[%s0 + $0x78] sm:$0xff]
    %v31 = vld [vmem:[%s1 + $0x18] sm:$0xff]
    %v32 = vld [vmem:[%s1 + $0x20] sm:$0xff]
    %v33 = vld [vmem:[%s1 + $0x28] sm:$0xff]
    %v34 = vld [vmem:[%s1 + $0x30] sm:$0xff]
    %v35 = vld [vmem:[%s1 + $0x38] sm:$0xff]
    %v36 = vld [vmem:[%s1] sm:$0x1]
    %v37 = vperm.slane %v36, 0
    %vm38 = vcmask 326656
    %v40 = vsel %vm38, %v15, 0
    %v43 = vsel %vm38, %v16, 0
    %v46 = vsel %vm38, %v17, 0
    %v49 = vsel %vm38, %v18, 0
    %v52 = vsel %vm38, %v19, 0
    %v55 = vsel %vm38, %v20, 0
    %v58 = vsel %vm38, %v21, 0
    %v61 = vsel %vm38, %v22, 0
    %v64 = vsel %vm38, %v23, 0
    %v67 = vsel %vm38, %v24, 0
    %v70 = vsel %vm38, %v25, 0
    %v73 = vsel %vm38, %v26, 0
    %v76 = vsel %vm38, %v27, 0
    %v79 = vsel %vm38, %v28, 0
    %v82 = vsel %vm38, %v29, 0
    %v85 = vsel %vm38, %v30, 0
    %87 = vmatpush.msra.mxu0 0.0
    %88 = vmatpush.msra.mxu0 0.0
    %89 = vmatpush.msra.mxu0 0.0
    %90 = vmatpush.msra.mxu0 0.0
    %91 = vmatpush.msra.mxu0 0.0
    %92 = vmatpush.msra.mxu0 0.0
    %93 = vmatpush.msra.mxu0 0.0
    %94 = vmatpush.msra.mxu0 0.0
    %95 = vmatpush.msra.mxu0 0.0
    %96 = vmatpush.msra.mxu0 0.0
    %97 = vmatpush.msra.mxu0 0.0
    %98 = vmatpush.msra.mxu0 %v35
    %99 = vmatpush.msra.mxu0 %v34
    %100 = vmatpush.msra.mxu0 %v33
    %101 = vmatpush.msra.mxu0 %v32
    %102 = vmatpush.msra.mxu0 %v31
    %103 = vmatmul.f32.gmra.mxu0 %v40
    %v104 = vpop.f32.mrf.mxu0
    %v105 = vadd.f32 %v37, %v104
    %106 = vmatmul.f32.gmra.mxu0 %v43
    %v107 = vpop.f32.mrf.mxu0
    %v108 = vadd.f32 %v37, %v107
    %109 = vmatmul.f32.gmra.mxu0 %v46
    %v110 = vpop.f32.mrf.mxu0
    %v111 = vadd.f32 %v37, %v110
    %112 = vmatmul.f32.gmra.mxu0 %v49
    %v113 = vpop.f32.mrf.mxu0
    %v114 = vadd.f32 %v37, %v113
    %115 = vmatmul.f32.gmra.mxu0 %v52
    %v116 = vpop.f32.mrf.mxu0
    %v117 = vadd.f32 %v37, %v116
    %118 = vmatmul.f32.gmra.mxu0 %v55
    %v119 = vpop.f32.mrf.mxu0
    %v120 = vadd.f32 %v37, %v119
    %121 = vmatmul.f32.gmra.mxu0 %v58
    %v122 = vpop.f32.mrf.mxu0
    %v123 = vadd.f32 %v37, %v122
    %124 = vmatmul.f32.gmra.mxu0 %v61
    %v125 = vpop.f32.mrf.mxu0
    %v126 = vadd.f32 %v37, %v125
    %127 = vmatmul.f32.gmra.mxu0 %v64
    %v128 = vpop.f32.mrf.mxu0
    %v129 = vadd.f32 %v37, %v128
    %130 = vmatmul.f32.gmra.mxu0 %v67
    %v131 = vpop.f32.mrf.mxu0
    %v132 = vadd.f32 %v37, %v131
    %133 = vmatmul.f32.gmra.mxu0 %v70
    %v134 = vpop.f32.mrf.mxu0
    %v135 = vadd.f32 %v37, %v134
    %136 = vmatmul.f32.gmra.mxu0 %v73
    %v137 = vpop.f32.mrf.mxu0
    %v138 = vadd.f32 %v37, %v137
    %139 = vmatmul.f32.gmra.mxu0 %v76
    %v140 = vpop.f32.mrf.mxu0
    %v141 = vadd.f32 %v37, %v140
    %142 = vmatmul.f32.gmra.mxu0 %v79
    %v143 = vpop.f32.mrf.mxu0
    %v144 = vadd.f32 %v37, %v143
    %145 = vmatmul.f32.gmra.mxu0 %v82
    %v146 = vpop.f32.mrf.mxu0
    %v147 = vadd.f32 %v37, %v146
    %148 = vmatmul.f32.gmra.mxu0 %v85
    %v149 = vpop.f32.mrf.mxu0
    %v150 = vadd.f32 %v37, %v149
    %151 = vdwg.mxu0
    %v152 = vld [vmem:[%s1 + $0x8] sm:$0x1]
    %v153 = vld [vmem:[%s1 + $0x10] sm:$0x1]
    %v154 = vadd.f32 %v105, %v108
    %v155 = vadd.f32 %v154, %v111
    %v156 = vadd.f32 %v155, %v114
    %v157 = vadd.f32 %v156, %v117
    %v158 = vadd.f32 %v157, %v120
    %v159 = vadd.f32 %v158, %v123
    %v160 = vadd.f32 %v159, %v126
    %v161 = vadd.f32 %v160, %v129
    %v162 = vadd.f32 %v161, %v132
    %v163 = vadd.f32 %v162, %v135
    %v164 = vadd.f32 %v163, %v138
    %v165 = vadd.f32 %v164, %v141
    %v166 = vadd.f32 %v165, %v144
    %v167 = vadd.f32 %v166, %v147
    %v168 = vadd.f32 %v167, %v150
    %v169 = vrot.slane %v168, 4
    %v170 = vadd.f32 %v168, %v169
    %v171 = vrot.slane %v170, 2
    %v172 = vadd.f32 %v170, %v171
    %v173 = vrot.slane %v172, 1
    %v174 = vadd.f32 %v172, %v173
    %v175 = vmul.f32 %v105, %v105
    %v176 = vmul.f32 %v108, %v108
    %v177 = vmul.f32 %v111, %v111
    %v178 = vmul.f32 %v114, %v114
    %v179 = vmul.f32 %v117, %v117
    %v180 = vmul.f32 %v120, %v120
    %v181 = vmul.f32 %v123, %v123
    %v182 = vmul.f32 %v126, %v126
    %v183 = vmul.f32 %v129, %v129
    %v184 = vmul.f32 %v132, %v132
    %v185 = vmul.f32 %v135, %v135
    %v186 = vmul.f32 %v138, %v138
    %v187 = vmul.f32 %v141, %v141
    %v188 = vmul.f32 %v144, %v144
    %v189 = vmul.f32 %v147, %v147
    %v190 = vmul.f32 %v150, %v150
    %v191 = vadd.f32 %v175, %v176
    %v192 = vadd.f32 %v191, %v177
    %v193 = vadd.f32 %v192, %v178
    %v194 = vadd.f32 %v193, %v179
    %v195 = vadd.f32 %v194, %v180
    %v196 = vadd.f32 %v195, %v181
    %v197 = vadd.f32 %v196, %v182
    %v198 = vadd.f32 %v197, %v183
    %v199 = vadd.f32 %v198, %v184
    %v200 = vadd.f32 %v199, %v185
    %v201 = vadd.f32 %v200, %v186
    %v202 = vadd.f32 %v201, %v187
    %v203 = vadd.f32 %v202, %v188
    %v204 = vadd.f32 %v203, %v189
    %v205 = vadd.f32 %v204, %v190
    %v206 = vrot.slane %v205, 4
    %v207 = vadd.f32 %v205, %v206
    %v208 = vrot.slane %v207, 2
    %v209 = vadd.f32 %v207, %v208
    %v210 = vrot.slane %v209, 1
    %v211 = vadd.f32 %v209, %v210
    %v212 = vmul.f32 %v174, 0.0078125
    %v213 = vmul.f32 %v211, 0.0078125
    %v214 = vmul.f32 %v212, %v212
    %v215 = vsub.f32 %v213, %v214
    %v216 = vadd.f32 %v215, 1e-05
    %v217 = vrsqrt.pop %v216
    %v218 = vmul.f32 %v217, %v216
    %v219 = vmul.f32 %v218, %v217
    %v220 = vmul.f32 0.5, %v219
    %v221 = vsub.f32 1.5, %v220
    %v222 = vmul.f32 %v217, %v221
    %vm223 = vweird.f32 %v216
    %vm224 = vweird.f32 %v217
    %vm225 = vmor %vm223, %vm224
    %v226 = vsel %vm225, %v217, %v222
    %v227 = vmul.f32 %v152, %v226
    %v228 = vmul.f32 %v212, %v227
    %v229 = vsub.f32 %v153, %v228
    %v230 = vperm.slane %v227, 0
    %v231 = vmul.f32 %v105, %v230
    %v232 = vmul.f32 %v108, %v230
    %v233 = vmul.f32 %v111, %v230
    %v234 = vmul.f32 %v114, %v230
    %v235 = vmul.f32 %v117, %v230
    %v236 = vmul.f32 %v120, %v230
    %v237 = vmul.f32 %v123, %v230
    %v238 = vmul.f32 %v126, %v230
    %v239 = vmul.f32 %v129, %v230
    %v240 = vmul.f32 %v132, %v230
    %v241 = vmul.f32 %v135, %v230
    %v242 = vmul.f32 %v138, %v230
    %v243 = vmul.f32 %v141, %v230
    %v244 = vmul.f32 %v144, %v230
    %v245 = vmul.f32 %v147, %v230
    %v246 = vmul.f32 %v150, %v230
    %v247 = vperm.slane %v229, 0
    %v248 = vadd.f32 %v231, %v247
    %v249 = vadd.f32 %v232, %v247
    %v250 = vadd.f32 %v233, %v247
    %v251 = vadd.f32 %v234, %v247
    %v252 = vadd.f32 %v235, %v247
    %v253 = vadd.f32 %v236, %v247
    %v254 = vadd.f32 %v237, %v247
    %v255 = vadd.f32 %v238, %v247
    %v256 = vadd.f32 %v239, %v247
    %v257 = vadd.f32 %v240, %v247
    %v258 = vadd.f32 %v241, %v247
    %v259 = vadd.f32 %v242, %v247
    %v260 = vadd.f32 %v243, %v247
    %v261 = vadd.f32 %v244, %v247
    %v262 = vadd.f32 %v245, %v247
    %v263 = vadd.f32 %v246, %v247
    %v264 = vmax.f32 %v248, 0.0
    %v265 = vmax.f32 %v249, 0.0
    %v266 = vmax.f32 %v250, 0.0
    %v267 = vmax.f32 %v251, 0.0
    %v268 = vmax.f32 %v252, 0.0
    %v269 = vmax.f32 %v253, 0.0
    %v270 = vmax.f32 %v254, 0.0
    %v271 = vmax.f32 %v255, 0.0
    %v272 = vmax.f32 %v256, 0.0
    %v273 = vmax.f32 %v257, 0.0
    %v274 = vmax.f32 %v258, 0.0
    %v275 = vmax.f32 %v259, 0.0
    %v276 = vmax.f32 %v260, 0.0
    %v277 = vmax.f32 %v261, 0.0
    %v278 = vmax.f32 %v262, 0.0
    %v279 = vmax.f32 %v263, 0.0
    %v280 = vlaneseq
    %v281 = vshrl.u32 %v280, 7
    %v282 = vadd.s32 %v281, 8
    %v283 = vadd.s32 %v281, 16
    %v284 = vadd.s32 %v281, 24
    %v285 = vadd.s32 %v281, 32
    %v286 = vadd.s32 %v281, 40
    %v287 = vadd.s32 %v281, 48
    %v288 = vadd.s32 %v281, 56
    %v289 = vadd.s32 %v281, 64
    %v290 = vadd.s32 %v281, 72
    %v291 = vadd.s32 %v281, 80
    %v292 = vadd.s32 %v281, 88
    %v293 = vadd.s32 %v281, 96
    %v294 = vadd.s32 %v281, 104
    %v295 = vadd.s32 %v281, 112
    %v296 = vadd.s32 %v281, 120
    %v297 = vand.u32 %v281, 63
    %v298 = vand.u32 %v282, 63
    %v299 = vand.u32 %v283, 63
    %v300 = vand.u32 %v284, 63
    %v301 = vand.u32 %v285, 63
    %v302 = vand.u32 %v286, 63
    %v303 = vand.u32 %v287, 63
    %v304 = vand.u32 %v288, 63
    %v305 = vand.u32 %v289, 63
    %v306 = vand.u32 %v290, 63
    %v307 = vand.u32 %v291, 63
    %v308 = vand.u32 %v292, 63
    %v309 = vand.u32 %v293, 63
    %v310 = vand.u32 %v294, 63
    %v311 = vand.u32 %v295, 63
    %v312 = vand.u32 %v296, 63
    %v313 = vand.u32 %v281, 3
    %v314 = vand.u32 %v282, 3
    %v315 = vand.u32 %v283, 3
    %v316 = vand.u32 %v284, 3
    %v317 = vand.u32 %v285, 3
    %v318 = vand.u32 %v286, 3
    %v319 = vand.u32 %v287, 3
    %v320 = vand.u32 %v288, 3
    %v321 = vand.u32 %v289, 3
    %v322 = vand.u32 %v290, 3
    %v323 = vand.u32 %v291, 3
    %v324 = vand.u32 %v292, 3
    %v325 = vand.u32 %v293, 3
    %v326 = vand.u32 %v294, 3
    %v327 = vand.u32 %v295, 3
    %v328 = vand.u32 %v296, 3
    %vm329 = vcmp.ge.s32.totalorder %v297, 4
    %vm330 = vcmp.ge.s32.totalorder %v298, 4
    %vm331 = vcmp.ge.s32.totalorder %v299, 4
    %vm332 = vcmp.ge.s32.totalorder %v300, 4
    %vm333 = vcmp.ge.s32.totalorder %v301, 4
    %vm334 = vcmp.ge.s32.totalorder %v302, 4
    %vm335 = vcmp.ge.s32.totalorder %v303, 4
    %vm336 = vcmp.ge.s32.totalorder %v304, 4
    %vm337 = vcmp.ge.s32.totalorder %v305, 4
    %vm338 = vcmp.ge.s32.totalorder %v306, 4
    %vm339 = vcmp.ge.s32.totalorder %v307, 4
    %vm340 = vcmp.ge.s32.totalorder %v308, 4
    %vm341 = vcmp.ge.s32.totalorder %v309, 4
    %vm342 = vcmp.ge.s32.totalorder %v310, 4
    %vm343 = vcmp.ge.s32.totalorder %v311, 4
    %vm344 = vcmp.ge.s32.totalorder %v312, 4
    %vm345 = vcmp.ge.s32.totalorder %v313, 1
    %vm346 = vcmp.ge.s32.totalorder %v314, 1
    %vm347 = vcmp.ge.s32.totalorder %v315, 1
    %vm348 = vcmp.ge.s32.totalorder %v316, 1
    %vm349 = vcmp.ge.s32.totalorder %v317, 1
    %vm350 = vcmp.ge.s32.totalorder %v318, 1
    %vm351 = vcmp.ge.s32.totalorder %v319, 1
    %vm352 = vcmp.ge.s32.totalorder %v320, 1
    %vm353 = vcmp.ge.s32.totalorder %v321, 1
    %vm354 = vcmp.ge.s32.totalorder %v322, 1
    %vm355 = vcmp.ge.s32.totalorder %v323, 1
    %vm356 = vcmp.ge.s32.totalorder %v324, 1
    %vm357 = vcmp.ge.s32.totalorder %v325, 1
    %vm358 = vcmp.ge.s32.totalorder %v326, 1
    %vm359 = vcmp.ge.s32.totalorder %v327, 1
    %vm360 = vcmp.ge.s32.totalorder %v328, 1
    %vm361 = vmand %vm329, %vm345
    %vm362 = vmand %vm330, %vm346
    %vm363 = vmand %vm331, %vm347
    %vm364 = vmand %vm332, %vm348
    %vm365 = vmand %vm333, %vm349
    %vm366 = vmand %vm334, %vm350
    %vm367 = vmand %vm335, %vm351
    %vm368 = vmand %vm336, %vm352
    %vm369 = vmand %vm337, %vm353
    %vm370 = vmand %vm338, %vm354
    %vm371 = vmand %vm339, %vm355
    %vm372 = vmand %vm340, %vm356
    %vm373 = vmand %vm341, %vm357
    %vm374 = vmand %vm342, %vm358
    %vm375 = vmand %vm343, %vm359
    %vm376 = vmand %vm344, %vm360
    %v377 = vsel %vm361, 1.0, 0.0
    %v378 = vsel %vm362, 1.0, 0.0
    %v379 = vsel %vm363, 1.0, 0.0
    %v380 = vsel %vm364, 1.0, 0.0
    %v381 = vsel %vm365, 1.0, 0.0
    %v382 = vsel %vm366, 1.0, 0.0
    %v383 = vsel %vm367, 1.0, 0.0
    %v384 = vsel %vm368, 1.0, 0.0
    %v385 = vsel %vm369, 1.0, 0.0
    %v386 = vsel %vm370, 1.0, 0.0
    %v387 = vsel %vm371, 1.0, 0.0
    %v388 = vsel %vm372, 1.0, 0.0
    %v389 = vsel %vm373, 1.0, 0.0
    %v390 = vsel %vm374, 1.0, 0.0
    %v391 = vsel %vm375, 1.0, 0.0
    %v392 = vsel %vm376, 1.0, 0.0
    %v393 = vsel %vm329, 1.0, 0.0
    %v394 = vsel %vm330, 1.0, 0.0
    %v395 = vsel %vm331, 1.0, 0.0
    %v396 = vsel %vm332, 1.0, 0.0
    %v397 = vsel %vm333, 1.0, 0.0
    %v398 = vsel %vm334, 1.0, 0.0
    %v399 = vsel %vm335, 1.0, 0.0
    %v400 = vsel %vm336, 1.0, 0.0
    %v401 = vsel %vm337, 1.0, 0.0
    %v402 = vsel %vm338, 1.0, 0.0
    %v403 = vsel %vm339, 1.0, 0.0
    %v404 = vsel %vm340, 1.0, 0.0
    %v405 = vsel %vm341, 1.0, 0.0
    %v406 = vsel %vm342, 1.0, 0.0
    %v407 = vsel %vm343, 1.0, 0.0
    %v408 = vsel %vm344, 1.0, 0.0
    %vm409 = vcmp.lt.s32.totalorder %v313, 3
    %vm410 = vcmp.lt.s32.totalorder %v314, 3
    %vm411 = vcmp.lt.s32.totalorder %v315, 3
    %vm412 = vcmp.lt.s32.totalorder %v316, 3
    %vm413 = vcmp.lt.s32.totalorder %v317, 3
    %vm414 = vcmp.lt.s32.totalorder %v318, 3
    %vm415 = vcmp.lt.s32.totalorder %v319, 3
    %vm416 = vcmp.lt.s32.totalorder %v320, 3
    %vm417 = vcmp.lt.s32.totalorder %v321, 3
    %vm418 = vcmp.lt.s32.totalorder %v322, 3
    %vm419 = vcmp.lt.s32.totalorder %v323, 3
    %vm420 = vcmp.lt.s32.totalorder %v324, 3
    %vm421 = vcmp.lt.s32.totalorder %v325, 3
    %vm422 = vcmp.lt.s32.totalorder %v326, 3
    %vm423 = vcmp.lt.s32.totalorder %v327, 3
    %vm424 = vcmp.lt.s32.totalorder %v328, 3
    %vm425 = vmand %vm329, %vm409
    %vm426 = vmand %vm330, %vm410
    %vm427 = vmand %vm331, %vm411
    %vm428 = vmand %vm332, %vm412
    %vm429 = vmand %vm333, %vm413
    %vm430 = vmand %vm334, %vm414
    %vm431 = vmand %vm335, %vm415
    %vm432 = vmand %vm336, %vm416
    %vm433 = vmand %vm337, %vm417
    %vm434 = vmand %vm338, %vm418
    %vm435 = vmand %vm339, %vm419
    %vm436 = vmand %vm340, %vm420
    %vm437 = vmand %vm341, %vm421
    %vm438 = vmand %vm342, %vm422
    %vm439 = vmand %vm343, %vm423
    %vm440 = vmand %vm344, %vm424
    %v441 = vsel %vm425, 1.0, 0.0
    %v442 = vsel %vm426, 1.0, 0.0
    %v443 = vsel %vm427, 1.0, 0.0
    %v444 = vsel %vm428, 1.0, 0.0
    %v445 = vsel %vm429, 1.0, 0.0
    %v446 = vsel %vm430, 1.0, 0.0
    %v447 = vsel %vm431, 1.0, 0.0
    %v448 = vsel %vm432, 1.0, 0.0
    %v449 = vsel %vm433, 1.0, 0.0
    %v450 = vsel %vm434, 1.0, 0.0
    %v451 = vsel %vm435, 1.0, 0.0
    %v452 = vsel %vm436, 1.0, 0.0
    %v453 = vsel %vm437, 1.0, 0.0
    %v454 = vsel %vm438, 1.0, 0.0
    %v455 = vsel %vm439, 1.0, 0.0
    %v456 = vsel %vm440, 1.0, 0.0
    %v457 = vsel %vm345, 1.0, 0.0
    %v458 = vsel %vm346, 1.0, 0.0
    %v459 = vsel %vm347, 1.0, 0.0
    %v460 = vsel %vm348, 1.0, 0.0
    %v461 = vsel %vm349, 1.0, 0.0
    %v462 = vsel %vm350, 1.0, 0.0
    %v463 = vsel %vm351, 1.0, 0.0
    %v464 = vsel %vm352, 1.0, 0.0
    %v465 = vsel %vm353, 1.0, 0.0
    %v466 = vsel %vm354, 1.0, 0.0
    %v467 = vsel %vm355, 1.0, 0.0
    %v468 = vsel %vm356, 1.0, 0.0
    %v469 = vsel %vm357, 1.0, 0.0
    %v470 = vsel %vm358, 1.0, 0.0
    %v471 = vsel %vm359, 1.0, 0.0
    %v472 = vsel %vm360, 1.0, 0.0
    %v473 = vsel %vm409, 1.0, 0.0
    %v474 = vsel %vm410, 1.0, 0.0
    %v475 = vsel %vm411, 1.0, 0.0
    %v476 = vsel %vm412, 1.0, 0.0
    %v477 = vsel %vm413, 1.0, 0.0
    %v478 = vsel %vm414, 1.0, 0.0
    %v479 = vsel %vm415, 1.0, 0.0
    %v480 = vsel %vm416, 1.0, 0.0
    %v481 = vsel %vm417, 1.0, 0.0
    %v482 = vsel %vm418, 1.0, 0.0
    %v483 = vsel %vm419, 1.0, 0.0
    %v484 = vsel %vm420, 1.0, 0.0
    %v485 = vsel %vm421, 1.0, 0.0
    %v486 = vsel %vm422, 1.0, 0.0
    %v487 = vsel %vm423, 1.0, 0.0
    %v488 = vsel %vm424, 1.0, 0.0
    %vm489 = vcmp.lt.s32.totalorder %v297, 60
    %vm490 = vcmp.lt.s32.totalorder %v298, 60
    %vm491 = vcmp.lt.s32.totalorder %v299, 60
    %vm492 = vcmp.lt.s32.totalorder %v300, 60
    %vm493 = vcmp.lt.s32.totalorder %v301, 60
    %vm494 = vcmp.lt.s32.totalorder %v302, 60
    %vm495 = vcmp.lt.s32.totalorder %v303, 60
    %vm496 = vcmp.lt.s32.totalorder %v304, 60
    %vm497 = vcmp.lt.s32.totalorder %v305, 60
    %vm498 = vcmp.lt.s32.totalorder %v306, 60
    %vm499 = vcmp.lt.s32.totalorder %v307, 60
    %vm500 = vcmp.lt.s32.totalorder %v308, 60
    %vm501 = vcmp.lt.s32.totalorder %v309, 60
    %vm502 = vcmp.lt.s32.totalorder %v310, 60
    %vm503 = vcmp.lt.s32.totalorder %v311, 60
    %vm504 = vcmp.lt.s32.totalorder %v312, 60
    %vm505 = vmand %vm489, %vm345
    %vm506 = vmand %vm490, %vm346
    %vm507 = vmand %vm491, %vm347
    %vm508 = vmand %vm492, %vm348
    %vm509 = vmand %vm493, %vm349
    %vm510 = vmand %vm494, %vm350
    %vm511 = vmand %vm495, %vm351
    %vm512 = vmand %vm496, %vm352
    %vm513 = vmand %vm497, %vm353
    %vm514 = vmand %vm498, %vm354
    %vm515 = vmand %vm499, %vm355
    %vm516 = vmand %vm500, %vm356
    %vm517 = vmand %vm501, %vm357
    %vm518 = vmand %vm502, %vm358
    %vm519 = vmand %vm503, %vm359
    %vm520 = vmand %vm504, %vm360
    %v521 = vsel %vm505, 1.0, 0.0
    %v522 = vsel %vm506, 1.0, 0.0
    %v523 = vsel %vm507, 1.0, 0.0
    %v524 = vsel %vm508, 1.0, 0.0
    %v525 = vsel %vm509, 1.0, 0.0
    %v526 = vsel %vm510, 1.0, 0.0
    %v527 = vsel %vm511, 1.0, 0.0
    %v528 = vsel %vm512, 1.0, 0.0
    %v529 = vsel %vm513, 1.0, 0.0
    %v530 = vsel %vm514, 1.0, 0.0
    %v531 = vsel %vm515, 1.0, 0.0
    %v532 = vsel %vm516, 1.0, 0.0
    %v533 = vsel %vm517, 1.0, 0.0
    %v534 = vsel %vm518, 1.0, 0.0
    %v535 = vsel %vm519, 1.0, 0.0
    %v536 = vsel %vm520, 1.0, 0.0
    %v537 = vsel %vm489, 1.0, 0.0
    %v538 = vsel %vm490, 1.0, 0.0
    %v539 = vsel %vm491, 1.0, 0.0
    %v540 = vsel %vm492, 1.0, 0.0
    %v541 = vsel %vm493, 1.0, 0.0
    %v542 = vsel %vm494, 1.0, 0.0
    %v543 = vsel %vm495, 1.0, 0.0
    %v544 = vsel %vm496, 1.0, 0.0
    %v545 = vsel %vm497, 1.0, 0.0
    %v546 = vsel %vm498, 1.0, 0.0
    %v547 = vsel %vm499, 1.0, 0.0
    %v548 = vsel %vm500, 1.0, 0.0
    %v549 = vsel %vm501, 1.0, 0.0
    %v550 = vsel %vm502, 1.0, 0.0
    %v551 = vsel %vm503, 1.0, 0.0
    %v552 = vsel %vm504, 1.0, 0.0
    %vm553 = vmand %vm489, %vm409
    %vm554 = vmand %vm490, %vm410
    %vm555 = vmand %vm491, %vm411
    %vm556 = vmand %vm492, %vm412
    %vm557 = vmand %vm493, %vm413
    %vm558 = vmand %vm494, %vm414
    %vm559 = vmand %vm495, %vm415
    %vm560 = vmand %vm496, %vm416
    %vm561 = vmand %vm497, %vm417
    %vm562 = vmand %vm498, %vm418
    %vm563 = vmand %vm499, %vm419
    %vm564 = vmand %vm500, %vm420
    %vm565 = vmand %vm501, %vm421
    %vm566 = vmand %vm502, %vm422
    %vm567 = vmand %vm503, %vm423
    %vm568 = vmand %vm504, %vm424
    %v569 = vsel %vm553, 1.0, 0.0
    %v570 = vsel %vm554, 1.0, 0.0
    %v571 = vsel %vm555, 1.0, 0.0
    %v572 = vsel %vm556, 1.0, 0.0
    %v573 = vsel %vm557, 1.0, 0.0
    %v574 = vsel %vm558, 1.0, 0.0
    %v575 = vsel %vm559, 1.0, 0.0
    %v576 = vsel %vm560, 1.0, 0.0
    %v577 = vsel %vm561, 1.0, 0.0
    %v578 = vsel %vm562, 1.0, 0.0
    %v579 = vsel %vm563, 1.0, 0.0
    %v580 = vsel %vm564, 1.0, 0.0
    %v581 = vsel %vm565, 1.0, 0.0
    %v582 = vsel %vm566, 1.0, 0.0
    %v583 = vsel %vm567, 1.0, 0.0
    %v584 = vsel %vm568, 1.0, 0.0
    %v585 = vld [vmem:[%s1 + $0x44] sm:$0x1]
    %v586 = vperm.slane %v585, 0
    %v587 = vmul.f32 %v264, %v586
    %v588 = vmul.f32 %v265, %v586
    %v589 = vmul.f32 %v266, %v586
    %v590 = vmul.f32 %v267, %v586
    %v591 = vmul.f32 %v268, %v586
    %v592 = vmul.f32 %v269, %v586
    %v593 = vmul.f32 %v270, %v586
    %v594 = vmul.f32 %v271, %v586
    %v595 = vmul.f32 %v272, %v586
    %v596 = vmul.f32 %v273, %v586
    %v597 = vmul.f32 %v274, %v586
    %v598 = vmul.f32 %v275, %v586
    %v599 = vmul.f32 %v276, %v586
    %v600 = vmul.f32 %v277, %v586
    %v601 = vmul.f32 %v278, %v586
    %v602 = vmul.f32 %v279, %v586
    %v603 = vld [vmem:[%s1 + $0x70] sm:$0x1]
    %v604 = vperm.slane %v603, 0
    %v605 = vadd.f32 %v587, %v604
    %v606 = vadd.f32 %v588, %v604
    %v607 = vadd.f32 %v589, %v604
    %v608 = vadd.f32 %v590, %v604
    %v609 = vadd.f32 %v591, %v604
    %v610 = vadd.f32 %v592, %v604
    %v611 = vadd.f32 %v593, %v604
    %v612 = vadd.f32 %v594, %v604
    %v613 = vadd.f32 %v595, %v604
    %v614 = vadd.f32 %v596, %v604
    %v615 = vadd.f32 %v597, %v604
    %v616 = vadd.f32 %v598, %v604
    %v617 = vadd.f32 %v599, %v604
    %v618 = vadd.f32 %v600, %v604
    %v619 = vadd.f32 %v601, %v604
    %v620 = vadd.f32 %v602, %v604
    %v621 = vrot.slane %v264, 3
    %v622 = vrot.slane %v265, 3
    %v623 = vrot.slane %v266, 3
    %v624 = vrot.slane %v267, 3
    %v625 = vrot.slane %v268, 3
    %v626 = vrot.slane %v269, 3
    %v627 = vrot.slane %v270, 3
    %v628 = vrot.slane %v271, 3
    %v629 = vrot.slane %v272, 3
    %v630 = vrot.slane %v273, 3
    %v631 = vrot.slane %v274, 3
    %v632 = vrot.slane %v275, 3
    %v633 = vrot.slane %v276, 3
    %v634 = vrot.slane %v277, 3
    %v635 = vrot.slane %v278, 3
    %v636 = vrot.slane %v279, 3
    %vm637 = vcmp.lt.s32.totalorder %v281, 5
    %v638 = vsel %vm637, %v635, %v636
    %v639 = vsel %vm637, %v634, %v635
    %v640 = vsel %vm637, %v633, %v634
    %v641 = vsel %vm637, %v632, %v633
    %v642 = vsel %vm637, %v631, %v632
    %v643 = vsel %vm637, %v630, %v631
    %v644 = vsel %vm637, %v629, %v630
    %v645 = vsel %vm637, %v628, %v629
    %v646 = vsel %vm637, %v627, %v628
    %v647 = vsel %vm637, %v626, %v627
    %v648 = vsel %vm637, %v625, %v626
    %v649 = vsel %vm637, %v624, %v625
    %v650 = vsel %vm637, %v623, %v624
    %v651 = vsel %vm637, %v622, %v623
    %v652 = vsel %vm637, %v621, %v622
    %v653 = vsel %vm637, %v636, %v621
    %v654 = vld [vmem:[%s1 + $0x40] sm:$0x1]
    %v655 = vperm.slane %v654, 0
    %v656 = vmul.f32 %v377, %v655
    %v657 = vmul.f32 %v378, %v655
    %v658 = vmul.f32 %v379, %v655
    %v659 = vmul.f32 %v380, %v655
    %v660 = vmul.f32 %v381, %v655
    %v661 = vmul.f32 %v382, %v655
    %v662 = vmul.f32 %v383, %v655
    %v663 = vmul.f32 %v384, %v655
    %v664 = vmul.f32 %v385, %v655
    %v665 = vmul.f32 %v386, %v655
    %v666 = vmul.f32 %v387, %v655
    %v667 = vmul.f32 %v388, %v655
    %v668 = vmul.f32 %v389, %v655
    %v669 = vmul.f32 %v390, %v655
    %v670 = vmul.f32 %v391, %v655
    %v671 = vmul.f32 %v392, %v655
    %v672 = vmul.f32 %v653, %v656
    %v673 = vmul.f32 %v652, %v657
    %v674 = vmul.f32 %v651, %v658
    %v675 = vmul.f32 %v650, %v659
    %v676 = vmul.f32 %v649, %v660
    %v677 = vmul.f32 %v648, %v661
    %v678 = vmul.f32 %v647, %v662
    %v679 = vmul.f32 %v646, %v663
    %v680 = vmul.f32 %v645, %v664
    %v681 = vmul.f32 %v644, %v665
    %v682 = vmul.f32 %v643, %v666
    %v683 = vmul.f32 %v642, %v667
    %v684 = vmul.f32 %v641, %v668
    %v685 = vmul.f32 %v640, %v669
    %v686 = vmul.f32 %v639, %v670
    %v687 = vmul.f32 %v638, %v671
    %v688 = vadd.f32 %v605, %v672
    %v689 = vadd.f32 %v606, %v673
    %v690 = vadd.f32 %v607, %v674
    %v691 = vadd.f32 %v608, %v675
    %v692 = vadd.f32 %v609, %v676
    %v693 = vadd.f32 %v610, %v677
    %v694 = vadd.f32 %v611, %v678
    %v695 = vadd.f32 %v612, %v679
    %v696 = vadd.f32 %v613, %v680
    %v697 = vadd.f32 %v614, %v681
    %v698 = vadd.f32 %v615, %v682
    %v699 = vadd.f32 %v616, %v683
    %v700 = vadd.f32 %v617, %v684
    %v701 = vadd.f32 %v618, %v685
    %v702 = vadd.f32 %v619, %v686
    %v703 = vadd.f32 %v620, %v687
    %v704 = vrot.slane %v264, 4
    %v705 = vrot.slane %v265, 4
    %v706 = vrot.slane %v266, 4
    %v707 = vrot.slane %v267, 4
    %v708 = vrot.slane %v268, 4
    %v709 = vrot.slane %v269, 4
    %v710 = vrot.slane %v270, 4
    %v711 = vrot.slane %v271, 4
    %v712 = vrot.slane %v272, 4
    %v713 = vrot.slane %v273, 4
    %v714 = vrot.slane %v274, 4
    %v715 = vrot.slane %v275, 4
    %v716 = vrot.slane %v276, 4
    %v717 = vrot.slane %v277, 4
    %v718 = vrot.slane %v278, 4
    %v719 = vrot.slane %v279, 4
    %vm720 = vcmp.lt.s32.totalorder %v281, 4
    %v721 = vsel %vm720, %v718, %v719
    %v722 = vsel %vm720, %v717, %v718
    %v723 = vsel %vm720, %v716, %v717
    %v724 = vsel %vm720, %v715, %v716
    %v725 = vsel %vm720, %v714, %v715
    %v726 = vsel %vm720, %v713, %v714
    %v727 = vsel %vm720, %v712, %v713
    %v728 = vsel %vm720, %v711, %v712
    %v729 = vsel %vm720, %v710, %v711
    %v730 = vsel %vm720, %v709, %v710
    %v731 = vsel %vm720, %v708, %v709
    %v732 = vsel %vm720, %v707, %v708
    %v733 = vsel %vm720, %v706, %v707
    %v734 = vsel %vm720, %v705, %v706
    %v735 = vsel %vm720, %v704, %v705
    %v736 = vsel %vm720, %v719, %v704
    %v737 = vld [vmem:[%s1 + $0x41] sm:$0x1]
    %v738 = vperm.slane %v737, 0
    %v739 = vmul.f32 %v393, %v738
    %v740 = vmul.f32 %v394, %v738
    %v741 = vmul.f32 %v395, %v738
    %v742 = vmul.f32 %v396, %v738
    %v743 = vmul.f32 %v397, %v738
    %v744 = vmul.f32 %v398, %v738
    %v745 = vmul.f32 %v399, %v738
    %v746 = vmul.f32 %v400, %v738
    %v747 = vmul.f32 %v401, %v738
    %v748 = vmul.f32 %v402, %v738
    %v749 = vmul.f32 %v403, %v738
    %v750 = vmul.f32 %v404, %v738
    %v751 = vmul.f32 %v405, %v738
    %v752 = vmul.f32 %v406, %v738
    %v753 = vmul.f32 %v407, %v738
    %v754 = vmul.f32 %v408, %v738
    %v755 = vmul.f32 %v736, %v739
    %v756 = vmul.f32 %v735, %v740
    %v757 = vmul.f32 %v734, %v741
    %v758 = vmul.f32 %v733, %v742
    %v759 = vmul.f32 %v732, %v743
    %v760 = vmul.f32 %v731, %v744
    %v761 = vmul.f32 %v730, %v745
    %v762 = vmul.f32 %v729, %v746
    %v763 = vmul.f32 %v728, %v747
    %v764 = vmul.f32 %v727, %v748
    %v765 = vmul.f32 %v726, %v749
    %v766 = vmul.f32 %v725, %v750
    %v767 = vmul.f32 %v724, %v751
    %v768 = vmul.f32 %v723, %v752
    %v769 = vmul.f32 %v722, %v753
    %v770 = vmul.f32 %v721, %v754
    %v771 = vadd.f32 %v688, %v755
    %v772 = vadd.f32 %v689, %v756
    %v773 = vadd.f32 %v690, %v757
    %v774 = vadd.f32 %v691, %v758
    %v775 = vadd.f32 %v692, %v759
    %v776 = vadd.f32 %v693, %v760
    %v777 = vadd.f32 %v694, %v761
    %v778 = vadd.f32 %v695, %v762
    %v779 = vadd.f32 %v696, %v763
    %v780 = vadd.f32 %v697, %v764
    %v781 = vadd.f32 %v698, %v765
    %v782 = vadd.f32 %v699, %v766
    %v783 = vadd.f32 %v700, %v767
    %v784 = vadd.f32 %v701, %v768
    %v785 = vadd.f32 %v702, %v769
    %v786 = vadd.f32 %v703, %v770
    %v787 = vrot.slane %v264, 5
    %v788 = vrot.slane %v265, 5
    %v789 = vrot.slane %v266, 5
    %v790 = vrot.slane %v267, 5
    %v791 = vrot.slane %v268, 5
    %v792 = vrot.slane %v269, 5
    %v793 = vrot.slane %v270, 5
    %v794 = vrot.slane %v271, 5
    %v795 = vrot.slane %v272, 5
    %v796 = vrot.slane %v273, 5
    %v797 = vrot.slane %v274, 5
    %v798 = vrot.slane %v275, 5
    %v799 = vrot.slane %v276, 5
    %v800 = vrot.slane %v277, 5
    %v801 = vrot.slane %v278, 5
    %v802 = vrot.slane %v279, 5
    %vm803 = vcmp.lt.s32.totalorder %v281, 3
    %v804 = vsel %vm803, %v801, %v802
    %v805 = vsel %vm803, %v800, %v801
    %v806 = vsel %vm803, %v799, %v800
    %v807 = vsel %vm803, %v798, %v799
    %v808 = vsel %vm803, %v797, %v798
    %v809 = vsel %vm803, %v796, %v797
    %v810 = vsel %vm803, %v795, %v796
    %v811 = vsel %vm803, %v794, %v795
    %v812 = vsel %vm803, %v793, %v794
    %v813 = vsel %vm803, %v792, %v793
    %v814 = vsel %vm803, %v791, %v792
    %v815 = vsel %vm803, %v790, %v791
    %v816 = vsel %vm803, %v789, %v790
    %v817 = vsel %vm803, %v788, %v789
    %v818 = vsel %vm803, %v787, %v788
    %v819 = vsel %vm803, %v802, %v787
    %v820 = vld [vmem:[%s1 + $0x42] sm:$0x1]
    %v821 = vperm.slane %v820, 0
    %v822 = vmul.f32 %v441, %v821
    %v823 = vmul.f32 %v442, %v821
    %v824 = vmul.f32 %v443, %v821
    %v825 = vmul.f32 %v444, %v821
    %v826 = vmul.f32 %v445, %v821
    %v827 = vmul.f32 %v446, %v821
    %v828 = vmul.f32 %v447, %v821
    %v829 = vmul.f32 %v448, %v821
    %v830 = vmul.f32 %v449, %v821
    %v831 = vmul.f32 %v450, %v821
    %v832 = vmul.f32 %v451, %v821
    %v833 = vmul.f32 %v452, %v821
    %v834 = vmul.f32 %v453, %v821
    %v835 = vmul.f32 %v454, %v821
    %v836 = vmul.f32 %v455, %v821
    %v837 = vmul.f32 %v456, %v821
    %v838 = vmul.f32 %v819, %v822
    %v839 = vmul.f32 %v818, %v823
    %v840 = vmul.f32 %v817, %v824
    %v841 = vmul.f32 %v816, %v825
    %v842 = vmul.f32 %v815, %v826
    %v843 = vmul.f32 %v814, %v827
    %v844 = vmul.f32 %v813, %v828
    %v845 = vmul.f32 %v812, %v829
    %v846 = vmul.f32 %v811, %v830
    %v847 = vmul.f32 %v810, %v831
    %v848 = vmul.f32 %v809, %v832
    %v849 = vmul.f32 %v808, %v833
    %v850 = vmul.f32 %v807, %v834
    %v851 = vmul.f32 %v806, %v835
    %v852 = vmul.f32 %v805, %v836
    %v853 = vmul.f32 %v804, %v837
    %v854 = vadd.f32 %v771, %v838
    %v855 = vadd.f32 %v772, %v839
    %v856 = vadd.f32 %v773, %v840
    %v857 = vadd.f32 %v774, %v841
    %v858 = vadd.f32 %v775, %v842
    %v859 = vadd.f32 %v776, %v843
    %v860 = vadd.f32 %v777, %v844
    %v861 = vadd.f32 %v778, %v845
    %v862 = vadd.f32 %v779, %v846
    %v863 = vadd.f32 %v780, %v847
    %v864 = vadd.f32 %v781, %v848
    %v865 = vadd.f32 %v782, %v849
    %v866 = vadd.f32 %v783, %v850
    %v867 = vadd.f32 %v784, %v851
    %v868 = vadd.f32 %v785, %v852
    %v869 = vadd.f32 %v786, %v853
    %v870 = vrot.slane %v264, 7
    %v871 = vrot.slane %v265, 7
    %v872 = vrot.slane %v266, 7
    %v873 = vrot.slane %v267, 7
    %v874 = vrot.slane %v268, 7
    %v875 = vrot.slane %v269, 7
    %v876 = vrot.slane %v270, 7
    %v877 = vrot.slane %v271, 7
    %v878 = vrot.slane %v272, 7
    %v879 = vrot.slane %v273, 7
    %v880 = vrot.slane %v274, 7
    %v881 = vrot.slane %v275, 7
    %v882 = vrot.slane %v276, 7
    %v883 = vrot.slane %v277, 7
    %v884 = vrot.slane %v278, 7
    %v885 = vrot.slane %v279, 7
    %vm886 = vcmp.lt.s32.totalorder %v281, 1
    %v887 = vsel %vm886, %v884, %v885
    %v888 = vsel %vm886, %v883, %v884
    %v889 = vsel %vm886, %v882, %v883
    %v890 = vsel %vm886, %v881, %v882
    %v891 = vsel %vm886, %v880, %v881
    %v892 = vsel %vm886, %v879, %v880
    %v893 = vsel %vm886, %v878, %v879
    %v894 = vsel %vm886, %v877, %v878
    %v895 = vsel %vm886, %v876, %v877
    %v896 = vsel %vm886, %v875, %v876
    %v897 = vsel %vm886, %v874, %v875
    %v898 = vsel %vm886, %v873, %v874
    %v899 = vsel %vm886, %v872, %v873
    %v900 = vsel %vm886, %v871, %v872
    %v901 = vsel %vm886, %v870, %v871
    %v902 = vsel %vm886, %v885, %v870
    %v903 = vld [vmem:[%s1 + $0x43] sm:$0x1]
    %v904 = vperm.slane %v903, 0
    %v905 = vmul.f32 %v457, %v904
    %v906 = vmul.f32 %v458, %v904
    %v907 = vmul.f32 %v459, %v904
    %v908 = vmul.f32 %v460, %v904
    %v909 = vmul.f32 %v461, %v904
    %v910 = vmul.f32 %v462, %v904
    %v911 = vmul.f32 %v463, %v904
    %v912 = vmul.f32 %v464, %v904
    %v913 = vmul.f32 %v465, %v904
    %v914 = vmul.f32 %v466, %v904
    %v915 = vmul.f32 %v467, %v904
    %v916 = vmul.f32 %v468, %v904
    %v917 = vmul.f32 %v469, %v904
    %v918 = vmul.f32 %v470, %v904
    %v919 = vmul.f32 %v471, %v904
    %v920 = vmul.f32 %v472, %v904
    %v921 = vmul.f32 %v902, %v905
    %v922 = vmul.f32 %v901, %v906
    %v923 = vmul.f32 %v900, %v907
    %v924 = vmul.f32 %v899, %v908
    %v925 = vmul.f32 %v898, %v909
    %v926 = vmul.f32 %v897, %v910
    %v927 = vmul.f32 %v896, %v911
    %v928 = vmul.f32 %v895, %v912
    %v929 = vmul.f32 %v894, %v913
    %v930 = vmul.f32 %v893, %v914
    %v931 = vmul.f32 %v892, %v915
    %v932 = vmul.f32 %v891, %v916
    %v933 = vmul.f32 %v890, %v917
    %v934 = vmul.f32 %v889, %v918
    %v935 = vmul.f32 %v888, %v919
    %v936 = vmul.f32 %v887, %v920
    %v937 = vadd.f32 %v854, %v921
    %v938 = vadd.f32 %v855, %v922
    %v939 = vadd.f32 %v856, %v923
    %v940 = vadd.f32 %v857, %v924
    %v941 = vadd.f32 %v858, %v925
    %v942 = vadd.f32 %v859, %v926
    %v943 = vadd.f32 %v860, %v927
    %v944 = vadd.f32 %v861, %v928
    %v945 = vadd.f32 %v862, %v929
    %v946 = vadd.f32 %v863, %v930
    %v947 = vadd.f32 %v864, %v931
    %v948 = vadd.f32 %v865, %v932
    %v949 = vadd.f32 %v866, %v933
    %v950 = vadd.f32 %v867, %v934
    %v951 = vadd.f32 %v868, %v935
    %v952 = vadd.f32 %v869, %v936
    %v953 = vrot.slane %v264, 1
    %v954 = vrot.slane %v265, 1
    %v955 = vrot.slane %v266, 1
    %v956 = vrot.slane %v267, 1
    %v957 = vrot.slane %v268, 1
    %v958 = vrot.slane %v269, 1
    %v959 = vrot.slane %v270, 1
    %v960 = vrot.slane %v271, 1
    %v961 = vrot.slane %v272, 1
    %v962 = vrot.slane %v273, 1
    %v963 = vrot.slane %v274, 1
    %v964 = vrot.slane %v275, 1
    %v965 = vrot.slane %v276, 1
    %v966 = vrot.slane %v277, 1
    %v967 = vrot.slane %v278, 1
    %v968 = vrot.slane %v279, 1
    %vm969 = vcmp.lt.s32.totalorder %v281, 7
    %v970 = vsel %vm969, %v967, %v968
    %v971 = vsel %vm969, %v966, %v967
    %v972 = vsel %vm969, %v965, %v966
    %v973 = vsel %vm969, %v964, %v965
    %v974 = vsel %vm969, %v963, %v964
    %v975 = vsel %vm969, %v962, %v963
    %v976 = vsel %vm969, %v961, %v962
    %v977 = vsel %vm969, %v960, %v961
    %v978 = vsel %vm969, %v959, %v960
    %v979 = vsel %vm969, %v958, %v959
    %v980 = vsel %vm969, %v957, %v958
    %v981 = vsel %vm969, %v956, %v957
    %v982 = vsel %vm969, %v955, %v956
    %v983 = vsel %vm969, %v954, %v955
    %v984 = vsel %vm969, %v953, %v954
    %v985 = vsel %vm969, %v968, %v953
    %v986 = vld [vmem:[%s1 + $0x45] sm:$0x1]
    %v987 = vperm.slane %v986, 0
    %v988 = vmul.f32 %v473, %v987
    %v989 = vmul.f32 %v474, %v987
    %v990 = vmul.f32 %v475, %v987
    %v991 = vmul.f32 %v476, %v987
    %v992 = vmul.f32 %v477, %v987
    %v993 = vmul.f32 %v478, %v987
    %v994 = vmul.f32 %v479, %v987
    %v995 = vmul.f32 %v480, %v987
    %v996 = vmul.f32 %v481, %v987
    %v997 = vmul.f32 %v482, %v987
    %v998 = vmul.f32 %v483, %v987
    %v999 = vmul.f32 %v484, %v987
    %v1000 = vmul.f32 %v485, %v987
    %v1001 = vmul.f32 %v486, %v987
    %v1002 = vmul.f32 %v487, %v987
    %v1003 = vmul.f32 %v488, %v987
    %v1004 = vmul.f32 %v984, %v988
    %v1005 = vmul.f32 %v983, %v989
    %v1006 = vmul.f32 %v982, %v990
    %v1007 = vmul.f32 %v981, %v991
    %v1008 = vmul.f32 %v980, %v992
    %v1009 = vmul.f32 %v979, %v993
    %v1010 = vmul.f32 %v978, %v994
    %v1011 = vmul.f32 %v977, %v995
    %v1012 = vmul.f32 %v976, %v996
    %v1013 = vmul.f32 %v975, %v997
    %v1014 = vmul.f32 %v974, %v998
    %v1015 = vmul.f32 %v973, %v999
    %v1016 = vmul.f32 %v972, %v1000
    %v1017 = vmul.f32 %v971, %v1001
    %v1018 = vmul.f32 %v970, %v1002
    %v1019 = vmul.f32 %v985, %v1003
    %v1020 = vadd.f32 %v937, %v1004
    %v1021 = vadd.f32 %v938, %v1005
    %v1022 = vadd.f32 %v939, %v1006
    %v1023 = vadd.f32 %v940, %v1007
    %v1024 = vadd.f32 %v941, %v1008
    %v1025 = vadd.f32 %v942, %v1009
    %v1026 = vadd.f32 %v943, %v1010
    %v1027 = vadd.f32 %v944, %v1011
    %v1028 = vadd.f32 %v945, %v1012
    %v1029 = vadd.f32 %v946, %v1013
    %v1030 = vadd.f32 %v947, %v1014
    %v1031 = vadd.f32 %v948, %v1015
    %v1032 = vadd.f32 %v949, %v1016
    %v1033 = vadd.f32 %v950, %v1017
    %v1034 = vadd.f32 %v951, %v1018
    %v1035 = vadd.f32 %v952, %v1019
    %v1036 = vld [vmem:[%s1 + $0x46] sm:$0x1]
    %v1037 = vperm.slane %v1036, 0
    %v1038 = vmul.f32 %v521, %v1037
    %v1039 = vmul.f32 %v522, %v1037
    %v1040 = vmul.f32 %v523, %v1037
    %v1041 = vmul.f32 %v524, %v1037
    %v1042 = vmul.f32 %v525, %v1037
    %v1043 = vmul.f32 %v526, %v1037
    %v1044 = vmul.f32 %v527, %v1037
    %v1045 = vmul.f32 %v528, %v1037
    %v1046 = vmul.f32 %v529, %v1037
    %v1047 = vmul.f32 %v530, %v1037
    %v1048 = vmul.f32 %v531, %v1037
    %v1049 = vmul.f32 %v532, %v1037
    %v1050 = vmul.f32 %v533, %v1037
    %v1051 = vmul.f32 %v534, %v1037
    %v1052 = vmul.f32 %v535, %v1037
    %v1053 = vmul.f32 %v536, %v1037
    %v1054 = vmul.f32 %v652, %v1038
    %v1055 = vmul.f32 %v651, %v1039
    %v1056 = vmul.f32 %v650, %v1040
    %v1057 = vmul.f32 %v649, %v1041
    %v1058 = vmul.f32 %v648, %v1042
    %v1059 = vmul.f32 %v647, %v1043
    %v1060 = vmul.f32 %v646, %v1044
    %v1061 = vmul.f32 %v645, %v1045
    %v1062 = vmul.f32 %v644, %v1046
    %v1063 = vmul.f32 %v643, %v1047
    %v1064 = vmul.f32 %v642, %v1048
    %v1065 = vmul.f32 %v641, %v1049
    %v1066 = vmul.f32 %v640, %v1050
    %v1067 = vmul.f32 %v639, %v1051
    %v1068 = vmul.f32 %v638, %v1052
    %v1069 = vmul.f32 %v653, %v1053
    %v1070 = vadd.f32 %v1020, %v1054
    %v1071 = vadd.f32 %v1021, %v1055
    %v1072 = vadd.f32 %v1022, %v1056
    %v1073 = vadd.f32 %v1023, %v1057
    %v1074 = vadd.f32 %v1024, %v1058
    %v1075 = vadd.f32 %v1025, %v1059
    %v1076 = vadd.f32 %v1026, %v1060
    %v1077 = vadd.f32 %v1027, %v1061
    %v1078 = vadd.f32 %v1028, %v1062
    %v1079 = vadd.f32 %v1029, %v1063
    %v1080 = vadd.f32 %v1030, %v1064
    %v1081 = vadd.f32 %v1031, %v1065
    %v1082 = vadd.f32 %v1032, %v1066
    %v1083 = vadd.f32 %v1033, %v1067
    %v1084 = vadd.f32 %v1034, %v1068
    %v1085 = vadd.f32 %v1035, %v1069
    %v1086 = vld [vmem:[%s1 + $0x47] sm:$0x1]
    %v1087 = vperm.slane %v1086, 0
    %v1088 = vmul.f32 %v537, %v1087
    %v1089 = vmul.f32 %v538, %v1087
    %v1090 = vmul.f32 %v539, %v1087
    %v1091 = vmul.f32 %v540, %v1087
    %v1092 = vmul.f32 %v541, %v1087
    %v1093 = vmul.f32 %v542, %v1087
    %v1094 = vmul.f32 %v543, %v1087
    %v1095 = vmul.f32 %v544, %v1087
    %v1096 = vmul.f32 %v545, %v1087
    %v1097 = vmul.f32 %v546, %v1087
    %v1098 = vmul.f32 %v547, %v1087
    %v1099 = vmul.f32 %v548, %v1087
    %v1100 = vmul.f32 %v549, %v1087
    %v1101 = vmul.f32 %v550, %v1087
    %v1102 = vmul.f32 %v551, %v1087
    %v1103 = vmul.f32 %v552, %v1087
    %v1104 = vmul.f32 %v735, %v1088
    %v1105 = vmul.f32 %v734, %v1089
    %v1106 = vmul.f32 %v733, %v1090
    %v1107 = vmul.f32 %v732, %v1091
    %v1108 = vmul.f32 %v731, %v1092
    %v1109 = vmul.f32 %v730, %v1093
    %v1110 = vmul.f32 %v729, %v1094
    %v1111 = vmul.f32 %v728, %v1095
    %v1112 = vmul.f32 %v727, %v1096
    %v1113 = vmul.f32 %v726, %v1097
    %v1114 = vmul.f32 %v725, %v1098
    %v1115 = vmul.f32 %v724, %v1099
    %v1116 = vmul.f32 %v723, %v1100
    %v1117 = vmul.f32 %v722, %v1101
    %v1118 = vmul.f32 %v721, %v1102
    %v1119 = vmul.f32 %v736, %v1103
    %v1120 = vadd.f32 %v1070, %v1104
    %v1121 = vadd.f32 %v1071, %v1105
    %v1122 = vadd.f32 %v1072, %v1106
    %v1123 = vadd.f32 %v1073, %v1107
    %v1124 = vadd.f32 %v1074, %v1108
    %v1125 = vadd.f32 %v1075, %v1109
    %v1126 = vadd.f32 %v1076, %v1110
    %v1127 = vadd.f32 %v1077, %v1111
    %v1128 = vadd.f32 %v1078, %v1112
    %v1129 = vadd.f32 %v1079, %v1113
    %v1130 = vadd.f32 %v1080, %v1114
    %v1131 = vadd.f32 %v1081, %v1115
    %v1132 = vadd.f32 %v1082, %v1116
    %v1133 = vadd.f32 %v1083, %v1117
    %v1134 = vadd.f32 %v1084, %v1118
    %v1135 = vadd.f32 %v1085, %v1119
    %v1136 = vld [vmem:[%s1 + $0x48] sm:$0x1]
    %v1137 = vperm.slane %v1136, 0
    %v1138 = vmul.f32 %v569, %v1137
    %v1139 = vmul.f32 %v570, %v1137
    %v1140 = vmul.f32 %v571, %v1137
    %v1141 = vmul.f32 %v572, %v1137
    %v1142 = vmul.f32 %v573, %v1137
    %v1143 = vmul.f32 %v574, %v1137
    %v1144 = vmul.f32 %v575, %v1137
    %v1145 = vmul.f32 %v576, %v1137
    %v1146 = vmul.f32 %v577, %v1137
    %v1147 = vmul.f32 %v578, %v1137
    %v1148 = vmul.f32 %v579, %v1137
    %v1149 = vmul.f32 %v580, %v1137
    %v1150 = vmul.f32 %v581, %v1137
    %v1151 = vmul.f32 %v582, %v1137
    %v1152 = vmul.f32 %v583, %v1137
    %v1153 = vmul.f32 %v584, %v1137
    %v1154 = vmul.f32 %v818, %v1138
    %v1155 = vmul.f32 %v817, %v1139
    %v1156 = vmul.f32 %v816, %v1140
    %v1157 = vmul.f32 %v815, %v1141
    %v1158 = vmul.f32 %v814, %v1142
    %v1159 = vmul.f32 %v813, %v1143
    %v1160 = vmul.f32 %v812, %v1144
    %v1161 = vmul.f32 %v811, %v1145
    %v1162 = vmul.f32 %v810, %v1146
    %v1163 = vmul.f32 %v809, %v1147
    %v1164 = vmul.f32 %v808, %v1148
    %v1165 = vmul.f32 %v807, %v1149
    %v1166 = vmul.f32 %v806, %v1150
    %v1167 = vmul.f32 %v805, %v1151
    %v1168 = vmul.f32 %v804, %v1152
    %v1169 = vmul.f32 %v819, %v1153
    %v1170 = vadd.f32 %v1120, %v1154
    %v1171 = vadd.f32 %v1121, %v1155
    %v1172 = vadd.f32 %v1122, %v1156
    %v1173 = vadd.f32 %v1123, %v1157
    %v1174 = vadd.f32 %v1124, %v1158
    %v1175 = vadd.f32 %v1125, %v1159
    %v1176 = vadd.f32 %v1126, %v1160
    %v1177 = vadd.f32 %v1127, %v1161
    %v1178 = vadd.f32 %v1128, %v1162
    %v1179 = vadd.f32 %v1129, %v1163
    %v1180 = vadd.f32 %v1130, %v1164
    %v1181 = vadd.f32 %v1131, %v1165
    %v1182 = vadd.f32 %v1132, %v1166
    %v1183 = vadd.f32 %v1133, %v1167
    %v1184 = vadd.f32 %v1134, %v1168
    %v1185 = vadd.f32 %v1135, %v1169
    %v1186 = vld [vmem:[%s1 + $0x90] sm:$0xff]
    %v1187 = vld [vmem:[%s1 + $0x98] sm:$0xff]
    %v1188 = vld [vmem:[%s1 + $0xa0] sm:$0xff]
    %v1189 = vld [vmem:[%s1 + $0xa8] sm:$0xff]
    %v1190 = vld [vmem:[%s1 + $0xb0] sm:$0xff]
    %v1191 = vld [vmem:[%s1 + $0xb8] sm:$0xff]
    %v1192 = vld [vmem:[%s1 + $0xc0] sm:$0xff]
    %v1193 = vld [vmem:[%s1 + $0xc8] sm:$0xff]
    %v1194 = vld [vmem:[%s1 + $0xd0] sm:$0xff]
    %v1195 = vld [vmem:[%s1 + $0xd8] sm:$0xff]
    %v1196 = vld [vmem:[%s1 + $0xe0] sm:$0xff]
    %v1197 = vld [vmem:[%s1 + $0xe8] sm:$0xff]
    %v1198 = vld [vmem:[%s1 + $0xf0] sm:$0xff]
    %v1199 = vld [vmem:[%s1 + $0xf8] sm:$0xff]
    %v1200 = vld [vmem:[%s1 + $0x100] sm:$0xff]
    %v1201 = vld [vmem:[%s1 + $0x108] sm:$0xff]
    %v1202 = vld [vmem:[%s1 + $0x78] sm:$0x1]
    %v1203 = vperm.slane %v1202, 0
    %1204 = vmatpush.msra.mxu0 %v1201
    %1205 = vmatpush.msra.mxu0 %v1200
    %1206 = vmatpush.msra.mxu0 %v1199
    %1207 = vmatpush.msra.mxu0 %v1198
    %1208 = vmatpush.msra.mxu0 %v1197
    %1209 = vmatpush.msra.mxu0 %v1196
    %1210 = vmatpush.msra.mxu0 %v1195
    %1211 = vmatpush.msra.mxu0 %v1194
    %1212 = vmatpush.msra.mxu0 %v1193
    %1213 = vmatpush.msra.mxu0 %v1192
    %1214 = vmatpush.msra.mxu0 %v1191
    %1215 = vmatpush.msra.mxu0 %v1190
    %1216 = vmatpush.msra.mxu0 %v1189
    %1217 = vmatpush.msra.mxu0 %v1188
    %1218 = vmatpush.msra.mxu0 %v1187
    %1219 = vmatpush.msra.mxu0 %v1186
    %1220 = vmatmul.f32.gmra.mxu0 %v1170
    %v1221 = vpop.f32.mrf.mxu0
    %v1222 = vadd.f32 %v1203, %v1221
    %1223 = vmatmul.f32.gmra.mxu0 %v1171
    %v1224 = vpop.f32.mrf.mxu0
    %v1225 = vadd.f32 %v1203, %v1224
    %1226 = vmatmul.f32.gmra.mxu0 %v1172
    %v1227 = vpop.f32.mrf.mxu0
    %v1228 = vadd.f32 %v1203, %v1227
    %1229 = vmatmul.f32.gmra.mxu0 %v1173
    %v1230 = vpop.f32.mrf.mxu0
    %v1231 = vadd.f32 %v1203, %v1230
    %1232 = vmatmul.f32.gmra.mxu0 %v1174
    %v1233 = vpop.f32.mrf.mxu0
    %v1234 = vadd.f32 %v1203, %v1233
    %1235 = vmatmul.f32.gmra.mxu0 %v1175
    %v1236 = vpop.f32.mrf.mxu0
    %v1237 = vadd.f32 %v1203, %v1236
    %1238 = vmatmul.f32.gmra.mxu0 %v1176
    %v1239 = vpop.f32.mrf.mxu0
    %v1240 = vadd.f32 %v1203, %v1239
    %1241 = vmatmul.f32.gmra.mxu0 %v1177
    %v1242 = vpop.f32.mrf.mxu0
    %v1243 = vadd.f32 %v1203, %v1242
    %1244 = vmatmul.f32.gmra.mxu0 %v1178
    %v1245 = vpop.f32.mrf.mxu0
    %v1246 = vadd.f32 %v1203, %v1245
    %1247 = vmatmul.f32.gmra.mxu0 %v1179
    %v1248 = vpop.f32.mrf.mxu0
    %v1249 = vadd.f32 %v1203, %v1248
    %1250 = vmatmul.f32.gmra.mxu0 %v1180
    %v1251 = vpop.f32.mrf.mxu0
    %v1252 = vadd.f32 %v1203, %v1251
    %1253 = vmatmul.f32.gmra.mxu0 %v1181
    %v1254 = vpop.f32.mrf.mxu0
    %v1255 = vadd.f32 %v1203, %v1254
    %1256 = vmatmul.f32.gmra.mxu0 %v1182
    %v1257 = vpop.f32.mrf.mxu0
    %v1258 = vadd.f32 %v1203, %v1257
    %1259 = vmatmul.f32.gmra.mxu0 %v1183
    %v1260 = vpop.f32.mrf.mxu0
    %v1261 = vadd.f32 %v1203, %v1260
    %1262 = vmatmul.f32.gmra.mxu0 %v1184
    %v1263 = vpop.f32.mrf.mxu0
    %v1264 = vadd.f32 %v1203, %v1263
    %1265 = vmatmul.f32.gmra.mxu0 %v1185
    %v1266 = vpop.f32.mrf.mxu0
    %v1267 = vadd.f32 %v1203, %v1266
    %1268 = vdwg.mxu0
    %v1269 = vld [vmem:[%s1 + $0x80] sm:$0x1]
    %v1270 = vld [vmem:[%s1 + $0x88] sm:$0x1]
    %v1271 = vadd.f32 %v1222, %v1225
    %v1272 = vadd.f32 %v1271, %v1228
    %v1273 = vadd.f32 %v1272, %v1231
    %v1274 = vadd.f32 %v1273, %v1234
    %v1275 = vadd.f32 %v1274, %v1237
    %v1276 = vadd.f32 %v1275, %v1240
    %v1277 = vadd.f32 %v1276, %v1243
    %v1278 = vadd.f32 %v1277, %v1246
    %v1279 = vadd.f32 %v1278, %v1249
    %v1280 = vadd.f32 %v1279, %v1252
    %v1281 = vadd.f32 %v1280, %v1255
    %v1282 = vadd.f32 %v1281, %v1258
    %v1283 = vadd.f32 %v1282, %v1261
    %v1284 = vadd.f32 %v1283, %v1264
    %v1285 = vadd.f32 %v1284, %v1267
    %v1286 = vrot.slane %v1285, 4
    %v1287 = vadd.f32 %v1285, %v1286
    %v1288 = vrot.slane %v1287, 2
    %v1289 = vadd.f32 %v1287, %v1288
    %v1290 = vrot.slane %v1289, 1
    %v1291 = vadd.f32 %v1289, %v1290
    %v1292 = vmul.f32 %v1222, %v1222
    %v1293 = vmul.f32 %v1225, %v1225
    %v1294 = vmul.f32 %v1228, %v1228
    %v1295 = vmul.f32 %v1231, %v1231
    %v1296 = vmul.f32 %v1234, %v1234
    %v1297 = vmul.f32 %v1237, %v1237
    %v1298 = vmul.f32 %v1240, %v1240
    %v1299 = vmul.f32 %v1243, %v1243
    %v1300 = vmul.f32 %v1246, %v1246
    %v1301 = vmul.f32 %v1249, %v1249
    %v1302 = vmul.f32 %v1252, %v1252
    %v1303 = vmul.f32 %v1255, %v1255
    %v1304 = vmul.f32 %v1258, %v1258
    %v1305 = vmul.f32 %v1261, %v1261
    %v1306 = vmul.f32 %v1264, %v1264
    %v1307 = vmul.f32 %v1267, %v1267
    %v1308 = vadd.f32 %v1292, %v1293
    %v1309 = vadd.f32 %v1308, %v1294
    %v1310 = vadd.f32 %v1309, %v1295
    %v1311 = vadd.f32 %v1310, %v1296
    %v1312 = vadd.f32 %v1311, %v1297
    %v1313 = vadd.f32 %v1312, %v1298
    %v1314 = vadd.f32 %v1313, %v1299
    %v1315 = vadd.f32 %v1314, %v1300
    %v1316 = vadd.f32 %v1315, %v1301
    %v1317 = vadd.f32 %v1316, %v1302
    %v1318 = vadd.f32 %v1317, %v1303
    %v1319 = vadd.f32 %v1318, %v1304
    %v1320 = vadd.f32 %v1319, %v1305
    %v1321 = vadd.f32 %v1320, %v1306
    %v1322 = vadd.f32 %v1321, %v1307
    %v1323 = vrot.slane %v1322, 4
    %v1324 = vadd.f32 %v1322, %v1323
    %v1325 = vrot.slane %v1324, 2
    %v1326 = vadd.f32 %v1324, %v1325
    %v1327 = vrot.slane %v1326, 1
    %v1328 = vadd.f32 %v1326, %v1327
    %v1329 = vmul.f32 %v1291, 0.0078125
    %v1330 = vmul.f32 %v1328, 0.0078125
    %v1331 = vmul.f32 %v1329, %v1329
    %v1332 = vsub.f32 %v1330, %v1331
    %v1333 = vadd.f32 %v1332, 1e-05
    %v1334 = vrsqrt.pop %v1333
    %v1335 = vmul.f32 %v1334, %v1333
    %v1336 = vmul.f32 %v1335, %v1334
    %v1337 = vmul.f32 0.5, %v1336
    %v1338 = vsub.f32 1.5, %v1337
    %v1339 = vmul.f32 %v1334, %v1338
    %vm1340 = vweird.f32 %v1333
    %vm1341 = vweird.f32 %v1334
    %vm1342 = vmor %vm1340, %vm1341
    %v1343 = vsel %vm1342, %v1334, %v1339
    %v1344 = vmul.f32 %v1269, %v1343
    %v1345 = vmul.f32 %v1329, %v1344
    %v1346 = vsub.f32 %v1270, %v1345
    %v1347 = vperm.slane %v1344, 0
    %v1348 = vmul.f32 %v1222, %v1347
    %v1349 = vmul.f32 %v1225, %v1347
    %v1350 = vmul.f32 %v1228, %v1347
    %v1351 = vmul.f32 %v1231, %v1347
    %v1352 = vmul.f32 %v1234, %v1347
    %v1353 = vmul.f32 %v1237, %v1347
    %v1354 = vmul.f32 %v1240, %v1347
    %v1355 = vmul.f32 %v1243, %v1347
    %v1356 = vmul.f32 %v1246, %v1347
    %v1357 = vmul.f32 %v1249, %v1347
    %v1358 = vmul.f32 %v1252, %v1347
    %v1359 = vmul.f32 %v1255, %v1347
    %v1360 = vmul.f32 %v1258, %v1347
    %v1361 = vmul.f32 %v1261, %v1347
    %v1362 = vmul.f32 %v1264, %v1347
    %v1363 = vmul.f32 %v1267, %v1347
    %v1364 = vperm.slane %v1346, 0
    %v1365 = vadd.f32 %v1348, %v1364
    %v1366 = vadd.f32 %v1349, %v1364
    %v1367 = vadd.f32 %v1350, %v1364
    %v1368 = vadd.f32 %v1351, %v1364
    %v1369 = vadd.f32 %v1352, %v1364
    %v1370 = vadd.f32 %v1353, %v1364
    %v1371 = vadd.f32 %v1354, %v1364
    %v1372 = vadd.f32 %v1355, %v1364
    %v1373 = vadd.f32 %v1356, %v1364
    %v1374 = vadd.f32 %v1357, %v1364
    %v1375 = vadd.f32 %v1358, %v1364
    %v1376 = vadd.f32 %v1359, %v1364
    %v1377 = vadd.f32 %v1360, %v1364
    %v1378 = vadd.f32 %v1361, %v1364
    %v1379 = vadd.f32 %v1362, %v1364
    %v1380 = vadd.f32 %v1363, %v1364
    %v1381 = vmax.f32 %v1365, 0.0
    %v1382 = vmax.f32 %v1366, 0.0
    %v1383 = vmax.f32 %v1367, 0.0
    %v1384 = vmax.f32 %v1368, 0.0
    %v1385 = vmax.f32 %v1369, 0.0
    %v1386 = vmax.f32 %v1370, 0.0
    %v1387 = vmax.f32 %v1371, 0.0
    %v1388 = vmax.f32 %v1372, 0.0
    %v1389 = vmax.f32 %v1373, 0.0
    %v1390 = vmax.f32 %v1374, 0.0
    %v1391 = vmax.f32 %v1375, 0.0
    %v1392 = vmax.f32 %v1376, 0.0
    %v1393 = vmax.f32 %v1377, 0.0
    %v1394 = vmax.f32 %v1378, 0.0
    %v1395 = vmax.f32 %v1379, 0.0
    %v1396 = vmax.f32 %v1380, 0.0
    %v1397 = vld [vmem:[%s1 + $0x4d] sm:$0x1]
    %v1398 = vperm.slane %v1397, 0
    %v1399 = vmul.f32 %v1381, %v1398
    %v1400 = vmul.f32 %v1382, %v1398
    %v1401 = vmul.f32 %v1383, %v1398
    %v1402 = vmul.f32 %v1384, %v1398
    %v1403 = vmul.f32 %v1385, %v1398
    %v1404 = vmul.f32 %v1386, %v1398
    %v1405 = vmul.f32 %v1387, %v1398
    %v1406 = vmul.f32 %v1388, %v1398
    %v1407 = vmul.f32 %v1389, %v1398
    %v1408 = vmul.f32 %v1390, %v1398
    %v1409 = vmul.f32 %v1391, %v1398
    %v1410 = vmul.f32 %v1392, %v1398
    %v1411 = vmul.f32 %v1393, %v1398
    %v1412 = vmul.f32 %v1394, %v1398
    %v1413 = vmul.f32 %v1395, %v1398
    %v1414 = vmul.f32 %v1396, %v1398
    %v1415 = vld [vmem:[%s1 + $0x71] sm:$0x1]
    %v1416 = vperm.slane %v1415, 0
    %v1417 = vadd.f32 %v1399, %v1416
    %v1418 = vadd.f32 %v1400, %v1416
    %v1419 = vadd.f32 %v1401, %v1416
    %v1420 = vadd.f32 %v1402, %v1416
    %v1421 = vadd.f32 %v1403, %v1416
    %v1422 = vadd.f32 %v1404, %v1416
    %v1423 = vadd.f32 %v1405, %v1416
    %v1424 = vadd.f32 %v1406, %v1416
    %v1425 = vadd.f32 %v1407, %v1416
    %v1426 = vadd.f32 %v1408, %v1416
    %v1427 = vadd.f32 %v1409, %v1416
    %v1428 = vadd.f32 %v1410, %v1416
    %v1429 = vadd.f32 %v1411, %v1416
    %v1430 = vadd.f32 %v1412, %v1416
    %v1431 = vadd.f32 %v1413, %v1416
    %v1432 = vadd.f32 %v1414, %v1416
    %v1433 = vrot.slane %v1381, 3
    %v1434 = vrot.slane %v1382, 3
    %v1435 = vrot.slane %v1383, 3
    %v1436 = vrot.slane %v1384, 3
    %v1437 = vrot.slane %v1385, 3
    %v1438 = vrot.slane %v1386, 3
    %v1439 = vrot.slane %v1387, 3
    %v1440 = vrot.slane %v1388, 3
    %v1441 = vrot.slane %v1389, 3
    %v1442 = vrot.slane %v1390, 3
    %v1443 = vrot.slane %v1391, 3
    %v1444 = vrot.slane %v1392, 3
    %v1445 = vrot.slane %v1393, 3
    %v1446 = vrot.slane %v1394, 3
    %v1447 = vrot.slane %v1395, 3
    %v1448 = vrot.slane %v1396, 3
    %v1449 = vsel %vm637, %v1447, %v1448
    %v1450 = vsel %vm637, %v1446, %v1447
    %v1451 = vsel %vm637, %v1445, %v1446
    %v1452 = vsel %vm637, %v1444, %v1445
    %v1453 = vsel %vm637, %v1443, %v1444
    %v1454 = vsel %vm637, %v1442, %v1443
    %v1455 = vsel %vm637, %v1441, %v1442
    %v1456 = vsel %vm637, %v1440, %v1441
    %v1457 = vsel %vm637, %v1439, %v1440
    %v1458 = vsel %vm637, %v1438, %v1439
    %v1459 = vsel %vm637, %v1437, %v1438
    %v1460 = vsel %vm637, %v1436, %v1437
    %v1461 = vsel %vm637, %v1435, %v1436
    %v1462 = vsel %vm637, %v1434, %v1435
    %v1463 = vsel %vm637, %v1433, %v1434
    %v1464 = vsel %vm637, %v1448, %v1433
    %v1465 = vld [vmem:[%s1 + $0x49] sm:$0x1]
    %v1466 = vperm.slane %v1465, 0
    %v1467 = vmul.f32 %v377, %v1466
    %v1468 = vmul.f32 %v378, %v1466
    %v1469 = vmul.f32 %v379, %v1466
    %v1470 = vmul.f32 %v380, %v1466
    %v1471 = vmul.f32 %v381, %v1466
    %v1472 = vmul.f32 %v382, %v1466
    %v1473 = vmul.f32 %v383, %v1466
    %v1474 = vmul.f32 %v384, %v1466
    %v1475 = vmul.f32 %v385, %v1466
    %v1476 = vmul.f32 %v386, %v1466
    %v1477 = vmul.f32 %v387, %v1466
    %v1478 = vmul.f32 %v388, %v1466
    %v1479 = vmul.f32 %v389, %v1466
    %v1480 = vmul.f32 %v390, %v1466
    %v1481 = vmul.f32 %v391, %v1466
    %v1482 = vmul.f32 %v392, %v1466
    %v1483 = vmul.f32 %v1464, %v1467
    %v1484 = vmul.f32 %v1463, %v1468
    %v1485 = vmul.f32 %v1462, %v1469
    %v1486 = vmul.f32 %v1461, %v1470
    %v1487 = vmul.f32 %v1460, %v1471
    %v1488 = vmul.f32 %v1459, %v1472
    %v1489 = vmul.f32 %v1458, %v1473
    %v1490 = vmul.f32 %v1457, %v1474
    %v1491 = vmul.f32 %v1456, %v1475
    %v1492 = vmul.f32 %v1455, %v1476
    %v1493 = vmul.f32 %v1454, %v1477
    %v1494 = vmul.f32 %v1453, %v1478
    %v1495 = vmul.f32 %v1452, %v1479
    %v1496 = vmul.f32 %v1451, %v1480
    %v1497 = vmul.f32 %v1450, %v1481
    %v1498 = vmul.f32 %v1449, %v1482
    %v1499 = vadd.f32 %v1417, %v1483
    %v1500 = vadd.f32 %v1418, %v1484
    %v1501 = vadd.f32 %v1419, %v1485
    %v1502 = vadd.f32 %v1420, %v1486
    %v1503 = vadd.f32 %v1421, %v1487
    %v1504 = vadd.f32 %v1422, %v1488
    %v1505 = vadd.f32 %v1423, %v1489
    %v1506 = vadd.f32 %v1424, %v1490
    %v1507 = vadd.f32 %v1425, %v1491
    %v1508 = vadd.f32 %v1426, %v1492
    %v1509 = vadd.f32 %v1427, %v1493
    %v1510 = vadd.f32 %v1428, %v1494
    %v1511 = vadd.f32 %v1429, %v1495
    %v1512 = vadd.f32 %v1430, %v1496
    %v1513 = vadd.f32 %v1431, %v1497
    %v1514 = vadd.f32 %v1432, %v1498
    %v1515 = vrot.slane %v1381, 4
    %v1516 = vrot.slane %v1382, 4
    %v1517 = vrot.slane %v1383, 4
    %v1518 = vrot.slane %v1384, 4
    %v1519 = vrot.slane %v1385, 4
    %v1520 = vrot.slane %v1386, 4
    %v1521 = vrot.slane %v1387, 4
    %v1522 = vrot.slane %v1388, 4
    %v1523 = vrot.slane %v1389, 4
    %v1524 = vrot.slane %v1390, 4
    %v1525 = vrot.slane %v1391, 4
    %v1526 = vrot.slane %v1392, 4
    %v1527 = vrot.slane %v1393, 4
    %v1528 = vrot.slane %v1394, 4
    %v1529 = vrot.slane %v1395, 4
    %v1530 = vrot.slane %v1396, 4
    %v1531 = vsel %vm720, %v1529, %v1530
    %v1532 = vsel %vm720, %v1528, %v1529
    %v1533 = vsel %vm720, %v1527, %v1528
    %v1534 = vsel %vm720, %v1526, %v1527
    %v1535 = vsel %vm720, %v1525, %v1526
    %v1536 = vsel %vm720, %v1524, %v1525
    %v1537 = vsel %vm720, %v1523, %v1524
    %v1538 = vsel %vm720, %v1522, %v1523
    %v1539 = vsel %vm720, %v1521, %v1522
    %v1540 = vsel %vm720, %v1520, %v1521
    %v1541 = vsel %vm720, %v1519, %v1520
    %v1542 = vsel %vm720, %v1518, %v1519
    %v1543 = vsel %vm720, %v1517, %v1518
    %v1544 = vsel %vm720, %v1516, %v1517
    %v1545 = vsel %vm720, %v1515, %v1516
    %v1546 = vsel %vm720, %v1530, %v1515
    %v1547 = vld [vmem:[%s1 + $0x4a] sm:$0x1]
    %v1548 = vperm.slane %v1547, 0
    %v1549 = vmul.f32 %v393, %v1548
    %v1550 = vmul.f32 %v394, %v1548
    %v1551 = vmul.f32 %v395, %v1548
    %v1552 = vmul.f32 %v396, %v1548
    %v1553 = vmul.f32 %v397, %v1548
    %v1554 = vmul.f32 %v398, %v1548
    %v1555 = vmul.f32 %v399, %v1548
    %v1556 = vmul.f32 %v400, %v1548
    %v1557 = vmul.f32 %v401, %v1548
    %v1558 = vmul.f32 %v402, %v1548
    %v1559 = vmul.f32 %v403, %v1548
    %v1560 = vmul.f32 %v404, %v1548
    %v1561 = vmul.f32 %v405, %v1548
    %v1562 = vmul.f32 %v406, %v1548
    %v1563 = vmul.f32 %v407, %v1548
    %v1564 = vmul.f32 %v408, %v1548
    %v1565 = vmul.f32 %v1546, %v1549
    %v1566 = vmul.f32 %v1545, %v1550
    %v1567 = vmul.f32 %v1544, %v1551
    %v1568 = vmul.f32 %v1543, %v1552
    %v1569 = vmul.f32 %v1542, %v1553
    %v1570 = vmul.f32 %v1541, %v1554
    %v1571 = vmul.f32 %v1540, %v1555
    %v1572 = vmul.f32 %v1539, %v1556
    %v1573 = vmul.f32 %v1538, %v1557
    %v1574 = vmul.f32 %v1537, %v1558
    %v1575 = vmul.f32 %v1536, %v1559
    %v1576 = vmul.f32 %v1535, %v1560
    %v1577 = vmul.f32 %v1534, %v1561
    %v1578 = vmul.f32 %v1533, %v1562
    %v1579 = vmul.f32 %v1532, %v1563
    %v1580 = vmul.f32 %v1531, %v1564
    %v1581 = vadd.f32 %v1499, %v1565
    %v1582 = vadd.f32 %v1500, %v1566
    %v1583 = vadd.f32 %v1501, %v1567
    %v1584 = vadd.f32 %v1502, %v1568
    %v1585 = vadd.f32 %v1503, %v1569
    %v1586 = vadd.f32 %v1504, %v1570
    %v1587 = vadd.f32 %v1505, %v1571
    %v1588 = vadd.f32 %v1506, %v1572
    %v1589 = vadd.f32 %v1507, %v1573
    %v1590 = vadd.f32 %v1508, %v1574
    %v1591 = vadd.f32 %v1509, %v1575
    %v1592 = vadd.f32 %v1510, %v1576
    %v1593 = vadd.f32 %v1511, %v1577
    %v1594 = vadd.f32 %v1512, %v1578
    %v1595 = vadd.f32 %v1513, %v1579
    %v1596 = vadd.f32 %v1514, %v1580
    %v1597 = vrot.slane %v1381, 5
    %v1598 = vrot.slane %v1382, 5
    %v1599 = vrot.slane %v1383, 5
    %v1600 = vrot.slane %v1384, 5
    %v1601 = vrot.slane %v1385, 5
    %v1602 = vrot.slane %v1386, 5
    %v1603 = vrot.slane %v1387, 5
    %v1604 = vrot.slane %v1388, 5
    %v1605 = vrot.slane %v1389, 5
    %v1606 = vrot.slane %v1390, 5
    %v1607 = vrot.slane %v1391, 5
    %v1608 = vrot.slane %v1392, 5
    %v1609 = vrot.slane %v1393, 5
    %v1610 = vrot.slane %v1394, 5
    %v1611 = vrot.slane %v1395, 5
    %v1612 = vrot.slane %v1396, 5
    %v1613 = vsel %vm803, %v1611, %v1612
    %v1614 = vsel %vm803, %v1610, %v1611
    %v1615 = vsel %vm803, %v1609, %v1610
    %v1616 = vsel %vm803, %v1608, %v1609
    %v1617 = vsel %vm803, %v1607, %v1608
    %v1618 = vsel %vm803, %v1606, %v1607
    %v1619 = vsel %vm803, %v1605, %v1606
    %v1620 = vsel %vm803, %v1604, %v1605
    %v1621 = vsel %vm803, %v1603, %v1604
    %v1622 = vsel %vm803, %v1602, %v1603
    %v1623 = vsel %vm803, %v1601, %v1602
    %v1624 = vsel %vm803, %v1600, %v1601
    %v1625 = vsel %vm803, %v1599, %v1600
    %v1626 = vsel %vm803, %v1598, %v1599
    %v1627 = vsel %vm803, %v1597, %v1598
    %v1628 = vsel %vm803, %v1612, %v1597
    %v1629 = vld [vmem:[%s1 + $0x4b] sm:$0x1]
    %v1630 = vperm.slane %v1629, 0
    %v1631 = vmul.f32 %v441, %v1630
    %v1632 = vmul.f32 %v442, %v1630
    %v1633 = vmul.f32 %v443, %v1630
    %v1634 = vmul.f32 %v444, %v1630
    %v1635 = vmul.f32 %v445, %v1630
    %v1636 = vmul.f32 %v446, %v1630
    %v1637 = vmul.f32 %v447, %v1630
    %v1638 = vmul.f32 %v448, %v1630
    %v1639 = vmul.f32 %v449, %v1630
    %v1640 = vmul.f32 %v450, %v1630
    %v1641 = vmul.f32 %v451, %v1630
    %v1642 = vmul.f32 %v452, %v1630
    %v1643 = vmul.f32 %v453, %v1630
    %v1644 = vmul.f32 %v454, %v1630
    %v1645 = vmul.f32 %v455, %v1630
    %v1646 = vmul.f32 %v456, %v1630
    %v1647 = vmul.f32 %v1628, %v1631
    %v1648 = vmul.f32 %v1627, %v1632
    %v1649 = vmul.f32 %v1626, %v1633
    %v1650 = vmul.f32 %v1625, %v1634
    %v1651 = vmul.f32 %v1624, %v1635
    %v1652 = vmul.f32 %v1623, %v1636
    %v1653 = vmul.f32 %v1622, %v1637
    %v1654 = vmul.f32 %v1621, %v1638
    %v1655 = vmul.f32 %v1620, %v1639
    %v1656 = vmul.f32 %v1619, %v1640
    %v1657 = vmul.f32 %v1618, %v1641
    %v1658 = vmul.f32 %v1617, %v1642
    %v1659 = vmul.f32 %v1616, %v1643
    %v1660 = vmul.f32 %v1615, %v1644
    %v1661 = vmul.f32 %v1614, %v1645
    %v1662 = vmul.f32 %v1613, %v1646
    %v1663 = vadd.f32 %v1581, %v1647
    %v1664 = vadd.f32 %v1582, %v1648
    %v1665 = vadd.f32 %v1583, %v1649
    %v1666 = vadd.f32 %v1584, %v1650
    %v1667 = vadd.f32 %v1585, %v1651
    %v1668 = vadd.f32 %v1586, %v1652
    %v1669 = vadd.f32 %v1587, %v1653
    %v1670 = vadd.f32 %v1588, %v1654
    %v1671 = vadd.f32 %v1589, %v1655
    %v1672 = vadd.f32 %v1590, %v1656
    %v1673 = vadd.f32 %v1591, %v1657
    %v1674 = vadd.f32 %v1592, %v1658
    %v1675 = vadd.f32 %v1593, %v1659
    %v1676 = vadd.f32 %v1594, %v1660
    %v1677 = vadd.f32 %v1595, %v1661
    %v1678 = vadd.f32 %v1596, %v1662
    %v1679 = vrot.slane %v1381, 7
    %v1680 = vrot.slane %v1382, 7
    %v1681 = vrot.slane %v1383, 7
    %v1682 = vrot.slane %v1384, 7
    %v1683 = vrot.slane %v1385, 7
    %v1684 = vrot.slane %v1386, 7
    %v1685 = vrot.slane %v1387, 7
    %v1686 = vrot.slane %v1388, 7
    %v1687 = vrot.slane %v1389, 7
    %v1688 = vrot.slane %v1390, 7
    %v1689 = vrot.slane %v1391, 7
    %v1690 = vrot.slane %v1392, 7
    %v1691 = vrot.slane %v1393, 7
    %v1692 = vrot.slane %v1394, 7
    %v1693 = vrot.slane %v1395, 7
    %v1694 = vrot.slane %v1396, 7
    %v1695 = vsel %vm886, %v1693, %v1694
    %v1696 = vsel %vm886, %v1692, %v1693
    %v1697 = vsel %vm886, %v1691, %v1692
    %v1698 = vsel %vm886, %v1690, %v1691
    %v1699 = vsel %vm886, %v1689, %v1690
    %v1700 = vsel %vm886, %v1688, %v1689
    %v1701 = vsel %vm886, %v1687, %v1688
    %v1702 = vsel %vm886, %v1686, %v1687
    %v1703 = vsel %vm886, %v1685, %v1686
    %v1704 = vsel %vm886, %v1684, %v1685
    %v1705 = vsel %vm886, %v1683, %v1684
    %v1706 = vsel %vm886, %v1682, %v1683
    %v1707 = vsel %vm886, %v1681, %v1682
    %v1708 = vsel %vm886, %v1680, %v1681
    %v1709 = vsel %vm886, %v1679, %v1680
    %v1710 = vsel %vm886, %v1694, %v1679
    %v1711 = vld [vmem:[%s1 + $0x4c] sm:$0x1]
    %v1712 = vperm.slane %v1711, 0
    %v1713 = vmul.f32 %v457, %v1712
    %v1714 = vmul.f32 %v458, %v1712
    %v1715 = vmul.f32 %v459, %v1712
    %v1716 = vmul.f32 %v460, %v1712
    %v1717 = vmul.f32 %v461, %v1712
    %v1718 = vmul.f32 %v462, %v1712
    %v1719 = vmul.f32 %v463, %v1712
    %v1720 = vmul.f32 %v464, %v1712
    %v1721 = vmul.f32 %v465, %v1712
    %v1722 = vmul.f32 %v466, %v1712
    %v1723 = vmul.f32 %v467, %v1712
    %v1724 = vmul.f32 %v468, %v1712
    %v1725 = vmul.f32 %v469, %v1712
    %v1726 = vmul.f32 %v470, %v1712
    %v1727 = vmul.f32 %v471, %v1712
    %v1728 = vmul.f32 %v472, %v1712
    %v1729 = vmul.f32 %v1710, %v1713
    %v1730 = vmul.f32 %v1709, %v1714
    %v1731 = vmul.f32 %v1708, %v1715
    %v1732 = vmul.f32 %v1707, %v1716
    %v1733 = vmul.f32 %v1706, %v1717
    %v1734 = vmul.f32 %v1705, %v1718
    %v1735 = vmul.f32 %v1704, %v1719
    %v1736 = vmul.f32 %v1703, %v1720
    %v1737 = vmul.f32 %v1702, %v1721
    %v1738 = vmul.f32 %v1701, %v1722
    %v1739 = vmul.f32 %v1700, %v1723
    %v1740 = vmul.f32 %v1699, %v1724
    %v1741 = vmul.f32 %v1698, %v1725
    %v1742 = vmul.f32 %v1697, %v1726
    %v1743 = vmul.f32 %v1696, %v1727
    %v1744 = vmul.f32 %v1695, %v1728
    %v1745 = vadd.f32 %v1663, %v1729
    %v1746 = vadd.f32 %v1664, %v1730
    %v1747 = vadd.f32 %v1665, %v1731
    %v1748 = vadd.f32 %v1666, %v1732
    %v1749 = vadd.f32 %v1667, %v1733
    %v1750 = vadd.f32 %v1668, %v1734
    %v1751 = vadd.f32 %v1669, %v1735
    %v1752 = vadd.f32 %v1670, %v1736
    %v1753 = vadd.f32 %v1671, %v1737
    %v1754 = vadd.f32 %v1672, %v1738
    %v1755 = vadd.f32 %v1673, %v1739
    %v1756 = vadd.f32 %v1674, %v1740
    %v1757 = vadd.f32 %v1675, %v1741
    %v1758 = vadd.f32 %v1676, %v1742
    %v1759 = vadd.f32 %v1677, %v1743
    %v1760 = vadd.f32 %v1678, %v1744
    %v1761 = vrot.slane %v1381, 1
    %v1762 = vrot.slane %v1382, 1
    %v1763 = vrot.slane %v1383, 1
    %v1764 = vrot.slane %v1384, 1
    %v1765 = vrot.slane %v1385, 1
    %v1766 = vrot.slane %v1386, 1
    %v1767 = vrot.slane %v1387, 1
    %v1768 = vrot.slane %v1388, 1
    %v1769 = vrot.slane %v1389, 1
    %v1770 = vrot.slane %v1390, 1
    %v1771 = vrot.slane %v1391, 1
    %v1772 = vrot.slane %v1392, 1
    %v1773 = vrot.slane %v1393, 1
    %v1774 = vrot.slane %v1394, 1
    %v1775 = vrot.slane %v1395, 1
    %v1776 = vrot.slane %v1396, 1
    %v1777 = vsel %vm969, %v1775, %v1776
    %v1778 = vsel %vm969, %v1774, %v1775
    %v1779 = vsel %vm969, %v1773, %v1774
    %v1780 = vsel %vm969, %v1772, %v1773
    %v1781 = vsel %vm969, %v1771, %v1772
    %v1782 = vsel %vm969, %v1770, %v1771
    %v1783 = vsel %vm969, %v1769, %v1770
    %v1784 = vsel %vm969, %v1768, %v1769
    %v1785 = vsel %vm969, %v1767, %v1768
    %v1786 = vsel %vm969, %v1766, %v1767
    %v1787 = vsel %vm969, %v1765, %v1766
    %v1788 = vsel %vm969, %v1764, %v1765
    %v1789 = vsel %vm969, %v1763, %v1764
    %v1790 = vsel %vm969, %v1762, %v1763
    %v1791 = vsel %vm969, %v1761, %v1762
    %v1792 = vsel %vm969, %v1776, %v1761
    %v1793 = vld [vmem:[%s1 + $0x4e] sm:$0x1]
    %v1794 = vperm.slane %v1793, 0
    %v1795 = vmul.f32 %v473, %v1794
    %v1796 = vmul.f32 %v474, %v1794
    %v1797 = vmul.f32 %v475, %v1794
    %v1798 = vmul.f32 %v476, %v1794
    %v1799 = vmul.f32 %v477, %v1794
    %v1800 = vmul.f32 %v478, %v1794
    %v1801 = vmul.f32 %v479, %v1794
    %v1802 = vmul.f32 %v480, %v1794
    %v1803 = vmul.f32 %v481, %v1794
    %v1804 = vmul.f32 %v482, %v1794
    %v1805 = vmul.f32 %v483, %v1794
    %v1806 = vmul.f32 %v484, %v1794
    %v1807 = vmul.f32 %v485, %v1794
    %v1808 = vmul.f32 %v486, %v1794
    %v1809 = vmul.f32 %v487, %v1794
    %v1810 = vmul.f32 %v488, %v1794
    %v1811 = vmul.f32 %v1791, %v1795
    %v1812 = vmul.f32 %v1790, %v1796
    %v1813 = vmul.f32 %v1789, %v1797
    %v1814 = vmul.f32 %v1788, %v1798
    %v1815 = vmul.f32 %v1787, %v1799
    %v1816 = vmul.f32 %v1786, %v1800
    %v1817 = vmul.f32 %v1785, %v1801
    %v1818 = vmul.f32 %v1784, %v1802
    %v1819 = vmul.f32 %v1783, %v1803
    %v1820 = vmul.f32 %v1782, %v1804
    %v1821 = vmul.f32 %v1781, %v1805
    %v1822 = vmul.f32 %v1780, %v1806
    %v1823 = vmul.f32 %v1779, %v1807
    %v1824 = vmul.f32 %v1778, %v1808
    %v1825 = vmul.f32 %v1777, %v1809
    %v1826 = vmul.f32 %v1792, %v1810
    %v1827 = vadd.f32 %v1745, %v1811
    %v1828 = vadd.f32 %v1746, %v1812
    %v1829 = vadd.f32 %v1747, %v1813
    %v1830 = vadd.f32 %v1748, %v1814
    %v1831 = vadd.f32 %v1749, %v1815
    %v1832 = vadd.f32 %v1750, %v1816
    %v1833 = vadd.f32 %v1751, %v1817
    %v1834 = vadd.f32 %v1752, %v1818
    %v1835 = vadd.f32 %v1753, %v1819
    %v1836 = vadd.f32 %v1754, %v1820
    %v1837 = vadd.f32 %v1755, %v1821
    %v1838 = vadd.f32 %v1756, %v1822
    %v1839 = vadd.f32 %v1757, %v1823
    %v1840 = vadd.f32 %v1758, %v1824
    %v1841 = vadd.f32 %v1759, %v1825
    %v1842 = vadd.f32 %v1760, %v1826
    %v1843 = vld [vmem:[%s1 + $0x4f] sm:$0x1]
    %v1844 = vperm.slane %v1843, 0
    %v1845 = vmul.f32 %v521, %v1844
    %v1846 = vmul.f32 %v522, %v1844
    %v1847 = vmul.f32 %v523, %v1844
    %v1848 = vmul.f32 %v524, %v1844
    %v1849 = vmul.f32 %v525, %v1844
    %v1850 = vmul.f32 %v526, %v1844
    %v1851 = vmul.f32 %v527, %v1844
    %v1852 = vmul.f32 %v528, %v1844
    %v1853 = vmul.f32 %v529, %v1844
    %v1854 = vmul.f32 %v530, %v1844
    %v1855 = vmul.f32 %v531, %v1844
    %v1856 = vmul.f32 %v532, %v1844
    %v1857 = vmul.f32 %v533, %v1844
    %v1858 = vmul.f32 %v534, %v1844
    %v1859 = vmul.f32 %v535, %v1844
    %v1860 = vmul.f32 %v536, %v1844
    %v1861 = vmul.f32 %v1463, %v1845
    %v1862 = vmul.f32 %v1462, %v1846
    %v1863 = vmul.f32 %v1461, %v1847
    %v1864 = vmul.f32 %v1460, %v1848
    %v1865 = vmul.f32 %v1459, %v1849
    %v1866 = vmul.f32 %v1458, %v1850
    %v1867 = vmul.f32 %v1457, %v1851
    %v1868 = vmul.f32 %v1456, %v1852
    %v1869 = vmul.f32 %v1455, %v1853
    %v1870 = vmul.f32 %v1454, %v1854
    %v1871 = vmul.f32 %v1453, %v1855
    %v1872 = vmul.f32 %v1452, %v1856
    %v1873 = vmul.f32 %v1451, %v1857
    %v1874 = vmul.f32 %v1450, %v1858
    %v1875 = vmul.f32 %v1449, %v1859
    %v1876 = vmul.f32 %v1464, %v1860
    %v1877 = vadd.f32 %v1827, %v1861
    %v1878 = vadd.f32 %v1828, %v1862
    %v1879 = vadd.f32 %v1829, %v1863
    %v1880 = vadd.f32 %v1830, %v1864
    %v1881 = vadd.f32 %v1831, %v1865
    %v1882 = vadd.f32 %v1832, %v1866
    %v1883 = vadd.f32 %v1833, %v1867
    %v1884 = vadd.f32 %v1834, %v1868
    %v1885 = vadd.f32 %v1835, %v1869
    %v1886 = vadd.f32 %v1836, %v1870
    %v1887 = vadd.f32 %v1837, %v1871
    %v1888 = vadd.f32 %v1838, %v1872
    %v1889 = vadd.f32 %v1839, %v1873
    %v1890 = vadd.f32 %v1840, %v1874
    %v1891 = vadd.f32 %v1841, %v1875
    %v1892 = vadd.f32 %v1842, %v1876
    %v1893 = vld [vmem:[%s1 + $0x50] sm:$0x1]
    %v1894 = vperm.slane %v1893, 0
    %v1895 = vmul.f32 %v537, %v1894
    %v1896 = vmul.f32 %v538, %v1894
    %v1897 = vmul.f32 %v539, %v1894
    %v1898 = vmul.f32 %v540, %v1894
    %v1899 = vmul.f32 %v541, %v1894
    %v1900 = vmul.f32 %v542, %v1894
    %v1901 = vmul.f32 %v543, %v1894
    %v1902 = vmul.f32 %v544, %v1894
    %v1903 = vmul.f32 %v545, %v1894
    %v1904 = vmul.f32 %v546, %v1894
    %v1905 = vmul.f32 %v547, %v1894
    %v1906 = vmul.f32 %v548, %v1894
    %v1907 = vmul.f32 %v549, %v1894
    %v1908 = vmul.f32 %v550, %v1894
    %v1909 = vmul.f32 %v551, %v1894
    %v1910 = vmul.f32 %v552, %v1894
    %v1911 = vmul.f32 %v1545, %v1895
    %v1912 = vmul.f32 %v1544, %v1896
    %v1913 = vmul.f32 %v1543, %v1897
    %v1914 = vmul.f32 %v1542, %v1898
    %v1915 = vmul.f32 %v1541, %v1899
    %v1916 = vmul.f32 %v1540, %v1900
    %v1917 = vmul.f32 %v1539, %v1901
    %v1918 = vmul.f32 %v1538, %v1902
    %v1919 = vmul.f32 %v1537, %v1903
    %v1920 = vmul.f32 %v1536, %v1904
    %v1921 = vmul.f32 %v1535, %v1905
    %v1922 = vmul.f32 %v1534, %v1906
    %v1923 = vmul.f32 %v1533, %v1907
    %v1924 = vmul.f32 %v1532, %v1908
    %v1925 = vmul.f32 %v1531, %v1909
    %v1926 = vmul.f32 %v1546, %v1910
    %v1927 = vadd.f32 %v1877, %v1911
    %v1928 = vadd.f32 %v1878, %v1912
    %v1929 = vadd.f32 %v1879, %v1913
    %v1930 = vadd.f32 %v1880, %v1914
    %v1931 = vadd.f32 %v1881, %v1915
    %v1932 = vadd.f32 %v1882, %v1916
    %v1933 = vadd.f32 %v1883, %v1917
    %v1934 = vadd.f32 %v1884, %v1918
    %v1935 = vadd.f32 %v1885, %v1919
    %v1936 = vadd.f32 %v1886, %v1920
    %v1937 = vadd.f32 %v1887, %v1921
    %v1938 = vadd.f32 %v1888, %v1922
    %v1939 = vadd.f32 %v1889, %v1923
    %v1940 = vadd.f32 %v1890, %v1924
    %v1941 = vadd.f32 %v1891, %v1925
    %v1942 = vadd.f32 %v1892, %v1926
    %v1943 = vld [vmem:[%s1 + $0x51] sm:$0x1]
    %v1944 = vperm.slane %v1943, 0
    %v1945 = vmul.f32 %v569, %v1944
    %v1946 = vmul.f32 %v570, %v1944
    %v1947 = vmul.f32 %v571, %v1944
    %v1948 = vmul.f32 %v572, %v1944
    %v1949 = vmul.f32 %v573, %v1944
    %v1950 = vmul.f32 %v574, %v1944
    %v1951 = vmul.f32 %v575, %v1944
    %v1952 = vmul.f32 %v576, %v1944
    %v1953 = vmul.f32 %v577, %v1944
    %v1954 = vmul.f32 %v578, %v1944
    %v1955 = vmul.f32 %v579, %v1944
    %v1956 = vmul.f32 %v580, %v1944
    %v1957 = vmul.f32 %v581, %v1944
    %v1958 = vmul.f32 %v582, %v1944
    %v1959 = vmul.f32 %v583, %v1944
    %v1960 = vmul.f32 %v584, %v1944
    %v1961 = vmul.f32 %v1627, %v1945
    %v1962 = vmul.f32 %v1626, %v1946
    %v1963 = vmul.f32 %v1625, %v1947
    %v1964 = vmul.f32 %v1624, %v1948
    %v1965 = vmul.f32 %v1623, %v1949
    %v1966 = vmul.f32 %v1622, %v1950
    %v1967 = vmul.f32 %v1621, %v1951
    %v1968 = vmul.f32 %v1620, %v1952
    %v1969 = vmul.f32 %v1619, %v1953
    %v1970 = vmul.f32 %v1618, %v1954
    %v1971 = vmul.f32 %v1617, %v1955
    %v1972 = vmul.f32 %v1616, %v1956
    %v1973 = vmul.f32 %v1615, %v1957
    %v1974 = vmul.f32 %v1614, %v1958
    %v1975 = vmul.f32 %v1613, %v1959
    %v1976 = vmul.f32 %v1628, %v1960
    %v1977 = vadd.f32 %v1927, %v1961
    %v1978 = vadd.f32 %v1928, %v1962
    %v1979 = vadd.f32 %v1929, %v1963
    %v1980 = vadd.f32 %v1930, %v1964
    %v1981 = vadd.f32 %v1931, %v1965
    %v1982 = vadd.f32 %v1932, %v1966
    %v1983 = vadd.f32 %v1933, %v1967
    %v1984 = vadd.f32 %v1934, %v1968
    %v1985 = vadd.f32 %v1935, %v1969
    %v1986 = vadd.f32 %v1936, %v1970
    %v1987 = vadd.f32 %v1937, %v1971
    %v1988 = vadd.f32 %v1938, %v1972
    %v1989 = vadd.f32 %v1939, %v1973
    %v1990 = vadd.f32 %v1940, %v1974
    %v1991 = vadd.f32 %v1941, %v1975
    %v1992 = vadd.f32 %v1942, %v1976
    %v1993 = vld [vmem:[%s1 + $0x110] sm:$0xff]
    %v1994 = vld [vmem:[%s1 + $0x118] sm:$0xff]
    %v1995 = vld [vmem:[%s1 + $0x120] sm:$0xff]
    %v1996 = vld [vmem:[%s1 + $0x128] sm:$0xff]
    %v1997 = vld [vmem:[%s1 + $0x130] sm:$0xff]
    %v1998 = vld [vmem:[%s1 + $0x138] sm:$0xff]
    %v1999 = vld [vmem:[%s1 + $0x140] sm:$0xff]
    %v2000 = vld [vmem:[%s1 + $0x148] sm:$0xff]
    %v2001 = vld [vmem:[%s1 + $0x150] sm:$0xff]
    %v2002 = vld [vmem:[%s1 + $0x158] sm:$0xff]
    %v2003 = vld [vmem:[%s1 + $0x160] sm:$0xff]
    %v2004 = vld [vmem:[%s1 + $0x168] sm:$0xff]
    %v2005 = vld [vmem:[%s1 + $0x170] sm:$0xff]
    %v2006 = vld [vmem:[%s1 + $0x178] sm:$0xff]
    %v2007 = vld [vmem:[%s1 + $0x180] sm:$0xff]
    %v2008 = vld [vmem:[%s1 + $0x188] sm:$0xff]
    %v2009 = vld [vmem:[%s1 + $0x79] sm:$0x1]
    %v2010 = vperm.slane %v2009, 0
    %2011 = vmatpush.msra.mxu0 %v2008
    %2012 = vmatpush.msra.mxu0 %v2007
    %2013 = vmatpush.msra.mxu0 %v2006
    %2014 = vmatpush.msra.mxu0 %v2005
    %2015 = vmatpush.msra.mxu0 %v2004
    %2016 = vmatpush.msra.mxu0 %v2003
    %2017 = vmatpush.msra.mxu0 %v2002
    %2018 = vmatpush.msra.mxu0 %v2001
    %2019 = vmatpush.msra.mxu0 %v2000
    %2020 = vmatpush.msra.mxu0 %v1999
    %2021 = vmatpush.msra.mxu0 %v1998
    %2022 = vmatpush.msra.mxu0 %v1997
    %2023 = vmatpush.msra.mxu0 %v1996
    %2024 = vmatpush.msra.mxu0 %v1995
    %2025 = vmatpush.msra.mxu0 %v1994
    %2026 = vmatpush.msra.mxu0 %v1993
    %2027 = vmatmul.f32.gmra.mxu0 %v1977
    %v2028 = vpop.f32.mrf.mxu0
    %v2029 = vadd.f32 %v2010, %v2028
    %2030 = vmatmul.f32.gmra.mxu0 %v1978
    %v2031 = vpop.f32.mrf.mxu0
    %v2032 = vadd.f32 %v2010, %v2031
    %2033 = vmatmul.f32.gmra.mxu0 %v1979
    %v2034 = vpop.f32.mrf.mxu0
    %v2035 = vadd.f32 %v2010, %v2034
    %2036 = vmatmul.f32.gmra.mxu0 %v1980
    %v2037 = vpop.f32.mrf.mxu0
    %v2038 = vadd.f32 %v2010, %v2037
    %2039 = vmatmul.f32.gmra.mxu0 %v1981
    %v2040 = vpop.f32.mrf.mxu0
    %v2041 = vadd.f32 %v2010, %v2040
    %2042 = vmatmul.f32.gmra.mxu0 %v1982
    %v2043 = vpop.f32.mrf.mxu0
    %v2044 = vadd.f32 %v2010, %v2043
    %2045 = vmatmul.f32.gmra.mxu0 %v1983
    %v2046 = vpop.f32.mrf.mxu0
    %v2047 = vadd.f32 %v2010, %v2046
    %2048 = vmatmul.f32.gmra.mxu0 %v1984
    %v2049 = vpop.f32.mrf.mxu0
    %v2050 = vadd.f32 %v2010, %v2049
    %2051 = vmatmul.f32.gmra.mxu0 %v1985
    %v2052 = vpop.f32.mrf.mxu0
    %v2053 = vadd.f32 %v2010, %v2052
    %2054 = vmatmul.f32.gmra.mxu0 %v1986
    %v2055 = vpop.f32.mrf.mxu0
    %v2056 = vadd.f32 %v2010, %v2055
    %2057 = vmatmul.f32.gmra.mxu0 %v1987
    %v2058 = vpop.f32.mrf.mxu0
    %v2059 = vadd.f32 %v2010, %v2058
    %2060 = vmatmul.f32.gmra.mxu0 %v1988
    %v2061 = vpop.f32.mrf.mxu0
    %v2062 = vadd.f32 %v2010, %v2061
    %2063 = vmatmul.f32.gmra.mxu0 %v1989
    %v2064 = vpop.f32.mrf.mxu0
    %v2065 = vadd.f32 %v2010, %v2064
    %2066 = vmatmul.f32.gmra.mxu0 %v1990
    %v2067 = vpop.f32.mrf.mxu0
    %v2068 = vadd.f32 %v2010, %v2067
    %2069 = vmatmul.f32.gmra.mxu0 %v1991
    %v2070 = vpop.f32.mrf.mxu0
    %v2071 = vadd.f32 %v2010, %v2070
    %2072 = vmatmul.f32.gmra.mxu0 %v1992
    %v2073 = vpop.f32.mrf.mxu0
    %v2074 = vadd.f32 %v2010, %v2073
    %2075 = vdwg.mxu0
    %v2076 = vld [vmem:[%s1 + $0x81] sm:$0x1]
    %v2077 = vld [vmem:[%s1 + $0x89] sm:$0x1]
    %v2078 = vadd.f32 %v2029, %v2032
    %v2079 = vadd.f32 %v2078, %v2035
    %v2080 = vadd.f32 %v2079, %v2038
    %v2081 = vadd.f32 %v2080, %v2041
    %v2082 = vadd.f32 %v2081, %v2044
    %v2083 = vadd.f32 %v2082, %v2047
    %v2084 = vadd.f32 %v2083, %v2050
    %v2085 = vadd.f32 %v2084, %v2053
    %v2086 = vadd.f32 %v2085, %v2056
    %v2087 = vadd.f32 %v2086, %v2059
    %v2088 = vadd.f32 %v2087, %v2062
    %v2089 = vadd.f32 %v2088, %v2065
    %v2090 = vadd.f32 %v2089, %v2068
    %v2091 = vadd.f32 %v2090, %v2071
    %v2092 = vadd.f32 %v2091, %v2074
    %v2093 = vrot.slane %v2092, 4
    %v2094 = vadd.f32 %v2092, %v2093
    %v2095 = vrot.slane %v2094, 2
    %v2096 = vadd.f32 %v2094, %v2095
    %v2097 = vrot.slane %v2096, 1
    %v2098 = vadd.f32 %v2096, %v2097
    %v2099 = vmul.f32 %v2029, %v2029
    %v2100 = vmul.f32 %v2032, %v2032
    %v2101 = vmul.f32 %v2035, %v2035
    %v2102 = vmul.f32 %v2038, %v2038
    %v2103 = vmul.f32 %v2041, %v2041
    %v2104 = vmul.f32 %v2044, %v2044
    %v2105 = vmul.f32 %v2047, %v2047
    %v2106 = vmul.f32 %v2050, %v2050
    %v2107 = vmul.f32 %v2053, %v2053
    %v2108 = vmul.f32 %v2056, %v2056
    %v2109 = vmul.f32 %v2059, %v2059
    %v2110 = vmul.f32 %v2062, %v2062
    %v2111 = vmul.f32 %v2065, %v2065
    %v2112 = vmul.f32 %v2068, %v2068
    %v2113 = vmul.f32 %v2071, %v2071
    %v2114 = vmul.f32 %v2074, %v2074
    %v2115 = vadd.f32 %v2099, %v2100
    %v2116 = vadd.f32 %v2115, %v2101
    %v2117 = vadd.f32 %v2116, %v2102
    %v2118 = vadd.f32 %v2117, %v2103
    %v2119 = vadd.f32 %v2118, %v2104
    %v2120 = vadd.f32 %v2119, %v2105
    %v2121 = vadd.f32 %v2120, %v2106
    %v2122 = vadd.f32 %v2121, %v2107
    %v2123 = vadd.f32 %v2122, %v2108
    %v2124 = vadd.f32 %v2123, %v2109
    %v2125 = vadd.f32 %v2124, %v2110
    %v2126 = vadd.f32 %v2125, %v2111
    %v2127 = vadd.f32 %v2126, %v2112
    %v2128 = vadd.f32 %v2127, %v2113
    %v2129 = vadd.f32 %v2128, %v2114
    %v2130 = vrot.slane %v2129, 4
    %v2131 = vadd.f32 %v2129, %v2130
    %v2132 = vrot.slane %v2131, 2
    %v2133 = vadd.f32 %v2131, %v2132
    %v2134 = vrot.slane %v2133, 1
    %v2135 = vadd.f32 %v2133, %v2134
    %v2136 = vmul.f32 %v2098, 0.0078125
    %v2137 = vmul.f32 %v2135, 0.0078125
    %v2138 = vmul.f32 %v2136, %v2136
    %v2139 = vsub.f32 %v2137, %v2138
    %v2140 = vadd.f32 %v2139, 1e-05
    %v2141 = vrsqrt.pop %v2140
    %v2142 = vmul.f32 %v2141, %v2140
    %v2143 = vmul.f32 %v2142, %v2141
    %v2144 = vmul.f32 0.5, %v2143
    %v2145 = vsub.f32 1.5, %v2144
    %v2146 = vmul.f32 %v2141, %v2145
    %vm2147 = vweird.f32 %v2140
    %vm2148 = vweird.f32 %v2141
    %vm2149 = vmor %vm2147, %vm2148
    %v2150 = vsel %vm2149, %v2141, %v2146
    %v2151 = vmul.f32 %v2076, %v2150
    %v2152 = vmul.f32 %v2136, %v2151
    %v2153 = vsub.f32 %v2077, %v2152
    %v2154 = vperm.slane %v2151, 0
    %v2155 = vmul.f32 %v2029, %v2154
    %v2156 = vmul.f32 %v2032, %v2154
    %v2157 = vmul.f32 %v2035, %v2154
    %v2158 = vmul.f32 %v2038, %v2154
    %v2159 = vmul.f32 %v2041, %v2154
    %v2160 = vmul.f32 %v2044, %v2154
    %v2161 = vmul.f32 %v2047, %v2154
    %v2162 = vmul.f32 %v2050, %v2154
    %v2163 = vmul.f32 %v2053, %v2154
    %v2164 = vmul.f32 %v2056, %v2154
    %v2165 = vmul.f32 %v2059, %v2154
    %v2166 = vmul.f32 %v2062, %v2154
    %v2167 = vmul.f32 %v2065, %v2154
    %v2168 = vmul.f32 %v2068, %v2154
    %v2169 = vmul.f32 %v2071, %v2154
    %v2170 = vmul.f32 %v2074, %v2154
    %v2171 = vperm.slane %v2153, 0
    %v2172 = vadd.f32 %v2155, %v2171
    %v2173 = vadd.f32 %v2156, %v2171
    %v2174 = vadd.f32 %v2157, %v2171
    %v2175 = vadd.f32 %v2158, %v2171
    %v2176 = vadd.f32 %v2159, %v2171
    %v2177 = vadd.f32 %v2160, %v2171
    %v2178 = vadd.f32 %v2161, %v2171
    %v2179 = vadd.f32 %v2162, %v2171
    %v2180 = vadd.f32 %v2163, %v2171
    %v2181 = vadd.f32 %v2164, %v2171
    %v2182 = vadd.f32 %v2165, %v2171
    %v2183 = vadd.f32 %v2166, %v2171
    %v2184 = vadd.f32 %v2167, %v2171
    %v2185 = vadd.f32 %v2168, %v2171
    %v2186 = vadd.f32 %v2169, %v2171
    %v2187 = vadd.f32 %v2170, %v2171
    %v2188 = vmax.f32 %v2172, 0.0
    %v2189 = vmax.f32 %v2173, 0.0
    %v2190 = vmax.f32 %v2174, 0.0
    %v2191 = vmax.f32 %v2175, 0.0
    %v2192 = vmax.f32 %v2176, 0.0
    %v2193 = vmax.f32 %v2177, 0.0
    %v2194 = vmax.f32 %v2178, 0.0
    %v2195 = vmax.f32 %v2179, 0.0
    %v2196 = vmax.f32 %v2180, 0.0
    %v2197 = vmax.f32 %v2181, 0.0
    %v2198 = vmax.f32 %v2182, 0.0
    %v2199 = vmax.f32 %v2183, 0.0
    %v2200 = vmax.f32 %v2184, 0.0
    %v2201 = vmax.f32 %v2185, 0.0
    %v2202 = vmax.f32 %v2186, 0.0
    %v2203 = vmax.f32 %v2187, 0.0
    %v2204 = vld [vmem:[%s1 + $0x56] sm:$0x1]
    %v2205 = vperm.slane %v2204, 0
    %v2206 = vmul.f32 %v2188, %v2205
    %v2207 = vmul.f32 %v2189, %v2205
    %v2208 = vmul.f32 %v2190, %v2205
    %v2209 = vmul.f32 %v2191, %v2205
    %v2210 = vmul.f32 %v2192, %v2205
    %v2211 = vmul.f32 %v2193, %v2205
    %v2212 = vmul.f32 %v2194, %v2205
    %v2213 = vmul.f32 %v2195, %v2205
    %v2214 = vmul.f32 %v2196, %v2205
    %v2215 = vmul.f32 %v2197, %v2205
    %v2216 = vmul.f32 %v2198, %v2205
    %v2217 = vmul.f32 %v2199, %v2205
    %v2218 = vmul.f32 %v2200, %v2205
    %v2219 = vmul.f32 %v2201, %v2205
    %v2220 = vmul.f32 %v2202, %v2205
    %v2221 = vmul.f32 %v2203, %v2205
    %v2222 = vld [vmem:[%s1 + $0x72] sm:$0x1]
    %v2223 = vperm.slane %v2222, 0
    %v2224 = vadd.f32 %v2206, %v2223
    %v2225 = vadd.f32 %v2207, %v2223
    %v2226 = vadd.f32 %v2208, %v2223
    %v2227 = vadd.f32 %v2209, %v2223
    %v2228 = vadd.f32 %v2210, %v2223
    %v2229 = vadd.f32 %v2211, %v2223
    %v2230 = vadd.f32 %v2212, %v2223
    %v2231 = vadd.f32 %v2213, %v2223
    %v2232 = vadd.f32 %v2214, %v2223
    %v2233 = vadd.f32 %v2215, %v2223
    %v2234 = vadd.f32 %v2216, %v2223
    %v2235 = vadd.f32 %v2217, %v2223
    %v2236 = vadd.f32 %v2218, %v2223
    %v2237 = vadd.f32 %v2219, %v2223
    %v2238 = vadd.f32 %v2220, %v2223
    %v2239 = vadd.f32 %v2221, %v2223
    %v2240 = vrot.slane %v2188, 3
    %v2241 = vrot.slane %v2189, 3
    %v2242 = vrot.slane %v2190, 3
    %v2243 = vrot.slane %v2191, 3
    %v2244 = vrot.slane %v2192, 3
    %v2245 = vrot.slane %v2193, 3
    %v2246 = vrot.slane %v2194, 3
    %v2247 = vrot.slane %v2195, 3
    %v2248 = vrot.slane %v2196, 3
    %v2249 = vrot.slane %v2197, 3
    %v2250 = vrot.slane %v2198, 3
    %v2251 = vrot.slane %v2199, 3
    %v2252 = vrot.slane %v2200, 3
    %v2253 = vrot.slane %v2201, 3
    %v2254 = vrot.slane %v2202, 3
    %v2255 = vrot.slane %v2203, 3
    %v2256 = vsel %vm637, %v2254, %v2255
    %v2257 = vsel %vm637, %v2253, %v2254
    %v2258 = vsel %vm637, %v2252, %v2253
    %v2259 = vsel %vm637, %v2251, %v2252
    %v2260 = vsel %vm637, %v2250, %v2251
    %v2261 = vsel %vm637, %v2249, %v2250
    %v2262 = vsel %vm637, %v2248, %v2249
    %v2263 = vsel %vm637, %v2247, %v2248
    %v2264 = vsel %vm637, %v2246, %v2247
    %v2265 = vsel %vm637, %v2245, %v2246
    %v2266 = vsel %vm637, %v2244, %v2245
    %v2267 = vsel %vm637, %v2243, %v2244
    %v2268 = vsel %vm637, %v2242, %v2243
    %v2269 = vsel %vm637, %v2241, %v2242
    %v2270 = vsel %vm637, %v2240, %v2241
    %v2271 = vsel %vm637, %v2255, %v2240
    %v2272 = vld [vmem:[%s1 + $0x52] sm:$0x1]
    %v2273 = vperm.slane %v2272, 0
    %v2274 = vmul.f32 %v377, %v2273
    %v2275 = vmul.f32 %v378, %v2273
    %v2276 = vmul.f32 %v379, %v2273
    %v2277 = vmul.f32 %v380, %v2273
    %v2278 = vmul.f32 %v381, %v2273
    %v2279 = vmul.f32 %v382, %v2273
    %v2280 = vmul.f32 %v383, %v2273
    %v2281 = vmul.f32 %v384, %v2273
    %v2282 = vmul.f32 %v385, %v2273
    %v2283 = vmul.f32 %v386, %v2273
    %v2284 = vmul.f32 %v387, %v2273
    %v2285 = vmul.f32 %v388, %v2273
    %v2286 = vmul.f32 %v389, %v2273
    %v2287 = vmul.f32 %v390, %v2273
    %v2288 = vmul.f32 %v391, %v2273
    %v2289 = vmul.f32 %v392, %v2273
    %v2290 = vmul.f32 %v2271, %v2274
    %v2291 = vmul.f32 %v2270, %v2275
    %v2292 = vmul.f32 %v2269, %v2276
    %v2293 = vmul.f32 %v2268, %v2277
    %v2294 = vmul.f32 %v2267, %v2278
    %v2295 = vmul.f32 %v2266, %v2279
    %v2296 = vmul.f32 %v2265, %v2280
    %v2297 = vmul.f32 %v2264, %v2281
    %v2298 = vmul.f32 %v2263, %v2282
    %v2299 = vmul.f32 %v2262, %v2283
    %v2300 = vmul.f32 %v2261, %v2284
    %v2301 = vmul.f32 %v2260, %v2285
    %v2302 = vmul.f32 %v2259, %v2286
    %v2303 = vmul.f32 %v2258, %v2287
    %v2304 = vmul.f32 %v2257, %v2288
    %v2305 = vmul.f32 %v2256, %v2289
    %v2306 = vadd.f32 %v2224, %v2290
    %v2307 = vadd.f32 %v2225, %v2291
    %v2308 = vadd.f32 %v2226, %v2292
    %v2309 = vadd.f32 %v2227, %v2293
    %v2310 = vadd.f32 %v2228, %v2294
    %v2311 = vadd.f32 %v2229, %v2295
    %v2312 = vadd.f32 %v2230, %v2296
    %v2313 = vadd.f32 %v2231, %v2297
    %v2314 = vadd.f32 %v2232, %v2298
    %v2315 = vadd.f32 %v2233, %v2299
    %v2316 = vadd.f32 %v2234, %v2300
    %v2317 = vadd.f32 %v2235, %v2301
    %v2318 = vadd.f32 %v2236, %v2302
    %v2319 = vadd.f32 %v2237, %v2303
    %v2320 = vadd.f32 %v2238, %v2304
    %v2321 = vadd.f32 %v2239, %v2305
    %v2322 = vrot.slane %v2188, 4
    %v2323 = vrot.slane %v2189, 4
    %v2324 = vrot.slane %v2190, 4
    %v2325 = vrot.slane %v2191, 4
    %v2326 = vrot.slane %v2192, 4
    %v2327 = vrot.slane %v2193, 4
    %v2328 = vrot.slane %v2194, 4
    %v2329 = vrot.slane %v2195, 4
    %v2330 = vrot.slane %v2196, 4
    %v2331 = vrot.slane %v2197, 4
    %v2332 = vrot.slane %v2198, 4
    %v2333 = vrot.slane %v2199, 4
    %v2334 = vrot.slane %v2200, 4
    %v2335 = vrot.slane %v2201, 4
    %v2336 = vrot.slane %v2202, 4
    %v2337 = vrot.slane %v2203, 4
    %v2338 = vsel %vm720, %v2336, %v2337
    %v2339 = vsel %vm720, %v2335, %v2336
    %v2340 = vsel %vm720, %v2334, %v2335
    %v2341 = vsel %vm720, %v2333, %v2334
    %v2342 = vsel %vm720, %v2332, %v2333
    %v2343 = vsel %vm720, %v2331, %v2332
    %v2344 = vsel %vm720, %v2330, %v2331
    %v2345 = vsel %vm720, %v2329, %v2330
    %v2346 = vsel %vm720, %v2328, %v2329
    %v2347 = vsel %vm720, %v2327, %v2328
    %v2348 = vsel %vm720, %v2326, %v2327
    %v2349 = vsel %vm720, %v2325, %v2326
    %v2350 = vsel %vm720, %v2324, %v2325
    %v2351 = vsel %vm720, %v2323, %v2324
    %v2352 = vsel %vm720, %v2322, %v2323
    %v2353 = vsel %vm720, %v2337, %v2322
    %v2354 = vld [vmem:[%s1 + $0x53] sm:$0x1]
    %v2355 = vperm.slane %v2354, 0
    %v2356 = vmul.f32 %v393, %v2355
    %v2357 = vmul.f32 %v394, %v2355
    %v2358 = vmul.f32 %v395, %v2355
    %v2359 = vmul.f32 %v396, %v2355
    %v2360 = vmul.f32 %v397, %v2355
    %v2361 = vmul.f32 %v398, %v2355
    %v2362 = vmul.f32 %v399, %v2355
    %v2363 = vmul.f32 %v400, %v2355
    %v2364 = vmul.f32 %v401, %v2355
    %v2365 = vmul.f32 %v402, %v2355
    %v2366 = vmul.f32 %v403, %v2355
    %v2367 = vmul.f32 %v404, %v2355
    %v2368 = vmul.f32 %v405, %v2355
    %v2369 = vmul.f32 %v406, %v2355
    %v2370 = vmul.f32 %v407, %v2355
    %v2371 = vmul.f32 %v408, %v2355
    %v2372 = vmul.f32 %v2353, %v2356
    %v2373 = vmul.f32 %v2352, %v2357
    %v2374 = vmul.f32 %v2351, %v2358
    %v2375 = vmul.f32 %v2350, %v2359
    %v2376 = vmul.f32 %v2349, %v2360
    %v2377 = vmul.f32 %v2348, %v2361
    %v2378 = vmul.f32 %v2347, %v2362
    %v2379 = vmul.f32 %v2346, %v2363
    %v2380 = vmul.f32 %v2345, %v2364
    %v2381 = vmul.f32 %v2344, %v2365
    %v2382 = vmul.f32 %v2343, %v2366
    %v2383 = vmul.f32 %v2342, %v2367
    %v2384 = vmul.f32 %v2341, %v2368
    %v2385 = vmul.f32 %v2340, %v2369
    %v2386 = vmul.f32 %v2339, %v2370
    %v2387 = vmul.f32 %v2338, %v2371
    %v2388 = vadd.f32 %v2306, %v2372
    %v2389 = vadd.f32 %v2307, %v2373
    %v2390 = vadd.f32 %v2308, %v2374
    %v2391 = vadd.f32 %v2309, %v2375
    %v2392 = vadd.f32 %v2310, %v2376
    %v2393 = vadd.f32 %v2311, %v2377
    %v2394 = vadd.f32 %v2312, %v2378
    %v2395 = vadd.f32 %v2313, %v2379
    %v2396 = vadd.f32 %v2314, %v2380
    %v2397 = vadd.f32 %v2315, %v2381
    %v2398 = vadd.f32 %v2316, %v2382
    %v2399 = vadd.f32 %v2317, %v2383
    %v2400 = vadd.f32 %v2318, %v2384
    %v2401 = vadd.f32 %v2319, %v2385
    %v2402 = vadd.f32 %v2320, %v2386
    %v2403 = vadd.f32 %v2321, %v2387
    %v2404 = vrot.slane %v2188, 5
    %v2405 = vrot.slane %v2189, 5
    %v2406 = vrot.slane %v2190, 5
    %v2407 = vrot.slane %v2191, 5
    %v2408 = vrot.slane %v2192, 5
    %v2409 = vrot.slane %v2193, 5
    %v2410 = vrot.slane %v2194, 5
    %v2411 = vrot.slane %v2195, 5
    %v2412 = vrot.slane %v2196, 5
    %v2413 = vrot.slane %v2197, 5
    %v2414 = vrot.slane %v2198, 5
    %v2415 = vrot.slane %v2199, 5
    %v2416 = vrot.slane %v2200, 5
    %v2417 = vrot.slane %v2201, 5
    %v2418 = vrot.slane %v2202, 5
    %v2419 = vrot.slane %v2203, 5
    %v2420 = vsel %vm803, %v2418, %v2419
    %v2421 = vsel %vm803, %v2417, %v2418
    %v2422 = vsel %vm803, %v2416, %v2417
    %v2423 = vsel %vm803, %v2415, %v2416
    %v2424 = vsel %vm803, %v2414, %v2415
    %v2425 = vsel %vm803, %v2413, %v2414
    %v2426 = vsel %vm803, %v2412, %v2413
    %v2427 = vsel %vm803, %v2411, %v2412
    %v2428 = vsel %vm803, %v2410, %v2411
    %v2429 = vsel %vm803, %v2409, %v2410
    %v2430 = vsel %vm803, %v2408, %v2409
    %v2431 = vsel %vm803, %v2407, %v2408
    %v2432 = vsel %vm803, %v2406, %v2407
    %v2433 = vsel %vm803, %v2405, %v2406
    %v2434 = vsel %vm803, %v2404, %v2405
    %v2435 = vsel %vm803, %v2419, %v2404
    %v2436 = vld [vmem:[%s1 + $0x54] sm:$0x1]
    %v2437 = vperm.slane %v2436, 0
    %v2438 = vmul.f32 %v441, %v2437
    %v2439 = vmul.f32 %v442, %v2437
    %v2440 = vmul.f32 %v443, %v2437
    %v2441 = vmul.f32 %v444, %v2437
    %v2442 = vmul.f32 %v445, %v2437
    %v2443 = vmul.f32 %v446, %v2437
    %v2444 = vmul.f32 %v447, %v2437
    %v2445 = vmul.f32 %v448, %v2437
    %v2446 = vmul.f32 %v449, %v2437
    %v2447 = vmul.f32 %v450, %v2437
    %v2448 = vmul.f32 %v451, %v2437
    %v2449 = vmul.f32 %v452, %v2437
    %v2450 = vmul.f32 %v453, %v2437
    %v2451 = vmul.f32 %v454, %v2437
    %v2452 = vmul.f32 %v455, %v2437
    %v2453 = vmul.f32 %v456, %v2437
    %v2454 = vmul.f32 %v2435, %v2438
    %v2455 = vmul.f32 %v2434, %v2439
    %v2456 = vmul.f32 %v2433, %v2440
    %v2457 = vmul.f32 %v2432, %v2441
    %v2458 = vmul.f32 %v2431, %v2442
    %v2459 = vmul.f32 %v2430, %v2443
    %v2460 = vmul.f32 %v2429, %v2444
    %v2461 = vmul.f32 %v2428, %v2445
    %v2462 = vmul.f32 %v2427, %v2446
    %v2463 = vmul.f32 %v2426, %v2447
    %v2464 = vmul.f32 %v2425, %v2448
    %v2465 = vmul.f32 %v2424, %v2449
    %v2466 = vmul.f32 %v2423, %v2450
    %v2467 = vmul.f32 %v2422, %v2451
    %v2468 = vmul.f32 %v2421, %v2452
    %v2469 = vmul.f32 %v2420, %v2453
    %v2470 = vadd.f32 %v2388, %v2454
    %v2471 = vadd.f32 %v2389, %v2455
    %v2472 = vadd.f32 %v2390, %v2456
    %v2473 = vadd.f32 %v2391, %v2457
    %v2474 = vadd.f32 %v2392, %v2458
    %v2475 = vadd.f32 %v2393, %v2459
    %v2476 = vadd.f32 %v2394, %v2460
    %v2477 = vadd.f32 %v2395, %v2461
    %v2478 = vadd.f32 %v2396, %v2462
    %v2479 = vadd.f32 %v2397, %v2463
    %v2480 = vadd.f32 %v2398, %v2464
    %v2481 = vadd.f32 %v2399, %v2465
    %v2482 = vadd.f32 %v2400, %v2466
    %v2483 = vadd.f32 %v2401, %v2467
    %v2484 = vadd.f32 %v2402, %v2468
    %v2485 = vadd.f32 %v2403, %v2469
    %v2486 = vrot.slane %v2188, 7
    %v2487 = vrot.slane %v2189, 7
    %v2488 = vrot.slane %v2190, 7
    %v2489 = vrot.slane %v2191, 7
    %v2490 = vrot.slane %v2192, 7
    %v2491 = vrot.slane %v2193, 7
    %v2492 = vrot.slane %v2194, 7
    %v2493 = vrot.slane %v2195, 7
    %v2494 = vrot.slane %v2196, 7
    %v2495 = vrot.slane %v2197, 7
    %v2496 = vrot.slane %v2198, 7
    %v2497 = vrot.slane %v2199, 7
    %v2498 = vrot.slane %v2200, 7
    %v2499 = vrot.slane %v2201, 7
    %v2500 = vrot.slane %v2202, 7
    %v2501 = vrot.slane %v2203, 7
    %v2502 = vsel %vm886, %v2500, %v2501
    %v2503 = vsel %vm886, %v2499, %v2500
    %v2504 = vsel %vm886, %v2498, %v2499
    %v2505 = vsel %vm886, %v2497, %v2498
    %v2506 = vsel %vm886, %v2496, %v2497
    %v2507 = vsel %vm886, %v2495, %v2496
    %v2508 = vsel %vm886, %v2494, %v2495
    %v2509 = vsel %vm886, %v2493, %v2494
    %v2510 = vsel %vm886, %v2492, %v2493
    %v2511 = vsel %vm886, %v2491, %v2492
    %v2512 = vsel %vm886, %v2490, %v2491
    %v2513 = vsel %vm886, %v2489, %v2490
    %v2514 = vsel %vm886, %v2488, %v2489
    %v2515 = vsel %vm886, %v2487, %v2488
    %v2516 = vsel %vm886, %v2486, %v2487
    %v2517 = vsel %vm886, %v2501, %v2486
    %v2518 = vld [vmem:[%s1 + $0x55] sm:$0x1]
    %v2519 = vperm.slane %v2518, 0
    %v2520 = vmul.f32 %v457, %v2519
    %v2521 = vmul.f32 %v458, %v2519
    %v2522 = vmul.f32 %v459, %v2519
    %v2523 = vmul.f32 %v460, %v2519
    %v2524 = vmul.f32 %v461, %v2519
    %v2525 = vmul.f32 %v462, %v2519
    %v2526 = vmul.f32 %v463, %v2519
    %v2527 = vmul.f32 %v464, %v2519
    %v2528 = vmul.f32 %v465, %v2519
    %v2529 = vmul.f32 %v466, %v2519
    %v2530 = vmul.f32 %v467, %v2519
    %v2531 = vmul.f32 %v468, %v2519
    %v2532 = vmul.f32 %v469, %v2519
    %v2533 = vmul.f32 %v470, %v2519
    %v2534 = vmul.f32 %v471, %v2519
    %v2535 = vmul.f32 %v472, %v2519
    %v2536 = vmul.f32 %v2517, %v2520
    %v2537 = vmul.f32 %v2516, %v2521
    %v2538 = vmul.f32 %v2515, %v2522
    %v2539 = vmul.f32 %v2514, %v2523
    %v2540 = vmul.f32 %v2513, %v2524
    %v2541 = vmul.f32 %v2512, %v2525
    %v2542 = vmul.f32 %v2511, %v2526
    %v2543 = vmul.f32 %v2510, %v2527
    %v2544 = vmul.f32 %v2509, %v2528
    %v2545 = vmul.f32 %v2508, %v2529
    %v2546 = vmul.f32 %v2507, %v2530
    %v2547 = vmul.f32 %v2506, %v2531
    %v2548 = vmul.f32 %v2505, %v2532
    %v2549 = vmul.f32 %v2504, %v2533
    %v2550 = vmul.f32 %v2503, %v2534
    %v2551 = vmul.f32 %v2502, %v2535
    %v2552 = vadd.f32 %v2470, %v2536
    %v2553 = vadd.f32 %v2471, %v2537
    %v2554 = vadd.f32 %v2472, %v2538
    %v2555 = vadd.f32 %v2473, %v2539
    %v2556 = vadd.f32 %v2474, %v2540
    %v2557 = vadd.f32 %v2475, %v2541
    %v2558 = vadd.f32 %v2476, %v2542
    %v2559 = vadd.f32 %v2477, %v2543
    %v2560 = vadd.f32 %v2478, %v2544
    %v2561 = vadd.f32 %v2479, %v2545
    %v2562 = vadd.f32 %v2480, %v2546
    %v2563 = vadd.f32 %v2481, %v2547
    %v2564 = vadd.f32 %v2482, %v2548
    %v2565 = vadd.f32 %v2483, %v2549
    %v2566 = vadd.f32 %v2484, %v2550
    %v2567 = vadd.f32 %v2485, %v2551
    %v2568 = vrot.slane %v2188, 1
    %v2569 = vrot.slane %v2189, 1
    %v2570 = vrot.slane %v2190, 1
    %v2571 = vrot.slane %v2191, 1
    %v2572 = vrot.slane %v2192, 1
    %v2573 = vrot.slane %v2193, 1
    %v2574 = vrot.slane %v2194, 1
    %v2575 = vrot.slane %v2195, 1
    %v2576 = vrot.slane %v2196, 1
    %v2577 = vrot.slane %v2197, 1
    %v2578 = vrot.slane %v2198, 1
    %v2579 = vrot.slane %v2199, 1
    %v2580 = vrot.slane %v2200, 1
    %v2581 = vrot.slane %v2201, 1
    %v2582 = vrot.slane %v2202, 1
    %v2583 = vrot.slane %v2203, 1
    %v2584 = vsel %vm969, %v2582, %v2583
    %v2585 = vsel %vm969, %v2581, %v2582
    %v2586 = vsel %vm969, %v2580, %v2581
    %v2587 = vsel %vm969, %v2579, %v2580
    %v2588 = vsel %vm969, %v2578, %v2579
    %v2589 = vsel %vm969, %v2577, %v2578
    %v2590 = vsel %vm969, %v2576, %v2577
    %v2591 = vsel %vm969, %v2575, %v2576
    %v2592 = vsel %vm969, %v2574, %v2575
    %v2593 = vsel %vm969, %v2573, %v2574
    %v2594 = vsel %vm969, %v2572, %v2573
    %v2595 = vsel %vm969, %v2571, %v2572
    %v2596 = vsel %vm969, %v2570, %v2571
    %v2597 = vsel %vm969, %v2569, %v2570
    %v2598 = vsel %vm969, %v2568, %v2569
    %v2599 = vsel %vm969, %v2583, %v2568
    %v2600 = vld [vmem:[%s1 + $0x57] sm:$0x1]
    %v2601 = vperm.slane %v2600, 0
    %v2602 = vmul.f32 %v473, %v2601
    %v2603 = vmul.f32 %v474, %v2601
    %v2604 = vmul.f32 %v475, %v2601
    %v2605 = vmul.f32 %v476, %v2601
    %v2606 = vmul.f32 %v477, %v2601
    %v2607 = vmul.f32 %v478, %v2601
    %v2608 = vmul.f32 %v479, %v2601
    %v2609 = vmul.f32 %v480, %v2601
    %v2610 = vmul.f32 %v481, %v2601
    %v2611 = vmul.f32 %v482, %v2601
    %v2612 = vmul.f32 %v483, %v2601
    %v2613 = vmul.f32 %v484, %v2601
    %v2614 = vmul.f32 %v485, %v2601
    %v2615 = vmul.f32 %v486, %v2601
    %v2616 = vmul.f32 %v487, %v2601
    %v2617 = vmul.f32 %v488, %v2601
    %v2618 = vmul.f32 %v2598, %v2602
    %v2619 = vmul.f32 %v2597, %v2603
    %v2620 = vmul.f32 %v2596, %v2604
    %v2621 = vmul.f32 %v2595, %v2605
    %v2622 = vmul.f32 %v2594, %v2606
    %v2623 = vmul.f32 %v2593, %v2607
    %v2624 = vmul.f32 %v2592, %v2608
    %v2625 = vmul.f32 %v2591, %v2609
    %v2626 = vmul.f32 %v2590, %v2610
    %v2627 = vmul.f32 %v2589, %v2611
    %v2628 = vmul.f32 %v2588, %v2612
    %v2629 = vmul.f32 %v2587, %v2613
    %v2630 = vmul.f32 %v2586, %v2614
    %v2631 = vmul.f32 %v2585, %v2615
    %v2632 = vmul.f32 %v2584, %v2616
    %v2633 = vmul.f32 %v2599, %v2617
    %v2634 = vadd.f32 %v2552, %v2618
    %v2635 = vadd.f32 %v2553, %v2619
    %v2636 = vadd.f32 %v2554, %v2620
    %v2637 = vadd.f32 %v2555, %v2621
    %v2638 = vadd.f32 %v2556, %v2622
    %v2639 = vadd.f32 %v2557, %v2623
    %v2640 = vadd.f32 %v2558, %v2624
    %v2641 = vadd.f32 %v2559, %v2625
    %v2642 = vadd.f32 %v2560, %v2626
    %v2643 = vadd.f32 %v2561, %v2627
    %v2644 = vadd.f32 %v2562, %v2628
    %v2645 = vadd.f32 %v2563, %v2629
    %v2646 = vadd.f32 %v2564, %v2630
    %v2647 = vadd.f32 %v2565, %v2631
    %v2648 = vadd.f32 %v2566, %v2632
    %v2649 = vadd.f32 %v2567, %v2633
    %v2650 = vld [vmem:[%s1 + $0x58] sm:$0x1]
    %v2651 = vperm.slane %v2650, 0
    %v2652 = vmul.f32 %v521, %v2651
    %v2653 = vmul.f32 %v522, %v2651
    %v2654 = vmul.f32 %v523, %v2651
    %v2655 = vmul.f32 %v524, %v2651
    %v2656 = vmul.f32 %v525, %v2651
    %v2657 = vmul.f32 %v526, %v2651
    %v2658 = vmul.f32 %v527, %v2651
    %v2659 = vmul.f32 %v528, %v2651
    %v2660 = vmul.f32 %v529, %v2651
    %v2661 = vmul.f32 %v530, %v2651
    %v2662 = vmul.f32 %v531, %v2651
    %v2663 = vmul.f32 %v532, %v2651
    %v2664 = vmul.f32 %v533, %v2651
    %v2665 = vmul.f32 %v534, %v2651
    %v2666 = vmul.f32 %v535, %v2651
    %v2667 = vmul.f32 %v536, %v2651
    %v2668 = vmul.f32 %v2270, %v2652
    %v2669 = vmul.f32 %v2269, %v2653
    %v2670 = vmul.f32 %v2268, %v2654
    %v2671 = vmul.f32 %v2267, %v2655
    %v2672 = vmul.f32 %v2266, %v2656
    %v2673 = vmul.f32 %v2265, %v2657
    %v2674 = vmul.f32 %v2264, %v2658
    %v2675 = vmul.f32 %v2263, %v2659
    %v2676 = vmul.f32 %v2262, %v2660
    %v2677 = vmul.f32 %v2261, %v2661
    %v2678 = vmul.f32 %v2260, %v2662
    %v2679 = vmul.f32 %v2259, %v2663
    %v2680 = vmul.f32 %v2258, %v2664
    %v2681 = vmul.f32 %v2257, %v2665
    %v2682 = vmul.f32 %v2256, %v2666
    %v2683 = vmul.f32 %v2271, %v2667
    %v2684 = vadd.f32 %v2634, %v2668
    %v2685 = vadd.f32 %v2635, %v2669
    %v2686 = vadd.f32 %v2636, %v2670
    %v2687 = vadd.f32 %v2637, %v2671
    %v2688 = vadd.f32 %v2638, %v2672
    %v2689 = vadd.f32 %v2639, %v2673
    %v2690 = vadd.f32 %v2640, %v2674
    %v2691 = vadd.f32 %v2641, %v2675
    %v2692 = vadd.f32 %v2642, %v2676
    %v2693 = vadd.f32 %v2643, %v2677
    %v2694 = vadd.f32 %v2644, %v2678
    %v2695 = vadd.f32 %v2645, %v2679
    %v2696 = vadd.f32 %v2646, %v2680
    %v2697 = vadd.f32 %v2647, %v2681
    %v2698 = vadd.f32 %v2648, %v2682
    %v2699 = vadd.f32 %v2649, %v2683
    %v2700 = vld [vmem:[%s1 + $0x59] sm:$0x1]
    %v2701 = vperm.slane %v2700, 0
    %v2702 = vmul.f32 %v537, %v2701
    %v2703 = vmul.f32 %v538, %v2701
    %v2704 = vmul.f32 %v539, %v2701
    %v2705 = vmul.f32 %v540, %v2701
    %v2706 = vmul.f32 %v541, %v2701
    %v2707 = vmul.f32 %v542, %v2701
    %v2708 = vmul.f32 %v543, %v2701
    %v2709 = vmul.f32 %v544, %v2701
    %v2710 = vmul.f32 %v545, %v2701
    %v2711 = vmul.f32 %v546, %v2701
    %v2712 = vmul.f32 %v547, %v2701
    %v2713 = vmul.f32 %v548, %v2701
    %v2714 = vmul.f32 %v549, %v2701
    %v2715 = vmul.f32 %v550, %v2701
    %v2716 = vmul.f32 %v551, %v2701
    %v2717 = vmul.f32 %v552, %v2701
    %v2718 = vmul.f32 %v2352, %v2702
    %v2719 = vmul.f32 %v2351, %v2703
    %v2720 = vmul.f32 %v2350, %v2704
    %v2721 = vmul.f32 %v2349, %v2705
    %v2722 = vmul.f32 %v2348, %v2706
    %v2723 = vmul.f32 %v2347, %v2707
    %v2724 = vmul.f32 %v2346, %v2708
    %v2725 = vmul.f32 %v2345, %v2709
    %v2726 = vmul.f32 %v2344, %v2710
    %v2727 = vmul.f32 %v2343, %v2711
    %v2728 = vmul.f32 %v2342, %v2712
    %v2729 = vmul.f32 %v2341, %v2713
    %v2730 = vmul.f32 %v2340, %v2714
    %v2731 = vmul.f32 %v2339, %v2715
    %v2732 = vmul.f32 %v2338, %v2716
    %v2733 = vmul.f32 %v2353, %v2717
    %v2734 = vadd.f32 %v2684, %v2718
    %v2735 = vadd.f32 %v2685, %v2719
    %v2736 = vadd.f32 %v2686, %v2720
    %v2737 = vadd.f32 %v2687, %v2721
    %v2738 = vadd.f32 %v2688, %v2722
    %v2739 = vadd.f32 %v2689, %v2723
    %v2740 = vadd.f32 %v2690, %v2724
    %v2741 = vadd.f32 %v2691, %v2725
    %v2742 = vadd.f32 %v2692, %v2726
    %v2743 = vadd.f32 %v2693, %v2727
    %v2744 = vadd.f32 %v2694, %v2728
    %v2745 = vadd.f32 %v2695, %v2729
    %v2746 = vadd.f32 %v2696, %v2730
    %v2747 = vadd.f32 %v2697, %v2731
    %v2748 = vadd.f32 %v2698, %v2732
    %v2749 = vadd.f32 %v2699, %v2733
    %v2750 = vld [vmem:[%s1 + $0x5a] sm:$0x1]
    %v2751 = vperm.slane %v2750, 0
    %v2752 = vmul.f32 %v569, %v2751
    %v2753 = vmul.f32 %v570, %v2751
    %v2754 = vmul.f32 %v571, %v2751
    %v2755 = vmul.f32 %v572, %v2751
    %v2756 = vmul.f32 %v573, %v2751
    %v2757 = vmul.f32 %v574, %v2751
    %v2758 = vmul.f32 %v575, %v2751
    %v2759 = vmul.f32 %v576, %v2751
    %v2760 = vmul.f32 %v577, %v2751
    %v2761 = vmul.f32 %v578, %v2751
    %v2762 = vmul.f32 %v579, %v2751
    %v2763 = vmul.f32 %v580, %v2751
    %v2764 = vmul.f32 %v581, %v2751
    %v2765 = vmul.f32 %v582, %v2751
    %v2766 = vmul.f32 %v583, %v2751
    %v2767 = vmul.f32 %v584, %v2751
    %v2768 = vmul.f32 %v2434, %v2752
    %v2769 = vmul.f32 %v2433, %v2753
    %v2770 = vmul.f32 %v2432, %v2754
    %v2771 = vmul.f32 %v2431, %v2755
    %v2772 = vmul.f32 %v2430, %v2756
    %v2773 = vmul.f32 %v2429, %v2757
    %v2774 = vmul.f32 %v2428, %v2758
    %v2775 = vmul.f32 %v2427, %v2759
    %v2776 = vmul.f32 %v2426, %v2760
    %v2777 = vmul.f32 %v2425, %v2761
    %v2778 = vmul.f32 %v2424, %v2762
    %v2779 = vmul.f32 %v2423, %v2763
    %v2780 = vmul.f32 %v2422, %v2764
    %v2781 = vmul.f32 %v2421, %v2765
    %v2782 = vmul.f32 %v2420, %v2766
    %v2783 = vmul.f32 %v2435, %v2767
    %v2784 = vadd.f32 %v2734, %v2768
    %v2785 = vadd.f32 %v2735, %v2769
    %v2786 = vadd.f32 %v2736, %v2770
    %v2787 = vadd.f32 %v2737, %v2771
    %v2788 = vadd.f32 %v2738, %v2772
    %v2789 = vadd.f32 %v2739, %v2773
    %v2790 = vadd.f32 %v2740, %v2774
    %v2791 = vadd.f32 %v2741, %v2775
    %v2792 = vadd.f32 %v2742, %v2776
    %v2793 = vadd.f32 %v2743, %v2777
    %v2794 = vadd.f32 %v2744, %v2778
    %v2795 = vadd.f32 %v2745, %v2779
    %v2796 = vadd.f32 %v2746, %v2780
    %v2797 = vadd.f32 %v2747, %v2781
    %v2798 = vadd.f32 %v2748, %v2782
    %v2799 = vadd.f32 %v2749, %v2783
    %v2800 = vld [vmem:[%s1 + $0x190] sm:$0xff]
    %v2801 = vld [vmem:[%s1 + $0x198] sm:$0xff]
    %v2802 = vld [vmem:[%s1 + $0x1a0] sm:$0xff]
    %v2803 = vld [vmem:[%s1 + $0x1a8] sm:$0xff]
    %v2804 = vld [vmem:[%s1 + $0x1b0] sm:$0xff]
    %v2805 = vld [vmem:[%s1 + $0x1b8] sm:$0xff]
    %v2806 = vld [vmem:[%s1 + $0x1c0] sm:$0xff]
    %v2807 = vld [vmem:[%s1 + $0x1c8] sm:$0xff]
    %v2808 = vld [vmem:[%s1 + $0x1d0] sm:$0xff]
    %v2809 = vld [vmem:[%s1 + $0x1d8] sm:$0xff]
    %v2810 = vld [vmem:[%s1 + $0x1e0] sm:$0xff]
    %v2811 = vld [vmem:[%s1 + $0x1e8] sm:$0xff]
    %v2812 = vld [vmem:[%s1 + $0x1f0] sm:$0xff]
    %v2813 = vld [vmem:[%s1 + $0x1f8] sm:$0xff]
    %v2814 = vld [vmem:[%s1 + $0x200] sm:$0xff]
    %v2815 = vld [vmem:[%s1 + $0x208] sm:$0xff]
    %v2816 = vld [vmem:[%s1 + $0x7a] sm:$0x1]
    %v2817 = vperm.slane %v2816, 0
    %2818 = vmatpush.msra.mxu0 %v2815
    %2819 = vmatpush.msra.mxu0 %v2814
    %2820 = vmatpush.msra.mxu0 %v2813
    %2821 = vmatpush.msra.mxu0 %v2812
    %2822 = vmatpush.msra.mxu0 %v2811
    %2823 = vmatpush.msra.mxu0 %v2810
    %2824 = vmatpush.msra.mxu0 %v2809
    %2825 = vmatpush.msra.mxu0 %v2808
    %2826 = vmatpush.msra.mxu0 %v2807
    %2827 = vmatpush.msra.mxu0 %v2806
    %2828 = vmatpush.msra.mxu0 %v2805
    %2829 = vmatpush.msra.mxu0 %v2804
    %2830 = vmatpush.msra.mxu0 %v2803
    %2831 = vmatpush.msra.mxu0 %v2802
    %2832 = vmatpush.msra.mxu0 %v2801
    %2833 = vmatpush.msra.mxu0 %v2800
    %2834 = vmatmul.f32.gmra.mxu0 %v2784
    %v2835 = vpop.f32.mrf.mxu0
    %v2836 = vadd.f32 %v2817, %v2835
    %2837 = vmatmul.f32.gmra.mxu0 %v2785
    %v2838 = vpop.f32.mrf.mxu0
    %v2839 = vadd.f32 %v2817, %v2838
    %2840 = vmatmul.f32.gmra.mxu0 %v2786
    %v2841 = vpop.f32.mrf.mxu0
    %v2842 = vadd.f32 %v2817, %v2841
    %2843 = vmatmul.f32.gmra.mxu0 %v2787
    %v2844 = vpop.f32.mrf.mxu0
    %v2845 = vadd.f32 %v2817, %v2844
    %2846 = vmatmul.f32.gmra.mxu0 %v2788
    %v2847 = vpop.f32.mrf.mxu0
    %v2848 = vadd.f32 %v2817, %v2847
    %2849 = vmatmul.f32.gmra.mxu0 %v2789
    %v2850 = vpop.f32.mrf.mxu0
    %v2851 = vadd.f32 %v2817, %v2850
    %2852 = vmatmul.f32.gmra.mxu0 %v2790
    %v2853 = vpop.f32.mrf.mxu0
    %v2854 = vadd.f32 %v2817, %v2853
    %2855 = vmatmul.f32.gmra.mxu0 %v2791
    %v2856 = vpop.f32.mrf.mxu0
    %v2857 = vadd.f32 %v2817, %v2856
    %2858 = vmatmul.f32.gmra.mxu0 %v2792
    %v2859 = vpop.f32.mrf.mxu0
    %v2860 = vadd.f32 %v2817, %v2859
    %2861 = vmatmul.f32.gmra.mxu0 %v2793
    %v2862 = vpop.f32.mrf.mxu0
    %v2863 = vadd.f32 %v2817, %v2862
    %2864 = vmatmul.f32.gmra.mxu0 %v2794
    %v2865 = vpop.f32.mrf.mxu0
    %v2866 = vadd.f32 %v2817, %v2865
    %2867 = vmatmul.f32.gmra.mxu0 %v2795
    %v2868 = vpop.f32.mrf.mxu0
    %v2869 = vadd.f32 %v2817, %v2868
    %2870 = vmatmul.f32.gmra.mxu0 %v2796
    %v2871 = vpop.f32.mrf.mxu0
    %v2872 = vadd.f32 %v2817, %v2871
    %2873 = vmatmul.f32.gmra.mxu0 %v2797
    %v2874 = vpop.f32.mrf.mxu0
    %v2875 = vadd.f32 %v2817, %v2874
    %2876 = vmatmul.f32.gmra.mxu0 %v2798
    %v2877 = vpop.f32.mrf.mxu0
    %v2878 = vadd.f32 %v2817, %v2877
    %2879 = vmatmul.f32.gmra.mxu0 %v2799
    %v2880 = vpop.f32.mrf.mxu0
    %v2881 = vadd.f32 %v2817, %v2880
    %2882 = vdwg.mxu0
    %v2883 = vld [vmem:[%s1 + $0x82] sm:$0x1]
    %v2884 = vld [vmem:[%s1 + $0x8a] sm:$0x1]
    %v2885 = vadd.f32 %v2836, %v2839
    %v2886 = vadd.f32 %v2885, %v2842
    %v2887 = vadd.f32 %v2886, %v2845
    %v2888 = vadd.f32 %v2887, %v2848
    %v2889 = vadd.f32 %v2888, %v2851
    %v2890 = vadd.f32 %v2889, %v2854
    %v2891 = vadd.f32 %v2890, %v2857
    %v2892 = vadd.f32 %v2891, %v2860
    %v2893 = vadd.f32 %v2892, %v2863
    %v2894 = vadd.f32 %v2893, %v2866
    %v2895 = vadd.f32 %v2894, %v2869
    %v2896 = vadd.f32 %v2895, %v2872
    %v2897 = vadd.f32 %v2896, %v2875
    %v2898 = vadd.f32 %v2897, %v2878
    %v2899 = vadd.f32 %v2898, %v2881
    %v2900 = vrot.slane %v2899, 4
    %v2901 = vadd.f32 %v2899, %v2900
    %v2902 = vrot.slane %v2901, 2
    %v2903 = vadd.f32 %v2901, %v2902
    %v2904 = vrot.slane %v2903, 1
    %v2905 = vadd.f32 %v2903, %v2904
    %v2906 = vmul.f32 %v2836, %v2836
    %v2907 = vmul.f32 %v2839, %v2839
    %v2908 = vmul.f32 %v2842, %v2842
    %v2909 = vmul.f32 %v2845, %v2845
    %v2910 = vmul.f32 %v2848, %v2848
    %v2911 = vmul.f32 %v2851, %v2851
    %v2912 = vmul.f32 %v2854, %v2854
    %v2913 = vmul.f32 %v2857, %v2857
    %v2914 = vmul.f32 %v2860, %v2860
    %v2915 = vmul.f32 %v2863, %v2863
    %v2916 = vmul.f32 %v2866, %v2866
    %v2917 = vmul.f32 %v2869, %v2869
    %v2918 = vmul.f32 %v2872, %v2872
    %v2919 = vmul.f32 %v2875, %v2875
    %v2920 = vmul.f32 %v2878, %v2878
    %v2921 = vmul.f32 %v2881, %v2881
    %v2922 = vadd.f32 %v2906, %v2907
    %v2923 = vadd.f32 %v2922, %v2908
    %v2924 = vadd.f32 %v2923, %v2909
    %v2925 = vadd.f32 %v2924, %v2910
    %v2926 = vadd.f32 %v2925, %v2911
    %v2927 = vadd.f32 %v2926, %v2912
    %v2928 = vadd.f32 %v2927, %v2913
    %v2929 = vadd.f32 %v2928, %v2914
    %v2930 = vadd.f32 %v2929, %v2915
    %v2931 = vadd.f32 %v2930, %v2916
    %v2932 = vadd.f32 %v2931, %v2917
    %v2933 = vadd.f32 %v2932, %v2918
    %v2934 = vadd.f32 %v2933, %v2919
    %v2935 = vadd.f32 %v2934, %v2920
    %v2936 = vadd.f32 %v2935, %v2921
    %v2937 = vrot.slane %v2936, 4
    %v2938 = vadd.f32 %v2936, %v2937
    %v2939 = vrot.slane %v2938, 2
    %v2940 = vadd.f32 %v2938, %v2939
    %v2941 = vrot.slane %v2940, 1
    %v2942 = vadd.f32 %v2940, %v2941
    %v2943 = vmul.f32 %v2905, 0.0078125
    %v2944 = vmul.f32 %v2942, 0.0078125
    %v2945 = vmul.f32 %v2943, %v2943
    %v2946 = vsub.f32 %v2944, %v2945
    %v2947 = vadd.f32 %v2946, 1e-05
    %v2948 = vrsqrt.pop %v2947
    %v2949 = vmul.f32 %v2948, %v2947
    %v2950 = vmul.f32 %v2949, %v2948
    %v2951 = vmul.f32 0.5, %v2950
    %v2952 = vsub.f32 1.5, %v2951
    %v2953 = vmul.f32 %v2948, %v2952
    %vm2954 = vweird.f32 %v2947
    %vm2955 = vweird.f32 %v2948
    %vm2956 = vmor %vm2954, %vm2955
    %v2957 = vsel %vm2956, %v2948, %v2953
    %v2958 = vmul.f32 %v2883, %v2957
    %v2959 = vmul.f32 %v2943, %v2958
    %v2960 = vsub.f32 %v2884, %v2959
    %v2961 = vperm.slane %v2958, 0
    %v2962 = vmul.f32 %v2836, %v2961
    %v2963 = vmul.f32 %v2839, %v2961
    %v2964 = vmul.f32 %v2842, %v2961
    %v2965 = vmul.f32 %v2845, %v2961
    %v2966 = vmul.f32 %v2848, %v2961
    %v2967 = vmul.f32 %v2851, %v2961
    %v2968 = vmul.f32 %v2854, %v2961
    %v2969 = vmul.f32 %v2857, %v2961
    %v2970 = vmul.f32 %v2860, %v2961
    %v2971 = vmul.f32 %v2863, %v2961
    %v2972 = vmul.f32 %v2866, %v2961
    %v2973 = vmul.f32 %v2869, %v2961
    %v2974 = vmul.f32 %v2872, %v2961
    %v2975 = vmul.f32 %v2875, %v2961
    %v2976 = vmul.f32 %v2878, %v2961
    %v2977 = vmul.f32 %v2881, %v2961
    %v2978 = vperm.slane %v2960, 0
    %v2979 = vadd.f32 %v2962, %v2978
    %v2980 = vadd.f32 %v2963, %v2978
    %v2981 = vadd.f32 %v2964, %v2978
    %v2982 = vadd.f32 %v2965, %v2978
    %v2983 = vadd.f32 %v2966, %v2978
    %v2984 = vadd.f32 %v2967, %v2978
    %v2985 = vadd.f32 %v2968, %v2978
    %v2986 = vadd.f32 %v2969, %v2978
    %v2987 = vadd.f32 %v2970, %v2978
    %v2988 = vadd.f32 %v2971, %v2978
    %v2989 = vadd.f32 %v2972, %v2978
    %v2990 = vadd.f32 %v2973, %v2978
    %v2991 = vadd.f32 %v2974, %v2978
    %v2992 = vadd.f32 %v2975, %v2978
    %v2993 = vadd.f32 %v2976, %v2978
    %v2994 = vadd.f32 %v2977, %v2978
    %v2995 = vmax.f32 %v2979, 0.0
    %v2996 = vmax.f32 %v2980, 0.0
    %v2997 = vmax.f32 %v2981, 0.0
    %v2998 = vmax.f32 %v2982, 0.0
    %v2999 = vmax.f32 %v2983, 0.0
    %v3000 = vmax.f32 %v2984, 0.0
    %v3001 = vmax.f32 %v2985, 0.0
    %v3002 = vmax.f32 %v2986, 0.0
    %v3003 = vmax.f32 %v2987, 0.0
    %v3004 = vmax.f32 %v2988, 0.0
    %v3005 = vmax.f32 %v2989, 0.0
    %v3006 = vmax.f32 %v2990, 0.0
    %v3007 = vmax.f32 %v2991, 0.0
    %v3008 = vmax.f32 %v2992, 0.0
    %v3009 = vmax.f32 %v2993, 0.0
    %v3010 = vmax.f32 %v2994, 0.0
    %v3011 = vld [vmem:[%s1 + $0x5f] sm:$0x1]
    %v3012 = vperm.slane %v3011, 0
    %v3013 = vmul.f32 %v2995, %v3012
    %v3014 = vmul.f32 %v2996, %v3012
    %v3015 = vmul.f32 %v2997, %v3012
    %v3016 = vmul.f32 %v2998, %v3012
    %v3017 = vmul.f32 %v2999, %v3012
    %v3018 = vmul.f32 %v3000, %v3012
    %v3019 = vmul.f32 %v3001, %v3012
    %v3020 = vmul.f32 %v3002, %v3012
    %v3021 = vmul.f32 %v3003, %v3012
    %v3022 = vmul.f32 %v3004, %v3012
    %v3023 = vmul.f32 %v3005, %v3012
    %v3024 = vmul.f32 %v3006, %v3012
    %v3025 = vmul.f32 %v3007, %v3012
    %v3026 = vmul.f32 %v3008, %v3012
    %v3027 = vmul.f32 %v3009, %v3012
    %v3028 = vmul.f32 %v3010, %v3012
    %v3029 = vld [vmem:[%s1 + $0x73] sm:$0x1]
    %v3030 = vperm.slane %v3029, 0
    %v3031 = vadd.f32 %v3013, %v3030
    %v3032 = vadd.f32 %v3014, %v3030
    %v3033 = vadd.f32 %v3015, %v3030
    %v3034 = vadd.f32 %v3016, %v3030
    %v3035 = vadd.f32 %v3017, %v3030
    %v3036 = vadd.f32 %v3018, %v3030
    %v3037 = vadd.f32 %v3019, %v3030
    %v3038 = vadd.f32 %v3020, %v3030
    %v3039 = vadd.f32 %v3021, %v3030
    %v3040 = vadd.f32 %v3022, %v3030
    %v3041 = vadd.f32 %v3023, %v3030
    %v3042 = vadd.f32 %v3024, %v3030
    %v3043 = vadd.f32 %v3025, %v3030
    %v3044 = vadd.f32 %v3026, %v3030
    %v3045 = vadd.f32 %v3027, %v3030
    %v3046 = vadd.f32 %v3028, %v3030
    %v3047 = vrot.slane %v2995, 3
    %v3048 = vrot.slane %v2996, 3
    %v3049 = vrot.slane %v2997, 3
    %v3050 = vrot.slane %v2998, 3
    %v3051 = vrot.slane %v2999, 3
    %v3052 = vrot.slane %v3000, 3
    %v3053 = vrot.slane %v3001, 3
    %v3054 = vrot.slane %v3002, 3
    %v3055 = vrot.slane %v3003, 3
    %v3056 = vrot.slane %v3004, 3
    %v3057 = vrot.slane %v3005, 3
    %v3058 = vrot.slane %v3006, 3
    %v3059 = vrot.slane %v3007, 3
    %v3060 = vrot.slane %v3008, 3
    %v3061 = vrot.slane %v3009, 3
    %v3062 = vrot.slane %v3010, 3
    %v3063 = vsel %vm637, %v3061, %v3062
    %v3064 = vsel %vm637, %v3060, %v3061
    %v3065 = vsel %vm637, %v3059, %v3060
    %v3066 = vsel %vm637, %v3058, %v3059
    %v3067 = vsel %vm637, %v3057, %v3058
    %v3068 = vsel %vm637, %v3056, %v3057
    %v3069 = vsel %vm637, %v3055, %v3056
    %v3070 = vsel %vm637, %v3054, %v3055
    %v3071 = vsel %vm637, %v3053, %v3054
    %v3072 = vsel %vm637, %v3052, %v3053
    %v3073 = vsel %vm637, %v3051, %v3052
    %v3074 = vsel %vm637, %v3050, %v3051
    %v3075 = vsel %vm637, %v3049, %v3050
    %v3076 = vsel %vm637, %v3048, %v3049
    %v3077 = vsel %vm637, %v3047, %v3048
    %v3078 = vsel %vm637, %v3062, %v3047
    %v3079 = vld [vmem:[%s1 + $0x5b] sm:$0x1]
    %v3080 = vperm.slane %v3079, 0
    %v3081 = vmul.f32 %v377, %v3080
    %v3082 = vmul.f32 %v378, %v3080
    %v3083 = vmul.f32 %v379, %v3080
    %v3084 = vmul.f32 %v380, %v3080
    %v3085 = vmul.f32 %v381, %v3080
    %v3086 = vmul.f32 %v382, %v3080
    %v3087 = vmul.f32 %v383, %v3080
    %v3088 = vmul.f32 %v384, %v3080
    %v3089 = vmul.f32 %v385, %v3080
    %v3090 = vmul.f32 %v386, %v3080
    %v3091 = vmul.f32 %v387, %v3080
    %v3092 = vmul.f32 %v388, %v3080
    %v3093 = vmul.f32 %v389, %v3080
    %v3094 = vmul.f32 %v390, %v3080
    %v3095 = vmul.f32 %v391, %v3080
    %v3096 = vmul.f32 %v392, %v3080
    %v3097 = vmul.f32 %v3078, %v3081
    %v3098 = vmul.f32 %v3077, %v3082
    %v3099 = vmul.f32 %v3076, %v3083
    %v3100 = vmul.f32 %v3075, %v3084
    %v3101 = vmul.f32 %v3074, %v3085
    %v3102 = vmul.f32 %v3073, %v3086
    %v3103 = vmul.f32 %v3072, %v3087
    %v3104 = vmul.f32 %v3071, %v3088
    %v3105 = vmul.f32 %v3070, %v3089
    %v3106 = vmul.f32 %v3069, %v3090
    %v3107 = vmul.f32 %v3068, %v3091
    %v3108 = vmul.f32 %v3067, %v3092
    %v3109 = vmul.f32 %v3066, %v3093
    %v3110 = vmul.f32 %v3065, %v3094
    %v3111 = vmul.f32 %v3064, %v3095
    %v3112 = vmul.f32 %v3063, %v3096
    %v3113 = vadd.f32 %v3031, %v3097
    %v3114 = vadd.f32 %v3032, %v3098
    %v3115 = vadd.f32 %v3033, %v3099
    %v3116 = vadd.f32 %v3034, %v3100
    %v3117 = vadd.f32 %v3035, %v3101
    %v3118 = vadd.f32 %v3036, %v3102
    %v3119 = vadd.f32 %v3037, %v3103
    %v3120 = vadd.f32 %v3038, %v3104
    %v3121 = vadd.f32 %v3039, %v3105
    %v3122 = vadd.f32 %v3040, %v3106
    %v3123 = vadd.f32 %v3041, %v3107
    %v3124 = vadd.f32 %v3042, %v3108
    %v3125 = vadd.f32 %v3043, %v3109
    %v3126 = vadd.f32 %v3044, %v3110
    %v3127 = vadd.f32 %v3045, %v3111
    %v3128 = vadd.f32 %v3046, %v3112
    %v3129 = vrot.slane %v2995, 4
    %v3130 = vrot.slane %v2996, 4
    %v3131 = vrot.slane %v2997, 4
    %v3132 = vrot.slane %v2998, 4
    %v3133 = vrot.slane %v2999, 4
    %v3134 = vrot.slane %v3000, 4
    %v3135 = vrot.slane %v3001, 4
    %v3136 = vrot.slane %v3002, 4
    %v3137 = vrot.slane %v3003, 4
    %v3138 = vrot.slane %v3004, 4
    %v3139 = vrot.slane %v3005, 4
    %v3140 = vrot.slane %v3006, 4
    %v3141 = vrot.slane %v3007, 4
    %v3142 = vrot.slane %v3008, 4
    %v3143 = vrot.slane %v3009, 4
    %v3144 = vrot.slane %v3010, 4
    %v3145 = vsel %vm720, %v3143, %v3144
    %v3146 = vsel %vm720, %v3142, %v3143
    %v3147 = vsel %vm720, %v3141, %v3142
    %v3148 = vsel %vm720, %v3140, %v3141
    %v3149 = vsel %vm720, %v3139, %v3140
    %v3150 = vsel %vm720, %v3138, %v3139
    %v3151 = vsel %vm720, %v3137, %v3138
    %v3152 = vsel %vm720, %v3136, %v3137
    %v3153 = vsel %vm720, %v3135, %v3136
    %v3154 = vsel %vm720, %v3134, %v3135
    %v3155 = vsel %vm720, %v3133, %v3134
    %v3156 = vsel %vm720, %v3132, %v3133
    %v3157 = vsel %vm720, %v3131, %v3132
    %v3158 = vsel %vm720, %v3130, %v3131
    %v3159 = vsel %vm720, %v3129, %v3130
    %v3160 = vsel %vm720, %v3144, %v3129
    %v3161 = vld [vmem:[%s1 + $0x5c] sm:$0x1]
    %v3162 = vperm.slane %v3161, 0
    %v3163 = vmul.f32 %v393, %v3162
    %v3164 = vmul.f32 %v394, %v3162
    %v3165 = vmul.f32 %v395, %v3162
    %v3166 = vmul.f32 %v396, %v3162
    %v3167 = vmul.f32 %v397, %v3162
    %v3168 = vmul.f32 %v398, %v3162
    %v3169 = vmul.f32 %v399, %v3162
    %v3170 = vmul.f32 %v400, %v3162
    %v3171 = vmul.f32 %v401, %v3162
    %v3172 = vmul.f32 %v402, %v3162
    %v3173 = vmul.f32 %v403, %v3162
    %v3174 = vmul.f32 %v404, %v3162
    %v3175 = vmul.f32 %v405, %v3162
    %v3176 = vmul.f32 %v406, %v3162
    %v3177 = vmul.f32 %v407, %v3162
    %v3178 = vmul.f32 %v408, %v3162
    %v3179 = vmul.f32 %v3160, %v3163
    %v3180 = vmul.f32 %v3159, %v3164
    %v3181 = vmul.f32 %v3158, %v3165
    %v3182 = vmul.f32 %v3157, %v3166
    %v3183 = vmul.f32 %v3156, %v3167
    %v3184 = vmul.f32 %v3155, %v3168
    %v3185 = vmul.f32 %v3154, %v3169
    %v3186 = vmul.f32 %v3153, %v3170
    %v3187 = vmul.f32 %v3152, %v3171
    %v3188 = vmul.f32 %v3151, %v3172
    %v3189 = vmul.f32 %v3150, %v3173
    %v3190 = vmul.f32 %v3149, %v3174
    %v3191 = vmul.f32 %v3148, %v3175
    %v3192 = vmul.f32 %v3147, %v3176
    %v3193 = vmul.f32 %v3146, %v3177
    %v3194 = vmul.f32 %v3145, %v3178
    %v3195 = vadd.f32 %v3113, %v3179
    %v3196 = vadd.f32 %v3114, %v3180
    %v3197 = vadd.f32 %v3115, %v3181
    %v3198 = vadd.f32 %v3116, %v3182
    %v3199 = vadd.f32 %v3117, %v3183
    %v3200 = vadd.f32 %v3118, %v3184
    %v3201 = vadd.f32 %v3119, %v3185
    %v3202 = vadd.f32 %v3120, %v3186
    %v3203 = vadd.f32 %v3121, %v3187
    %v3204 = vadd.f32 %v3122, %v3188
    %v3205 = vadd.f32 %v3123, %v3189
    %v3206 = vadd.f32 %v3124, %v3190
    %v3207 = vadd.f32 %v3125, %v3191
    %v3208 = vadd.f32 %v3126, %v3192
    %v3209 = vadd.f32 %v3127, %v3193
    %v3210 = vadd.f32 %v3128, %v3194
    %v3211 = vrot.slane %v2995, 5
    %v3212 = vrot.slane %v2996, 5
    %v3213 = vrot.slane %v2997, 5
    %v3214 = vrot.slane %v2998, 5
    %v3215 = vrot.slane %v2999, 5
    %v3216 = vrot.slane %v3000, 5
    %v3217 = vrot.slane %v3001, 5
    %v3218 = vrot.slane %v3002, 5
    %v3219 = vrot.slane %v3003, 5
    %v3220 = vrot.slane %v3004, 5
    %v3221 = vrot.slane %v3005, 5
    %v3222 = vrot.slane %v3006, 5
    %v3223 = vrot.slane %v3007, 5
    %v3224 = vrot.slane %v3008, 5
    %v3225 = vrot.slane %v3009, 5
    %v3226 = vrot.slane %v3010, 5
    %v3227 = vsel %vm803, %v3225, %v3226
    %v3228 = vsel %vm803, %v3224, %v3225
    %v3229 = vsel %vm803, %v3223, %v3224
    %v3230 = vsel %vm803, %v3222, %v3223
    %v3231 = vsel %vm803, %v3221, %v3222
    %v3232 = vsel %vm803, %v3220, %v3221
    %v3233 = vsel %vm803, %v3219, %v3220
    %v3234 = vsel %vm803, %v3218, %v3219
    %v3235 = vsel %vm803, %v3217, %v3218
    %v3236 = vsel %vm803, %v3216, %v3217
    %v3237 = vsel %vm803, %v3215, %v3216
    %v3238 = vsel %vm803, %v3214, %v3215
    %v3239 = vsel %vm803, %v3213, %v3214
    %v3240 = vsel %vm803, %v3212, %v3213
    %v3241 = vsel %vm803, %v3211, %v3212
    %v3242 = vsel %vm803, %v3226, %v3211
    %v3243 = vld [vmem:[%s1 + $0x5d] sm:$0x1]
    %v3244 = vperm.slane %v3243, 0
    %v3245 = vmul.f32 %v441, %v3244
    %v3246 = vmul.f32 %v442, %v3244
    %v3247 = vmul.f32 %v443, %v3244
    %v3248 = vmul.f32 %v444, %v3244
    %v3249 = vmul.f32 %v445, %v3244
    %v3250 = vmul.f32 %v446, %v3244
    %v3251 = vmul.f32 %v447, %v3244
    %v3252 = vmul.f32 %v448, %v3244
    %v3253 = vmul.f32 %v449, %v3244
    %v3254 = vmul.f32 %v450, %v3244
    %v3255 = vmul.f32 %v451, %v3244
    %v3256 = vmul.f32 %v452, %v3244
    %v3257 = vmul.f32 %v453, %v3244
    %v3258 = vmul.f32 %v454, %v3244
    %v3259 = vmul.f32 %v455, %v3244
    %v3260 = vmul.f32 %v456, %v3244
    %v3261 = vmul.f32 %v3242, %v3245
    %v3262 = vmul.f32 %v3241, %v3246
    %v3263 = vmul.f32 %v3240, %v3247
    %v3264 = vmul.f32 %v3239, %v3248
    %v3265 = vmul.f32 %v3238, %v3249
    %v3266 = vmul.f32 %v3237, %v3250
    %v3267 = vmul.f32 %v3236, %v3251
    %v3268 = vmul.f32 %v3235, %v3252
    %v3269 = vmul.f32 %v3234, %v3253
    %v3270 = vmul.f32 %v3233, %v3254
    %v3271 = vmul.f32 %v3232, %v3255
    %v3272 = vmul.f32 %v3231, %v3256
    %v3273 = vmul.f32 %v3230, %v3257
    %v3274 = vmul.f32 %v3229, %v3258
    %v3275 = vmul.f32 %v3228, %v3259
    %v3276 = vmul.f32 %v3227, %v3260
    %v3277 = vadd.f32 %v3195, %v3261
    %v3278 = vadd.f32 %v3196, %v3262
    %v3279 = vadd.f32 %v3197, %v3263
    %v3280 = vadd.f32 %v3198, %v3264
    %v3281 = vadd.f32 %v3199, %v3265
    %v3282 = vadd.f32 %v3200, %v3266
    %v3283 = vadd.f32 %v3201, %v3267
    %v3284 = vadd.f32 %v3202, %v3268
    %v3285 = vadd.f32 %v3203, %v3269
    %v3286 = vadd.f32 %v3204, %v3270
    %v3287 = vadd.f32 %v3205, %v3271
    %v3288 = vadd.f32 %v3206, %v3272
    %v3289 = vadd.f32 %v3207, %v3273
    %v3290 = vadd.f32 %v3208, %v3274
    %v3291 = vadd.f32 %v3209, %v3275
    %v3292 = vadd.f32 %v3210, %v3276
    %v3293 = vrot.slane %v2995, 7
    %v3294 = vrot.slane %v2996, 7
    %v3295 = vrot.slane %v2997, 7
    %v3296 = vrot.slane %v2998, 7
    %v3297 = vrot.slane %v2999, 7
    %v3298 = vrot.slane %v3000, 7
    %v3299 = vrot.slane %v3001, 7
    %v3300 = vrot.slane %v3002, 7
    %v3301 = vrot.slane %v3003, 7
    %v3302 = vrot.slane %v3004, 7
    %v3303 = vrot.slane %v3005, 7
    %v3304 = vrot.slane %v3006, 7
    %v3305 = vrot.slane %v3007, 7
    %v3306 = vrot.slane %v3008, 7
    %v3307 = vrot.slane %v3009, 7
    %v3308 = vrot.slane %v3010, 7
    %v3309 = vsel %vm886, %v3307, %v3308
    %v3310 = vsel %vm886, %v3306, %v3307
    %v3311 = vsel %vm886, %v3305, %v3306
    %v3312 = vsel %vm886, %v3304, %v3305
    %v3313 = vsel %vm886, %v3303, %v3304
    %v3314 = vsel %vm886, %v3302, %v3303
    %v3315 = vsel %vm886, %v3301, %v3302
    %v3316 = vsel %vm886, %v3300, %v3301
    %v3317 = vsel %vm886, %v3299, %v3300
    %v3318 = vsel %vm886, %v3298, %v3299
    %v3319 = vsel %vm886, %v3297, %v3298
    %v3320 = vsel %vm886, %v3296, %v3297
    %v3321 = vsel %vm886, %v3295, %v3296
    %v3322 = vsel %vm886, %v3294, %v3295
    %v3323 = vsel %vm886, %v3293, %v3294
    %v3324 = vsel %vm886, %v3308, %v3293
    %v3325 = vld [vmem:[%s1 + $0x5e] sm:$0x1]
    %v3326 = vperm.slane %v3325, 0
    %v3327 = vmul.f32 %v457, %v3326
    %v3328 = vmul.f32 %v458, %v3326
    %v3329 = vmul.f32 %v459, %v3326
    %v3330 = vmul.f32 %v460, %v3326
    %v3331 = vmul.f32 %v461, %v3326
    %v3332 = vmul.f32 %v462, %v3326
    %v3333 = vmul.f32 %v463, %v3326
    %v3334 = vmul.f32 %v464, %v3326
    %v3335 = vmul.f32 %v465, %v3326
    %v3336 = vmul.f32 %v466, %v3326
    %v3337 = vmul.f32 %v467, %v3326
    %v3338 = vmul.f32 %v468, %v3326
    %v3339 = vmul.f32 %v469, %v3326
    %v3340 = vmul.f32 %v470, %v3326
    %v3341 = vmul.f32 %v471, %v3326
    %v3342 = vmul.f32 %v472, %v3326
    %v3343 = vmul.f32 %v3324, %v3327
    %v3344 = vmul.f32 %v3323, %v3328
    %v3345 = vmul.f32 %v3322, %v3329
    %v3346 = vmul.f32 %v3321, %v3330
    %v3347 = vmul.f32 %v3320, %v3331
    %v3348 = vmul.f32 %v3319, %v3332
    %v3349 = vmul.f32 %v3318, %v3333
    %v3350 = vmul.f32 %v3317, %v3334
    %v3351 = vmul.f32 %v3316, %v3335
    %v3352 = vmul.f32 %v3315, %v3336
    %v3353 = vmul.f32 %v3314, %v3337
    %v3354 = vmul.f32 %v3313, %v3338
    %v3355 = vmul.f32 %v3312, %v3339
    %v3356 = vmul.f32 %v3311, %v3340
    %v3357 = vmul.f32 %v3310, %v3341
    %v3358 = vmul.f32 %v3309, %v3342
    %v3359 = vadd.f32 %v3277, %v3343
    %v3360 = vadd.f32 %v3278, %v3344
    %v3361 = vadd.f32 %v3279, %v3345
    %v3362 = vadd.f32 %v3280, %v3346
    %v3363 = vadd.f32 %v3281, %v3347
    %v3364 = vadd.f32 %v3282, %v3348
    %v3365 = vadd.f32 %v3283, %v3349
    %v3366 = vadd.f32 %v3284, %v3350
    %v3367 = vadd.f32 %v3285, %v3351
    %v3368 = vadd.f32 %v3286, %v3352
    %v3369 = vadd.f32 %v3287, %v3353
    %v3370 = vadd.f32 %v3288, %v3354
    %v3371 = vadd.f32 %v3289, %v3355
    %v3372 = vadd.f32 %v3290, %v3356
    %v3373 = vadd.f32 %v3291, %v3357
    %v3374 = vadd.f32 %v3292, %v3358
    %v3375 = vrot.slane %v2995, 1
    %v3376 = vrot.slane %v2996, 1
    %v3377 = vrot.slane %v2997, 1
    %v3378 = vrot.slane %v2998, 1
    %v3379 = vrot.slane %v2999, 1
    %v3380 = vrot.slane %v3000, 1
    %v3381 = vrot.slane %v3001, 1
    %v3382 = vrot.slane %v3002, 1
    %v3383 = vrot.slane %v3003, 1
    %v3384 = vrot.slane %v3004, 1
    %v3385 = vrot.slane %v3005, 1
    %v3386 = vrot.slane %v3006, 1
    %v3387 = vrot.slane %v3007, 1
    %v3388 = vrot.slane %v3008, 1
    %v3389 = vrot.slane %v3009, 1
    %v3390 = vrot.slane %v3010, 1
    %v3391 = vsel %vm969, %v3389, %v3390
    %v3392 = vsel %vm969, %v3388, %v3389
    %v3393 = vsel %vm969, %v3387, %v3388
    %v3394 = vsel %vm969, %v3386, %v3387
    %v3395 = vsel %vm969, %v3385, %v3386
    %v3396 = vsel %vm969, %v3384, %v3385
    %v3397 = vsel %vm969, %v3383, %v3384
    %v3398 = vsel %vm969, %v3382, %v3383
    %v3399 = vsel %vm969, %v3381, %v3382
    %v3400 = vsel %vm969, %v3380, %v3381
    %v3401 = vsel %vm969, %v3379, %v3380
    %v3402 = vsel %vm969, %v3378, %v3379
    %v3403 = vsel %vm969, %v3377, %v3378
    %v3404 = vsel %vm969, %v3376, %v3377
    %v3405 = vsel %vm969, %v3375, %v3376
    %v3406 = vsel %vm969, %v3390, %v3375
    %v3407 = vld [vmem:[%s1 + $0x60] sm:$0x1]
    %v3408 = vperm.slane %v3407, 0
    %v3409 = vmul.f32 %v473, %v3408
    %v3410 = vmul.f32 %v474, %v3408
    %v3411 = vmul.f32 %v475, %v3408
    %v3412 = vmul.f32 %v476, %v3408
    %v3413 = vmul.f32 %v477, %v3408
    %v3414 = vmul.f32 %v478, %v3408
    %v3415 = vmul.f32 %v479, %v3408
    %v3416 = vmul.f32 %v480, %v3408
    %v3417 = vmul.f32 %v481, %v3408
    %v3418 = vmul.f32 %v482, %v3408
    %v3419 = vmul.f32 %v483, %v3408
    %v3420 = vmul.f32 %v484, %v3408
    %v3421 = vmul.f32 %v485, %v3408
    %v3422 = vmul.f32 %v486, %v3408
    %v3423 = vmul.f32 %v487, %v3408
    %v3424 = vmul.f32 %v488, %v3408
    %v3425 = vmul.f32 %v3405, %v3409
    %v3426 = vmul.f32 %v3404, %v3410
    %v3427 = vmul.f32 %v3403, %v3411
    %v3428 = vmul.f32 %v3402, %v3412
    %v3429 = vmul.f32 %v3401, %v3413
    %v3430 = vmul.f32 %v3400, %v3414
    %v3431 = vmul.f32 %v3399, %v3415
    %v3432 = vmul.f32 %v3398, %v3416
    %v3433 = vmul.f32 %v3397, %v3417
    %v3434 = vmul.f32 %v3396, %v3418
    %v3435 = vmul.f32 %v3395, %v3419
    %v3436 = vmul.f32 %v3394, %v3420
    %v3437 = vmul.f32 %v3393, %v3421
    %v3438 = vmul.f32 %v3392, %v3422
    %v3439 = vmul.f32 %v3391, %v3423
    %v3440 = vmul.f32 %v3406, %v3424
    %v3441 = vadd.f32 %v3359, %v3425
    %v3442 = vadd.f32 %v3360, %v3426
    %v3443 = vadd.f32 %v3361, %v3427
    %v3444 = vadd.f32 %v3362, %v3428
    %v3445 = vadd.f32 %v3363, %v3429
    %v3446 = vadd.f32 %v3364, %v3430
    %v3447 = vadd.f32 %v3365, %v3431
    %v3448 = vadd.f32 %v3366, %v3432
    %v3449 = vadd.f32 %v3367, %v3433
    %v3450 = vadd.f32 %v3368, %v3434
    %v3451 = vadd.f32 %v3369, %v3435
    %v3452 = vadd.f32 %v3370, %v3436
    %v3453 = vadd.f32 %v3371, %v3437
    %v3454 = vadd.f32 %v3372, %v3438
    %v3455 = vadd.f32 %v3373, %v3439
    %v3456 = vadd.f32 %v3374, %v3440
    %v3457 = vld [vmem:[%s1 + $0x61] sm:$0x1]
    %v3458 = vperm.slane %v3457, 0
    %v3459 = vmul.f32 %v521, %v3458
    %v3460 = vmul.f32 %v522, %v3458
    %v3461 = vmul.f32 %v523, %v3458
    %v3462 = vmul.f32 %v524, %v3458
    %v3463 = vmul.f32 %v525, %v3458
    %v3464 = vmul.f32 %v526, %v3458
    %v3465 = vmul.f32 %v527, %v3458
    %v3466 = vmul.f32 %v528, %v3458
    %v3467 = vmul.f32 %v529, %v3458
    %v3468 = vmul.f32 %v530, %v3458
    %v3469 = vmul.f32 %v531, %v3458
    %v3470 = vmul.f32 %v532, %v3458
    %v3471 = vmul.f32 %v533, %v3458
    %v3472 = vmul.f32 %v534, %v3458
    %v3473 = vmul.f32 %v535, %v3458
    %v3474 = vmul.f32 %v536, %v3458
    %v3475 = vmul.f32 %v3077, %v3459
    %v3476 = vmul.f32 %v3076, %v3460
    %v3477 = vmul.f32 %v3075, %v3461
    %v3478 = vmul.f32 %v3074, %v3462
    %v3479 = vmul.f32 %v3073, %v3463
    %v3480 = vmul.f32 %v3072, %v3464
    %v3481 = vmul.f32 %v3071, %v3465
    %v3482 = vmul.f32 %v3070, %v3466
    %v3483 = vmul.f32 %v3069, %v3467
    %v3484 = vmul.f32 %v3068, %v3468
    %v3485 = vmul.f32 %v3067, %v3469
    %v3486 = vmul.f32 %v3066, %v3470
    %v3487 = vmul.f32 %v3065, %v3471
    %v3488 = vmul.f32 %v3064, %v3472
    %v3489 = vmul.f32 %v3063, %v3473
    %v3490 = vmul.f32 %v3078, %v3474
    %v3491 = vadd.f32 %v3441, %v3475
    %v3492 = vadd.f32 %v3442, %v3476
    %v3493 = vadd.f32 %v3443, %v3477
    %v3494 = vadd.f32 %v3444, %v3478
    %v3495 = vadd.f32 %v3445, %v3479
    %v3496 = vadd.f32 %v3446, %v3480
    %v3497 = vadd.f32 %v3447, %v3481
    %v3498 = vadd.f32 %v3448, %v3482
    %v3499 = vadd.f32 %v3449, %v3483
    %v3500 = vadd.f32 %v3450, %v3484
    %v3501 = vadd.f32 %v3451, %v3485
    %v3502 = vadd.f32 %v3452, %v3486
    %v3503 = vadd.f32 %v3453, %v3487
    %v3504 = vadd.f32 %v3454, %v3488
    %v3505 = vadd.f32 %v3455, %v3489
    %v3506 = vadd.f32 %v3456, %v3490
    %v3507 = vld [vmem:[%s1 + $0x62] sm:$0x1]
    %v3508 = vperm.slane %v3507, 0
    %v3509 = vmul.f32 %v537, %v3508
    %v3510 = vmul.f32 %v538, %v3508
    %v3511 = vmul.f32 %v539, %v3508
    %v3512 = vmul.f32 %v540, %v3508
    %v3513 = vmul.f32 %v541, %v3508
    %v3514 = vmul.f32 %v542, %v3508
    %v3515 = vmul.f32 %v543, %v3508
    %v3516 = vmul.f32 %v544, %v3508
    %v3517 = vmul.f32 %v545, %v3508
    %v3518 = vmul.f32 %v546, %v3508
    %v3519 = vmul.f32 %v547, %v3508
    %v3520 = vmul.f32 %v548, %v3508
    %v3521 = vmul.f32 %v549, %v3508
    %v3522 = vmul.f32 %v550, %v3508
    %v3523 = vmul.f32 %v551, %v3508
    %v3524 = vmul.f32 %v552, %v3508
    %v3525 = vmul.f32 %v3159, %v3509
    %v3526 = vmul.f32 %v3158, %v3510
    %v3527 = vmul.f32 %v3157, %v3511
    %v3528 = vmul.f32 %v3156, %v3512
    %v3529 = vmul.f32 %v3155, %v3513
    %v3530 = vmul.f32 %v3154, %v3514
    %v3531 = vmul.f32 %v3153, %v3515
    %v3532 = vmul.f32 %v3152, %v3516
    %v3533 = vmul.f32 %v3151, %v3517
    %v3534 = vmul.f32 %v3150, %v3518
    %v3535 = vmul.f32 %v3149, %v3519
    %v3536 = vmul.f32 %v3148, %v3520
    %v3537 = vmul.f32 %v3147, %v3521
    %v3538 = vmul.f32 %v3146, %v3522
    %v3539 = vmul.f32 %v3145, %v3523
    %v3540 = vmul.f32 %v3160, %v3524
    %v3541 = vadd.f32 %v3491, %v3525
    %v3542 = vadd.f32 %v3492, %v3526
    %v3543 = vadd.f32 %v3493, %v3527
    %v3544 = vadd.f32 %v3494, %v3528
    %v3545 = vadd.f32 %v3495, %v3529
    %v3546 = vadd.f32 %v3496, %v3530
    %v3547 = vadd.f32 %v3497, %v3531
    %v3548 = vadd.f32 %v3498, %v3532
    %v3549 = vadd.f32 %v3499, %v3533
    %v3550 = vadd.f32 %v3500, %v3534
    %v3551 = vadd.f32 %v3501, %v3535
    %v3552 = vadd.f32 %v3502, %v3536
    %v3553 = vadd.f32 %v3503, %v3537
    %v3554 = vadd.f32 %v3504, %v3538
    %v3555 = vadd.f32 %v3505, %v3539
    %v3556 = vadd.f32 %v3506, %v3540
    %v3557 = vld [vmem:[%s1 + $0x63] sm:$0x1]
    %v3558 = vperm.slane %v3557, 0
    %v3559 = vmul.f32 %v569, %v3558
    %v3560 = vmul.f32 %v570, %v3558
    %v3561 = vmul.f32 %v571, %v3558
    %v3562 = vmul.f32 %v572, %v3558
    %v3563 = vmul.f32 %v573, %v3558
    %v3564 = vmul.f32 %v574, %v3558
    %v3565 = vmul.f32 %v575, %v3558
    %v3566 = vmul.f32 %v576, %v3558
    %v3567 = vmul.f32 %v577, %v3558
    %v3568 = vmul.f32 %v578, %v3558
    %v3569 = vmul.f32 %v579, %v3558
    %v3570 = vmul.f32 %v580, %v3558
    %v3571 = vmul.f32 %v581, %v3558
    %v3572 = vmul.f32 %v582, %v3558
    %v3573 = vmul.f32 %v583, %v3558
    %v3574 = vmul.f32 %v584, %v3558
    %v3575 = vmul.f32 %v3241, %v3559
    %v3576 = vmul.f32 %v3240, %v3560
    %v3577 = vmul.f32 %v3239, %v3561
    %v3578 = vmul.f32 %v3238, %v3562
    %v3579 = vmul.f32 %v3237, %v3563
    %v3580 = vmul.f32 %v3236, %v3564
    %v3581 = vmul.f32 %v3235, %v3565
    %v3582 = vmul.f32 %v3234, %v3566
    %v3583 = vmul.f32 %v3233, %v3567
    %v3584 = vmul.f32 %v3232, %v3568
    %v3585 = vmul.f32 %v3231, %v3569
    %v3586 = vmul.f32 %v3230, %v3570
    %v3587 = vmul.f32 %v3229, %v3571
    %v3588 = vmul.f32 %v3228, %v3572
    %v3589 = vmul.f32 %v3227, %v3573
    %v3590 = vmul.f32 %v3242, %v3574
    %v3591 = vadd.f32 %v3541, %v3575
    %v3592 = vadd.f32 %v3542, %v3576
    %v3593 = vadd.f32 %v3543, %v3577
    %v3594 = vadd.f32 %v3544, %v3578
    %v3595 = vadd.f32 %v3545, %v3579
    %v3596 = vadd.f32 %v3546, %v3580
    %v3597 = vadd.f32 %v3547, %v3581
    %v3598 = vadd.f32 %v3548, %v3582
    %v3599 = vadd.f32 %v3549, %v3583
    %v3600 = vadd.f32 %v3550, %v3584
    %v3601 = vadd.f32 %v3551, %v3585
    %v3602 = vadd.f32 %v3552, %v3586
    %v3603 = vadd.f32 %v3553, %v3587
    %v3604 = vadd.f32 %v3554, %v3588
    %v3605 = vadd.f32 %v3555, %v3589
    %v3606 = vadd.f32 %v3556, %v3590
    %v3607 = vld [vmem:[%s1 + $0x210] sm:$0xff]
    %v3608 = vld [vmem:[%s1 + $0x218] sm:$0xff]
    %v3609 = vld [vmem:[%s1 + $0x220] sm:$0xff]
    %v3610 = vld [vmem:[%s1 + $0x228] sm:$0xff]
    %v3611 = vld [vmem:[%s1 + $0x230] sm:$0xff]
    %v3612 = vld [vmem:[%s1 + $0x238] sm:$0xff]
    %v3613 = vld [vmem:[%s1 + $0x240] sm:$0xff]
    %v3614 = vld [vmem:[%s1 + $0x248] sm:$0xff]
    %v3615 = vld [vmem:[%s1 + $0x250] sm:$0xff]
    %v3616 = vld [vmem:[%s1 + $0x258] sm:$0xff]
    %v3617 = vld [vmem:[%s1 + $0x260] sm:$0xff]
    %v3618 = vld [vmem:[%s1 + $0x268] sm:$0xff]
    %v3619 = vld [vmem:[%s1 + $0x270] sm:$0xff]
    %v3620 = vld [vmem:[%s1 + $0x278] sm:$0xff]
    %v3621 = vld [vmem:[%s1 + $0x280] sm:$0xff]
    %v3622 = vld [vmem:[%s1 + $0x288] sm:$0xff]
    %v3623 = vld [vmem:[%s1 + $0x7b] sm:$0x1]
    %v3624 = vperm.slane %v3623, 0
    %3625 = vmatpush.msra.mxu0 %v3622
    %3626 = vmatpush.msra.mxu0 %v3621
    %3627 = vmatpush.msra.mxu0 %v3620
    %3628 = vmatpush.msra.mxu0 %v3619
    %3629 = vmatpush.msra.mxu0 %v3618
    %3630 = vmatpush.msra.mxu0 %v3617
    %3631 = vmatpush.msra.mxu0 %v3616
    %3632 = vmatpush.msra.mxu0 %v3615
    %3633 = vmatpush.msra.mxu0 %v3614
    %3634 = vmatpush.msra.mxu0 %v3613
    %3635 = vmatpush.msra.mxu0 %v3612
    %3636 = vmatpush.msra.mxu0 %v3611
    %3637 = vmatpush.msra.mxu0 %v3610
    %3638 = vmatpush.msra.mxu0 %v3609
    %3639 = vmatpush.msra.mxu0 %v3608
    %3640 = vmatpush.msra.mxu0 %v3607
    %3641 = vmatmul.f32.gmra.mxu0 %v3591
    %v3642 = vpop.f32.mrf.mxu0
    %v3643 = vadd.f32 %v3624, %v3642
    %3644 = vmatmul.f32.gmra.mxu0 %v3592
    %v3645 = vpop.f32.mrf.mxu0
    %v3646 = vadd.f32 %v3624, %v3645
    %3647 = vmatmul.f32.gmra.mxu0 %v3593
    %v3648 = vpop.f32.mrf.mxu0
    %v3649 = vadd.f32 %v3624, %v3648
    %3650 = vmatmul.f32.gmra.mxu0 %v3594
    %v3651 = vpop.f32.mrf.mxu0
    %v3652 = vadd.f32 %v3624, %v3651
    %3653 = vmatmul.f32.gmra.mxu0 %v3595
    %v3654 = vpop.f32.mrf.mxu0
    %v3655 = vadd.f32 %v3624, %v3654
    %3656 = vmatmul.f32.gmra.mxu0 %v3596
    %v3657 = vpop.f32.mrf.mxu0
    %v3658 = vadd.f32 %v3624, %v3657
    %3659 = vmatmul.f32.gmra.mxu0 %v3597
    %v3660 = vpop.f32.mrf.mxu0
    %v3661 = vadd.f32 %v3624, %v3660
    %3662 = vmatmul.f32.gmra.mxu0 %v3598
    %v3663 = vpop.f32.mrf.mxu0
    %v3664 = vadd.f32 %v3624, %v3663
    %3665 = vmatmul.f32.gmra.mxu0 %v3599
    %v3666 = vpop.f32.mrf.mxu0
    %v3667 = vadd.f32 %v3624, %v3666
    %3668 = vmatmul.f32.gmra.mxu0 %v3600
    %v3669 = vpop.f32.mrf.mxu0
    %v3670 = vadd.f32 %v3624, %v3669
    %3671 = vmatmul.f32.gmra.mxu0 %v3601
    %v3672 = vpop.f32.mrf.mxu0
    %v3673 = vadd.f32 %v3624, %v3672
    %3674 = vmatmul.f32.gmra.mxu0 %v3602
    %v3675 = vpop.f32.mrf.mxu0
    %v3676 = vadd.f32 %v3624, %v3675
    %3677 = vmatmul.f32.gmra.mxu0 %v3603
    %v3678 = vpop.f32.mrf.mxu0
    %v3679 = vadd.f32 %v3624, %v3678
    %3680 = vmatmul.f32.gmra.mxu0 %v3604
    %v3681 = vpop.f32.mrf.mxu0
    %v3682 = vadd.f32 %v3624, %v3681
    %3683 = vmatmul.f32.gmra.mxu0 %v3605
    %v3684 = vpop.f32.mrf.mxu0
    %v3685 = vadd.f32 %v3624, %v3684
    %3686 = vmatmul.f32.gmra.mxu0 %v3606
    %v3687 = vpop.f32.mrf.mxu0
    %v3688 = vadd.f32 %v3624, %v3687
    %3689 = vdwg.mxu0
    %v3690 = vld [vmem:[%s1 + $0x83] sm:$0x1]
    %v3691 = vld [vmem:[%s1 + $0x8b] sm:$0x1]
    %v3692 = vadd.f32 %v3643, %v3646
    %v3693 = vadd.f32 %v3692, %v3649
    %v3694 = vadd.f32 %v3693, %v3652
    %v3695 = vadd.f32 %v3694, %v3655
    %v3696 = vadd.f32 %v3695, %v3658
    %v3697 = vadd.f32 %v3696, %v3661
    %v3698 = vadd.f32 %v3697, %v3664
    %v3699 = vadd.f32 %v3698, %v3667
    %v3700 = vadd.f32 %v3699, %v3670
    %v3701 = vadd.f32 %v3700, %v3673
    %v3702 = vadd.f32 %v3701, %v3676
    %v3703 = vadd.f32 %v3702, %v3679
    %v3704 = vadd.f32 %v3703, %v3682
    %v3705 = vadd.f32 %v3704, %v3685
    %v3706 = vadd.f32 %v3705, %v3688
    %v3707 = vrot.slane %v3706, 4
    %v3708 = vadd.f32 %v3706, %v3707
    %v3709 = vrot.slane %v3708, 2
    %v3710 = vadd.f32 %v3708, %v3709
    %v3711 = vrot.slane %v3710, 1
    %v3712 = vadd.f32 %v3710, %v3711
    %v3713 = vmul.f32 %v3643, %v3643
    %v3714 = vmul.f32 %v3646, %v3646
    %v3715 = vmul.f32 %v3649, %v3649
    %v3716 = vmul.f32 %v3652, %v3652
    %v3717 = vmul.f32 %v3655, %v3655
    %v3718 = vmul.f32 %v3658, %v3658
    %v3719 = vmul.f32 %v3661, %v3661
    %v3720 = vmul.f32 %v3664, %v3664
    %v3721 = vmul.f32 %v3667, %v3667
    %v3722 = vmul.f32 %v3670, %v3670
    %v3723 = vmul.f32 %v3673, %v3673
    %v3724 = vmul.f32 %v3676, %v3676
    %v3725 = vmul.f32 %v3679, %v3679
    %v3726 = vmul.f32 %v3682, %v3682
    %v3727 = vmul.f32 %v3685, %v3685
    %v3728 = vmul.f32 %v3688, %v3688
    %v3729 = vadd.f32 %v3713, %v3714
    %v3730 = vadd.f32 %v3729, %v3715
    %v3731 = vadd.f32 %v3730, %v3716
    %v3732 = vadd.f32 %v3731, %v3717
    %v3733 = vadd.f32 %v3732, %v3718
    %v3734 = vadd.f32 %v3733, %v3719
    %v3735 = vadd.f32 %v3734, %v3720
    %v3736 = vadd.f32 %v3735, %v3721
    %v3737 = vadd.f32 %v3736, %v3722
    %v3738 = vadd.f32 %v3737, %v3723
    %v3739 = vadd.f32 %v3738, %v3724
    %v3740 = vadd.f32 %v3739, %v3725
    %v3741 = vadd.f32 %v3740, %v3726
    %v3742 = vadd.f32 %v3741, %v3727
    %v3743 = vadd.f32 %v3742, %v3728
    %v3744 = vrot.slane %v3743, 4
    %v3745 = vadd.f32 %v3743, %v3744
    %v3746 = vrot.slane %v3745, 2
    %v3747 = vadd.f32 %v3745, %v3746
    %v3748 = vrot.slane %v3747, 1
    %v3749 = vadd.f32 %v3747, %v3748
    %v3750 = vmul.f32 %v3712, 0.0078125
    %v3751 = vmul.f32 %v3749, 0.0078125
    %v3752 = vmul.f32 %v3750, %v3750
    %v3753 = vsub.f32 %v3751, %v3752
    %v3754 = vadd.f32 %v3753, 1e-05
    %v3755 = vrsqrt.pop %v3754
    %v3756 = vmul.f32 %v3755, %v3754
    %v3757 = vmul.f32 %v3756, %v3755
    %v3758 = vmul.f32 0.5, %v3757
    %v3759 = vsub.f32 1.5, %v3758
    %v3760 = vmul.f32 %v3755, %v3759
    %vm3761 = vweird.f32 %v3754
    %vm3762 = vweird.f32 %v3755
    %vm3763 = vmor %vm3761, %vm3762
    %v3764 = vsel %vm3763, %v3755, %v3760
    %v3765 = vmul.f32 %v3690, %v3764
    %v3766 = vmul.f32 %v3750, %v3765
    %v3767 = vsub.f32 %v3691, %v3766
    %v3768 = vperm.slane %v3765, 0
    %v3769 = vmul.f32 %v3643, %v3768
    %v3770 = vmul.f32 %v3646, %v3768
    %v3771 = vmul.f32 %v3649, %v3768
    %v3772 = vmul.f32 %v3652, %v3768
    %v3773 = vmul.f32 %v3655, %v3768
    %v3774 = vmul.f32 %v3658, %v3768
    %v3775 = vmul.f32 %v3661, %v3768
    %v3776 = vmul.f32 %v3664, %v3768
    %v3777 = vmul.f32 %v3667, %v3768
    %v3778 = vmul.f32 %v3670, %v3768
    %v3779 = vmul.f32 %v3673, %v3768
    %v3780 = vmul.f32 %v3676, %v3768
    %v3781 = vmul.f32 %v3679, %v3768
    %v3782 = vmul.f32 %v3682, %v3768
    %v3783 = vmul.f32 %v3685, %v3768
    %v3784 = vmul.f32 %v3688, %v3768
    %v3785 = vperm.slane %v3767, 0
    %v3786 = vadd.f32 %v3769, %v3785
    %v3787 = vadd.f32 %v3770, %v3785
    %v3788 = vadd.f32 %v3771, %v3785
    %v3789 = vadd.f32 %v3772, %v3785
    %v3790 = vadd.f32 %v3773, %v3785
    %v3791 = vadd.f32 %v3774, %v3785
    %v3792 = vadd.f32 %v3775, %v3785
    %v3793 = vadd.f32 %v3776, %v3785
    %v3794 = vadd.f32 %v3777, %v3785
    %v3795 = vadd.f32 %v3778, %v3785
    %v3796 = vadd.f32 %v3779, %v3785
    %v3797 = vadd.f32 %v3780, %v3785
    %v3798 = vadd.f32 %v3781, %v3785
    %v3799 = vadd.f32 %v3782, %v3785
    %v3800 = vadd.f32 %v3783, %v3785
    %v3801 = vadd.f32 %v3784, %v3785
    %v3802 = vmax.f32 %v3786, 0.0
    %v3803 = vmax.f32 %v3787, 0.0
    %v3804 = vmax.f32 %v3788, 0.0
    %v3805 = vmax.f32 %v3789, 0.0
    %v3806 = vmax.f32 %v3790, 0.0
    %v3807 = vmax.f32 %v3791, 0.0
    %v3808 = vmax.f32 %v3792, 0.0
    %v3809 = vmax.f32 %v3793, 0.0
    %v3810 = vmax.f32 %v3794, 0.0
    %v3811 = vmax.f32 %v3795, 0.0
    %v3812 = vmax.f32 %v3796, 0.0
    %v3813 = vmax.f32 %v3797, 0.0
    %v3814 = vmax.f32 %v3798, 0.0
    %v3815 = vmax.f32 %v3799, 0.0
    %v3816 = vmax.f32 %v3800, 0.0
    %v3817 = vmax.f32 %v3801, 0.0
    %v3818 = vld [vmem:[%s1 + $0x68] sm:$0x1]
    %v3819 = vperm.slane %v3818, 0
    %v3820 = vmul.f32 %v3802, %v3819
    %v3821 = vmul.f32 %v3803, %v3819
    %v3822 = vmul.f32 %v3804, %v3819
    %v3823 = vmul.f32 %v3805, %v3819
    %v3824 = vmul.f32 %v3806, %v3819
    %v3825 = vmul.f32 %v3807, %v3819
    %v3826 = vmul.f32 %v3808, %v3819
    %v3827 = vmul.f32 %v3809, %v3819
    %v3828 = vmul.f32 %v3810, %v3819
    %v3829 = vmul.f32 %v3811, %v3819
    %v3830 = vmul.f32 %v3812, %v3819
    %v3831 = vmul.f32 %v3813, %v3819
    %v3832 = vmul.f32 %v3814, %v3819
    %v3833 = vmul.f32 %v3815, %v3819
    %v3834 = vmul.f32 %v3816, %v3819
    %v3835 = vmul.f32 %v3817, %v3819
    %v3836 = vld [vmem:[%s1 + $0x74] sm:$0x1]
    %v3837 = vperm.slane %v3836, 0
    %v3838 = vadd.f32 %v3820, %v3837
    %v3839 = vadd.f32 %v3821, %v3837
    %v3840 = vadd.f32 %v3822, %v3837
    %v3841 = vadd.f32 %v3823, %v3837
    %v3842 = vadd.f32 %v3824, %v3837
    %v3843 = vadd.f32 %v3825, %v3837
    %v3844 = vadd.f32 %v3826, %v3837
    %v3845 = vadd.f32 %v3827, %v3837
    %v3846 = vadd.f32 %v3828, %v3837
    %v3847 = vadd.f32 %v3829, %v3837
    %v3848 = vadd.f32 %v3830, %v3837
    %v3849 = vadd.f32 %v3831, %v3837
    %v3850 = vadd.f32 %v3832, %v3837
    %v3851 = vadd.f32 %v3833, %v3837
    %v3852 = vadd.f32 %v3834, %v3837
    %v3853 = vadd.f32 %v3835, %v3837
    %v3854 = vrot.slane %v3802, 3
    %v3855 = vrot.slane %v3803, 3
    %v3856 = vrot.slane %v3804, 3
    %v3857 = vrot.slane %v3805, 3
    %v3858 = vrot.slane %v3806, 3
    %v3859 = vrot.slane %v3807, 3
    %v3860 = vrot.slane %v3808, 3
    %v3861 = vrot.slane %v3809, 3
    %v3862 = vrot.slane %v3810, 3
    %v3863 = vrot.slane %v3811, 3
    %v3864 = vrot.slane %v3812, 3
    %v3865 = vrot.slane %v3813, 3
    %v3866 = vrot.slane %v3814, 3
    %v3867 = vrot.slane %v3815, 3
    %v3868 = vrot.slane %v3816, 3
    %v3869 = vrot.slane %v3817, 3
    %v3870 = vsel %vm637, %v3868, %v3869
    %v3871 = vsel %vm637, %v3867, %v3868
    %v3872 = vsel %vm637, %v3866, %v3867
    %v3873 = vsel %vm637, %v3865, %v3866
    %v3874 = vsel %vm637, %v3864, %v3865
    %v3875 = vsel %vm637, %v3863, %v3864
    %v3876 = vsel %vm637, %v3862, %v3863
    %v3877 = vsel %vm637, %v3861, %v3862
    %v3878 = vsel %vm637, %v3860, %v3861
    %v3879 = vsel %vm637, %v3859, %v3860
    %v3880 = vsel %vm637, %v3858, %v3859
    %v3881 = vsel %vm637, %v3857, %v3858
    %v3882 = vsel %vm637, %v3856, %v3857
    %v3883 = vsel %vm637, %v3855, %v3856
    %v3884 = vsel %vm637, %v3854, %v3855
    %v3885 = vsel %vm637, %v3869, %v3854
    %v3886 = vld [vmem:[%s1 + $0x64] sm:$0x1]
    %v3887 = vperm.slane %v3886, 0
    %v3888 = vmul.f32 %v377, %v3887
    %v3889 = vmul.f32 %v378, %v3887
    %v3890 = vmul.f32 %v379, %v3887
    %v3891 = vmul.f32 %v380, %v3887
    %v3892 = vmul.f32 %v381, %v3887
    %v3893 = vmul.f32 %v382, %v3887
    %v3894 = vmul.f32 %v383, %v3887
    %v3895 = vmul.f32 %v384, %v3887
    %v3896 = vmul.f32 %v385, %v3887
    %v3897 = vmul.f32 %v386, %v3887
    %v3898 = vmul.f32 %v387, %v3887
    %v3899 = vmul.f32 %v388, %v3887
    %v3900 = vmul.f32 %v389, %v3887
    %v3901 = vmul.f32 %v390, %v3887
    %v3902 = vmul.f32 %v391, %v3887
    %v3903 = vmul.f32 %v392, %v3887
    %v3904 = vmul.f32 %v3885, %v3888
    %v3905 = vmul.f32 %v3884, %v3889
    %v3906 = vmul.f32 %v3883, %v3890
    %v3907 = vmul.f32 %v3882, %v3891
    %v3908 = vmul.f32 %v3881, %v3892
    %v3909 = vmul.f32 %v3880, %v3893
    %v3910 = vmul.f32 %v3879, %v3894
    %v3911 = vmul.f32 %v3878, %v3895
    %v3912 = vmul.f32 %v3877, %v3896
    %v3913 = vmul.f32 %v3876, %v3897
    %v3914 = vmul.f32 %v3875, %v3898
    %v3915 = vmul.f32 %v3874, %v3899
    %v3916 = vmul.f32 %v3873, %v3900
    %v3917 = vmul.f32 %v3872, %v3901
    %v3918 = vmul.f32 %v3871, %v3902
    %v3919 = vmul.f32 %v3870, %v3903
    %v3920 = vadd.f32 %v3838, %v3904
    %v3921 = vadd.f32 %v3839, %v3905
    %v3922 = vadd.f32 %v3840, %v3906
    %v3923 = vadd.f32 %v3841, %v3907
    %v3924 = vadd.f32 %v3842, %v3908
    %v3925 = vadd.f32 %v3843, %v3909
    %v3926 = vadd.f32 %v3844, %v3910
    %v3927 = vadd.f32 %v3845, %v3911
    %v3928 = vadd.f32 %v3846, %v3912
    %v3929 = vadd.f32 %v3847, %v3913
    %v3930 = vadd.f32 %v3848, %v3914
    %v3931 = vadd.f32 %v3849, %v3915
    %v3932 = vadd.f32 %v3850, %v3916
    %v3933 = vadd.f32 %v3851, %v3917
    %v3934 = vadd.f32 %v3852, %v3918
    %v3935 = vadd.f32 %v3853, %v3919
    %v3936 = vrot.slane %v3802, 4
    %v3937 = vrot.slane %v3803, 4
    %v3938 = vrot.slane %v3804, 4
    %v3939 = vrot.slane %v3805, 4
    %v3940 = vrot.slane %v3806, 4
    %v3941 = vrot.slane %v3807, 4
    %v3942 = vrot.slane %v3808, 4
    %v3943 = vrot.slane %v3809, 4
    %v3944 = vrot.slane %v3810, 4
    %v3945 = vrot.slane %v3811, 4
    %v3946 = vrot.slane %v3812, 4
    %v3947 = vrot.slane %v3813, 4
    %v3948 = vrot.slane %v3814, 4
    %v3949 = vrot.slane %v3815, 4
    %v3950 = vrot.slane %v3816, 4
    %v3951 = vrot.slane %v3817, 4
    %v3952 = vsel %vm720, %v3950, %v3951
    %v3953 = vsel %vm720, %v3949, %v3950
    %v3954 = vsel %vm720, %v3948, %v3949
    %v3955 = vsel %vm720, %v3947, %v3948
    %v3956 = vsel %vm720, %v3946, %v3947
    %v3957 = vsel %vm720, %v3945, %v3946
    %v3958 = vsel %vm720, %v3944, %v3945
    %v3959 = vsel %vm720, %v3943, %v3944
    %v3960 = vsel %vm720, %v3942, %v3943
    %v3961 = vsel %vm720, %v3941, %v3942
    %v3962 = vsel %vm720, %v3940, %v3941
    %v3963 = vsel %vm720, %v3939, %v3940
    %v3964 = vsel %vm720, %v3938, %v3939
    %v3965 = vsel %vm720, %v3937, %v3938
    %v3966 = vsel %vm720, %v3936, %v3937
    %v3967 = vsel %vm720, %v3951, %v3936
    %v3968 = vld [vmem:[%s1 + $0x65] sm:$0x1]
    %v3969 = vperm.slane %v3968, 0
    %v3970 = vmul.f32 %v393, %v3969
    %v3971 = vmul.f32 %v394, %v3969
    %v3972 = vmul.f32 %v395, %v3969
    %v3973 = vmul.f32 %v396, %v3969
    %v3974 = vmul.f32 %v397, %v3969
    %v3975 = vmul.f32 %v398, %v3969
    %v3976 = vmul.f32 %v399, %v3969
    %v3977 = vmul.f32 %v400, %v3969
    %v3978 = vmul.f32 %v401, %v3969
    %v3979 = vmul.f32 %v402, %v3969
    %v3980 = vmul.f32 %v403, %v3969
    %v3981 = vmul.f32 %v404, %v3969
    %v3982 = vmul.f32 %v405, %v3969
    %v3983 = vmul.f32 %v406, %v3969
    %v3984 = vmul.f32 %v407, %v3969
    %v3985 = vmul.f32 %v408, %v3969
    %v3986 = vmul.f32 %v3967, %v3970
    %v3987 = vmul.f32 %v3966, %v3971
    %v3988 = vmul.f32 %v3965, %v3972
    %v3989 = vmul.f32 %v3964, %v3973
    %v3990 = vmul.f32 %v3963, %v3974
    %v3991 = vmul.f32 %v3962, %v3975
    %v3992 = vmul.f32 %v3961, %v3976
    %v3993 = vmul.f32 %v3960, %v3977
    %v3994 = vmul.f32 %v3959, %v3978
    %v3995 = vmul.f32 %v3958, %v3979
    %v3996 = vmul.f32 %v3957, %v3980
    %v3997 = vmul.f32 %v3956, %v3981
    %v3998 = vmul.f32 %v3955, %v3982
    %v3999 = vmul.f32 %v3954, %v3983
    %v4000 = vmul.f32 %v3953, %v3984
    %v4001 = vmul.f32 %v3952, %v3985
    %v4002 = vadd.f32 %v3920, %v3986
    %v4003 = vadd.f32 %v3921, %v3987
    %v4004 = vadd.f32 %v3922, %v3988
    %v4005 = vadd.f32 %v3923, %v3989
    %v4006 = vadd.f32 %v3924, %v3990
    %v4007 = vadd.f32 %v3925, %v3991
    %v4008 = vadd.f32 %v3926, %v3992
    %v4009 = vadd.f32 %v3927, %v3993
    %v4010 = vadd.f32 %v3928, %v3994
    %v4011 = vadd.f32 %v3929, %v3995
    %v4012 = vadd.f32 %v3930, %v3996
    %v4013 = vadd.f32 %v3931, %v3997
    %v4014 = vadd.f32 %v3932, %v3998
    %v4015 = vadd.f32 %v3933, %v3999
    %v4016 = vadd.f32 %v3934, %v4000
    %v4017 = vadd.f32 %v3935, %v4001
    %v4018 = vrot.slane %v3802, 5
    %v4019 = vrot.slane %v3803, 5
    %v4020 = vrot.slane %v3804, 5
    %v4021 = vrot.slane %v3805, 5
    %v4022 = vrot.slane %v3806, 5
    %v4023 = vrot.slane %v3807, 5
    %v4024 = vrot.slane %v3808, 5
    %v4025 = vrot.slane %v3809, 5
    %v4026 = vrot.slane %v3810, 5
    %v4027 = vrot.slane %v3811, 5
    %v4028 = vrot.slane %v3812, 5
    %v4029 = vrot.slane %v3813, 5
    %v4030 = vrot.slane %v3814, 5
    %v4031 = vrot.slane %v3815, 5
    %v4032 = vrot.slane %v3816, 5
    %v4033 = vrot.slane %v3817, 5
    %v4034 = vsel %vm803, %v4032, %v4033
    %v4035 = vsel %vm803, %v4031, %v4032
    %v4036 = vsel %vm803, %v4030, %v4031
    %v4037 = vsel %vm803, %v4029, %v4030
    %v4038 = vsel %vm803, %v4028, %v4029
    %v4039 = vsel %vm803, %v4027, %v4028
    %v4040 = vsel %vm803, %v4026, %v4027
    %v4041 = vsel %vm803, %v4025, %v4026
    %v4042 = vsel %vm803, %v4024, %v4025
    %v4043 = vsel %vm803, %v4023, %v4024
    %v4044 = vsel %vm803, %v4022, %v4023
    %v4045 = vsel %vm803, %v4021, %v4022
    %v4046 = vsel %vm803, %v4020, %v4021
    %v4047 = vsel %vm803, %v4019, %v4020
    %v4048 = vsel %vm803, %v4018, %v4019
    %v4049 = vsel %vm803, %v4033, %v4018
    %v4050 = vld [vmem:[%s1 + $0x66] sm:$0x1]
    %v4051 = vperm.slane %v4050, 0
    %v4052 = vmul.f32 %v441, %v4051
    %v4053 = vmul.f32 %v442, %v4051
    %v4054 = vmul.f32 %v443, %v4051
    %v4055 = vmul.f32 %v444, %v4051
    %v4056 = vmul.f32 %v445, %v4051
    %v4057 = vmul.f32 %v446, %v4051
    %v4058 = vmul.f32 %v447, %v4051
    %v4059 = vmul.f32 %v448, %v4051
    %v4060 = vmul.f32 %v449, %v4051
    %v4061 = vmul.f32 %v450, %v4051
    %v4062 = vmul.f32 %v451, %v4051
    %v4063 = vmul.f32 %v452, %v4051
    %v4064 = vmul.f32 %v453, %v4051
    %v4065 = vmul.f32 %v454, %v4051
    %v4066 = vmul.f32 %v455, %v4051
    %v4067 = vmul.f32 %v456, %v4051
    %v4068 = vmul.f32 %v4049, %v4052
    %v4069 = vmul.f32 %v4048, %v4053
    %v4070 = vmul.f32 %v4047, %v4054
    %v4071 = vmul.f32 %v4046, %v4055
    %v4072 = vmul.f32 %v4045, %v4056
    %v4073 = vmul.f32 %v4044, %v4057
    %v4074 = vmul.f32 %v4043, %v4058
    %v4075 = vmul.f32 %v4042, %v4059
    %v4076 = vmul.f32 %v4041, %v4060
    %v4077 = vmul.f32 %v4040, %v4061
    %v4078 = vmul.f32 %v4039, %v4062
    %v4079 = vmul.f32 %v4038, %v4063
    %v4080 = vmul.f32 %v4037, %v4064
    %v4081 = vmul.f32 %v4036, %v4065
    %v4082 = vmul.f32 %v4035, %v4066
    %v4083 = vmul.f32 %v4034, %v4067
    %v4084 = vadd.f32 %v4002, %v4068
    %v4085 = vadd.f32 %v4003, %v4069
    %v4086 = vadd.f32 %v4004, %v4070
    %v4087 = vadd.f32 %v4005, %v4071
    %v4088 = vadd.f32 %v4006, %v4072
    %v4089 = vadd.f32 %v4007, %v4073
    %v4090 = vadd.f32 %v4008, %v4074
    %v4091 = vadd.f32 %v4009, %v4075
    %v4092 = vadd.f32 %v4010, %v4076
    %v4093 = vadd.f32 %v4011, %v4077
    %v4094 = vadd.f32 %v4012, %v4078
    %v4095 = vadd.f32 %v4013, %v4079
    %v4096 = vadd.f32 %v4014, %v4080
    %v4097 = vadd.f32 %v4015, %v4081
    %v4098 = vadd.f32 %v4016, %v4082
    %v4099 = vadd.f32 %v4017, %v4083
    %v4100 = vrot.slane %v3802, 7
    %v4101 = vrot.slane %v3803, 7
    %v4102 = vrot.slane %v3804, 7
    %v4103 = vrot.slane %v3805, 7
    %v4104 = vrot.slane %v3806, 7
    %v4105 = vrot.slane %v3807, 7
    %v4106 = vrot.slane %v3808, 7
    %v4107 = vrot.slane %v3809, 7
    %v4108 = vrot.slane %v3810, 7
    %v4109 = vrot.slane %v3811, 7
    %v4110 = vrot.slane %v3812, 7
    %v4111 = vrot.slane %v3813, 7
    %v4112 = vrot.slane %v3814, 7
    %v4113 = vrot.slane %v3815, 7
    %v4114 = vrot.slane %v3816, 7
    %v4115 = vrot.slane %v3817, 7
    %v4116 = vsel %vm886, %v4114, %v4115
    %v4117 = vsel %vm886, %v4113, %v4114
    %v4118 = vsel %vm886, %v4112, %v4113
    %v4119 = vsel %vm886, %v4111, %v4112
    %v4120 = vsel %vm886, %v4110, %v4111
    %v4121 = vsel %vm886, %v4109, %v4110
    %v4122 = vsel %vm886, %v4108, %v4109
    %v4123 = vsel %vm886, %v4107, %v4108
    %v4124 = vsel %vm886, %v4106, %v4107
    %v4125 = vsel %vm886, %v4105, %v4106
    %v4126 = vsel %vm886, %v4104, %v4105
    %v4127 = vsel %vm886, %v4103, %v4104
    %v4128 = vsel %vm886, %v4102, %v4103
    %v4129 = vsel %vm886, %v4101, %v4102
    %v4130 = vsel %vm886, %v4100, %v4101
    %v4131 = vsel %vm886, %v4115, %v4100
    %v4132 = vld [vmem:[%s1 + $0x67] sm:$0x1]
    %v4133 = vperm.slane %v4132, 0
    %v4134 = vmul.f32 %v457, %v4133
    %v4135 = vmul.f32 %v458, %v4133
    %v4136 = vmul.f32 %v459, %v4133
    %v4137 = vmul.f32 %v460, %v4133
    %v4138 = vmul.f32 %v461, %v4133
    %v4139 = vmul.f32 %v462, %v4133
    %v4140 = vmul.f32 %v463, %v4133
    %v4141 = vmul.f32 %v464, %v4133
    %v4142 = vmul.f32 %v465, %v4133
    %v4143 = vmul.f32 %v466, %v4133
    %v4144 = vmul.f32 %v467, %v4133
    %v4145 = vmul.f32 %v468, %v4133
    %v4146 = vmul.f32 %v469, %v4133
    %v4147 = vmul.f32 %v470, %v4133
    %v4148 = vmul.f32 %v471, %v4133
    %v4149 = vmul.f32 %v472, %v4133
    %v4150 = vmul.f32 %v4131, %v4134
    %v4151 = vmul.f32 %v4130, %v4135
    %v4152 = vmul.f32 %v4129, %v4136
    %v4153 = vmul.f32 %v4128, %v4137
    %v4154 = vmul.f32 %v4127, %v4138
    %v4155 = vmul.f32 %v4126, %v4139
    %v4156 = vmul.f32 %v4125, %v4140
    %v4157 = vmul.f32 %v4124, %v4141
    %v4158 = vmul.f32 %v4123, %v4142
    %v4159 = vmul.f32 %v4122, %v4143
    %v4160 = vmul.f32 %v4121, %v4144
    %v4161 = vmul.f32 %v4120, %v4145
    %v4162 = vmul.f32 %v4119, %v4146
    %v4163 = vmul.f32 %v4118, %v4147
    %v4164 = vmul.f32 %v4117, %v4148
    %v4165 = vmul.f32 %v4116, %v4149
    %v4166 = vadd.f32 %v4084, %v4150
    %v4167 = vadd.f32 %v4085, %v4151
    %v4168 = vadd.f32 %v4086, %v4152
    %v4169 = vadd.f32 %v4087, %v4153
    %v4170 = vadd.f32 %v4088, %v4154
    %v4171 = vadd.f32 %v4089, %v4155
    %v4172 = vadd.f32 %v4090, %v4156
    %v4173 = vadd.f32 %v4091, %v4157
    %v4174 = vadd.f32 %v4092, %v4158
    %v4175 = vadd.f32 %v4093, %v4159
    %v4176 = vadd.f32 %v4094, %v4160
    %v4177 = vadd.f32 %v4095, %v4161
    %v4178 = vadd.f32 %v4096, %v4162
    %v4179 = vadd.f32 %v4097, %v4163
    %v4180 = vadd.f32 %v4098, %v4164
    %v4181 = vadd.f32 %v4099, %v4165
    %v4182 = vrot.slane %v3802, 1
    %v4183 = vrot.slane %v3803, 1
    %v4184 = vrot.slane %v3804, 1
    %v4185 = vrot.slane %v3805, 1
    %v4186 = vrot.slane %v3806, 1
    %v4187 = vrot.slane %v3807, 1
    %v4188 = vrot.slane %v3808, 1
    %v4189 = vrot.slane %v3809, 1
    %v4190 = vrot.slane %v3810, 1
    %v4191 = vrot.slane %v3811, 1
    %v4192 = vrot.slane %v3812, 1
    %v4193 = vrot.slane %v3813, 1
    %v4194 = vrot.slane %v3814, 1
    %v4195 = vrot.slane %v3815, 1
    %v4196 = vrot.slane %v3816, 1
    %v4197 = vrot.slane %v3817, 1
    %v4198 = vsel %vm969, %v4196, %v4197
    %v4199 = vsel %vm969, %v4195, %v4196
    %v4200 = vsel %vm969, %v4194, %v4195
    %v4201 = vsel %vm969, %v4193, %v4194
    %v4202 = vsel %vm969, %v4192, %v4193
    %v4203 = vsel %vm969, %v4191, %v4192
    %v4204 = vsel %vm969, %v4190, %v4191
    %v4205 = vsel %vm969, %v4189, %v4190
    %v4206 = vsel %vm969, %v4188, %v4189
    %v4207 = vsel %vm969, %v4187, %v4188
    %v4208 = vsel %vm969, %v4186, %v4187
    %v4209 = vsel %vm969, %v4185, %v4186
    %v4210 = vsel %vm969, %v4184, %v4185
    %v4211 = vsel %vm969, %v4183, %v4184
    %v4212 = vsel %vm969, %v4182, %v4183
    %v4213 = vsel %vm969, %v4197, %v4182
    %v4214 = vld [vmem:[%s1 + $0x69] sm:$0x1]
    %v4215 = vperm.slane %v4214, 0
    %v4216 = vmul.f32 %v473, %v4215
    %v4217 = vmul.f32 %v474, %v4215
    %v4218 = vmul.f32 %v475, %v4215
    %v4219 = vmul.f32 %v476, %v4215
    %v4220 = vmul.f32 %v477, %v4215
    %v4221 = vmul.f32 %v478, %v4215
    %v4222 = vmul.f32 %v479, %v4215
    %v4223 = vmul.f32 %v480, %v4215
    %v4224 = vmul.f32 %v481, %v4215
    %v4225 = vmul.f32 %v482, %v4215
    %v4226 = vmul.f32 %v483, %v4215
    %v4227 = vmul.f32 %v484, %v4215
    %v4228 = vmul.f32 %v485, %v4215
    %v4229 = vmul.f32 %v486, %v4215
    %v4230 = vmul.f32 %v487, %v4215
    %v4231 = vmul.f32 %v488, %v4215
    %v4232 = vmul.f32 %v4212, %v4216
    %v4233 = vmul.f32 %v4211, %v4217
    %v4234 = vmul.f32 %v4210, %v4218
    %v4235 = vmul.f32 %v4209, %v4219
    %v4236 = vmul.f32 %v4208, %v4220
    %v4237 = vmul.f32 %v4207, %v4221
    %v4238 = vmul.f32 %v4206, %v4222
    %v4239 = vmul.f32 %v4205, %v4223
    %v4240 = vmul.f32 %v4204, %v4224
    %v4241 = vmul.f32 %v4203, %v4225
    %v4242 = vmul.f32 %v4202, %v4226
    %v4243 = vmul.f32 %v4201, %v4227
    %v4244 = vmul.f32 %v4200, %v4228
    %v4245 = vmul.f32 %v4199, %v4229
    %v4246 = vmul.f32 %v4198, %v4230
    %v4247 = vmul.f32 %v4213, %v4231
    %v4248 = vadd.f32 %v4166, %v4232
    %v4249 = vadd.f32 %v4167, %v4233
    %v4250 = vadd.f32 %v4168, %v4234
    %v4251 = vadd.f32 %v4169, %v4235
    %v4252 = vadd.f32 %v4170, %v4236
    %v4253 = vadd.f32 %v4171, %v4237
    %v4254 = vadd.f32 %v4172, %v4238
    %v4255 = vadd.f32 %v4173, %v4239
    %v4256 = vadd.f32 %v4174, %v4240
    %v4257 = vadd.f32 %v4175, %v4241
    %v4258 = vadd.f32 %v4176, %v4242
    %v4259 = vadd.f32 %v4177, %v4243
    %v4260 = vadd.f32 %v4178, %v4244
    %v4261 = vadd.f32 %v4179, %v4245
    %v4262 = vadd.f32 %v4180, %v4246
    %v4263 = vadd.f32 %v4181, %v4247
    %v4264 = vld [vmem:[%s1 + $0x6a] sm:$0x1]
    %v4265 = vperm.slane %v4264, 0
    %v4266 = vmul.f32 %v521, %v4265
    %v4267 = vmul.f32 %v522, %v4265
    %v4268 = vmul.f32 %v523, %v4265
    %v4269 = vmul.f32 %v524, %v4265
    %v4270 = vmul.f32 %v525, %v4265
    %v4271 = vmul.f32 %v526, %v4265
    %v4272 = vmul.f32 %v527, %v4265
    %v4273 = vmul.f32 %v528, %v4265
    %v4274 = vmul.f32 %v529, %v4265
    %v4275 = vmul.f32 %v530, %v4265
    %v4276 = vmul.f32 %v531, %v4265
    %v4277 = vmul.f32 %v532, %v4265
    %v4278 = vmul.f32 %v533, %v4265
    %v4279 = vmul.f32 %v534, %v4265
    %v4280 = vmul.f32 %v535, %v4265
    %v4281 = vmul.f32 %v536, %v4265
    %v4282 = vmul.f32 %v3884, %v4266
    %v4283 = vmul.f32 %v3883, %v4267
    %v4284 = vmul.f32 %v3882, %v4268
    %v4285 = vmul.f32 %v3881, %v4269
    %v4286 = vmul.f32 %v3880, %v4270
    %v4287 = vmul.f32 %v3879, %v4271
    %v4288 = vmul.f32 %v3878, %v4272
    %v4289 = vmul.f32 %v3877, %v4273
    %v4290 = vmul.f32 %v3876, %v4274
    %v4291 = vmul.f32 %v3875, %v4275
    %v4292 = vmul.f32 %v3874, %v4276
    %v4293 = vmul.f32 %v3873, %v4277
    %v4294 = vmul.f32 %v3872, %v4278
    %v4295 = vmul.f32 %v3871, %v4279
    %v4296 = vmul.f32 %v3870, %v4280
    %v4297 = vmul.f32 %v3885, %v4281
    %v4298 = vadd.f32 %v4248, %v4282
    %v4299 = vadd.f32 %v4249, %v4283
    %v4300 = vadd.f32 %v4250, %v4284
    %v4301 = vadd.f32 %v4251, %v4285
    %v4302 = vadd.f32 %v4252, %v4286
    %v4303 = vadd.f32 %v4253, %v4287
    %v4304 = vadd.f32 %v4254, %v4288
    %v4305 = vadd.f32 %v4255, %v4289
    %v4306 = vadd.f32 %v4256, %v4290
    %v4307 = vadd.f32 %v4257, %v4291
    %v4308 = vadd.f32 %v4258, %v4292
    %v4309 = vadd.f32 %v4259, %v4293
    %v4310 = vadd.f32 %v4260, %v4294
    %v4311 = vadd.f32 %v4261, %v4295
    %v4312 = vadd.f32 %v4262, %v4296
    %v4313 = vadd.f32 %v4263, %v4297
    %v4314 = vld [vmem:[%s1 + $0x6b] sm:$0x1]
    %v4315 = vperm.slane %v4314, 0
    %v4316 = vmul.f32 %v537, %v4315
    %v4317 = vmul.f32 %v538, %v4315
    %v4318 = vmul.f32 %v539, %v4315
    %v4319 = vmul.f32 %v540, %v4315
    %v4320 = vmul.f32 %v541, %v4315
    %v4321 = vmul.f32 %v542, %v4315
    %v4322 = vmul.f32 %v543, %v4315
    %v4323 = vmul.f32 %v544, %v4315
    %v4324 = vmul.f32 %v545, %v4315
    %v4325 = vmul.f32 %v546, %v4315
    %v4326 = vmul.f32 %v547, %v4315
    %v4327 = vmul.f32 %v548, %v4315
    %v4328 = vmul.f32 %v549, %v4315
    %v4329 = vmul.f32 %v550, %v4315
    %v4330 = vmul.f32 %v551, %v4315
    %v4331 = vmul.f32 %v552, %v4315
    %v4332 = vmul.f32 %v3966, %v4316
    %v4333 = vmul.f32 %v3965, %v4317
    %v4334 = vmul.f32 %v3964, %v4318
    %v4335 = vmul.f32 %v3963, %v4319
    %v4336 = vmul.f32 %v3962, %v4320
    %v4337 = vmul.f32 %v3961, %v4321
    %v4338 = vmul.f32 %v3960, %v4322
    %v4339 = vmul.f32 %v3959, %v4323
    %v4340 = vmul.f32 %v3958, %v4324
    %v4341 = vmul.f32 %v3957, %v4325
    %v4342 = vmul.f32 %v3956, %v4326
    %v4343 = vmul.f32 %v3955, %v4327
    %v4344 = vmul.f32 %v3954, %v4328
    %v4345 = vmul.f32 %v3953, %v4329
    %v4346 = vmul.f32 %v3952, %v4330
    %v4347 = vmul.f32 %v3967, %v4331
    %v4348 = vadd.f32 %v4298, %v4332
    %v4349 = vadd.f32 %v4299, %v4333
    %v4350 = vadd.f32 %v4300, %v4334
    %v4351 = vadd.f32 %v4301, %v4335
    %v4352 = vadd.f32 %v4302, %v4336
    %v4353 = vadd.f32 %v4303, %v4337
    %v4354 = vadd.f32 %v4304, %v4338
    %v4355 = vadd.f32 %v4305, %v4339
    %v4356 = vadd.f32 %v4306, %v4340
    %v4357 = vadd.f32 %v4307, %v4341
    %v4358 = vadd.f32 %v4308, %v4342
    %v4359 = vadd.f32 %v4309, %v4343
    %v4360 = vadd.f32 %v4310, %v4344
    %v4361 = vadd.f32 %v4311, %v4345
    %v4362 = vadd.f32 %v4312, %v4346
    %v4363 = vadd.f32 %v4313, %v4347
    %v4364 = vld [vmem:[%s1 + $0x6c] sm:$0x1]
    %v4365 = vperm.slane %v4364, 0
    %v4366 = vmul.f32 %v569, %v4365
    %v4367 = vmul.f32 %v570, %v4365
    %v4368 = vmul.f32 %v571, %v4365
    %v4369 = vmul.f32 %v572, %v4365
    %v4370 = vmul.f32 %v573, %v4365
    %v4371 = vmul.f32 %v574, %v4365
    %v4372 = vmul.f32 %v575, %v4365
    %v4373 = vmul.f32 %v576, %v4365
    %v4374 = vmul.f32 %v577, %v4365
    %v4375 = vmul.f32 %v578, %v4365
    %v4376 = vmul.f32 %v579, %v4365
    %v4377 = vmul.f32 %v580, %v4365
    %v4378 = vmul.f32 %v581, %v4365
    %v4379 = vmul.f32 %v582, %v4365
    %v4380 = vmul.f32 %v583, %v4365
    %v4381 = vmul.f32 %v584, %v4365
    %v4382 = vmul.f32 %v4048, %v4366
    %v4383 = vmul.f32 %v4047, %v4367
    %v4384 = vmul.f32 %v4046, %v4368
    %v4385 = vmul.f32 %v4045, %v4369
    %v4386 = vmul.f32 %v4044, %v4370
    %v4387 = vmul.f32 %v4043, %v4371
    %v4388 = vmul.f32 %v4042, %v4372
    %v4389 = vmul.f32 %v4041, %v4373
    %v4390 = vmul.f32 %v4040, %v4374
    %v4391 = vmul.f32 %v4039, %v4375
    %v4392 = vmul.f32 %v4038, %v4376
    %v4393 = vmul.f32 %v4037, %v4377
    %v4394 = vmul.f32 %v4036, %v4378
    %v4395 = vmul.f32 %v4035, %v4379
    %v4396 = vmul.f32 %v4034, %v4380
    %v4397 = vmul.f32 %v4049, %v4381
    %v4398 = vadd.f32 %v4348, %v4382
    %v4399 = vadd.f32 %v4349, %v4383
    %v4400 = vadd.f32 %v4350, %v4384
    %v4401 = vadd.f32 %v4351, %v4385
    %v4402 = vadd.f32 %v4352, %v4386
    %v4403 = vadd.f32 %v4353, %v4387
    %v4404 = vadd.f32 %v4354, %v4388
    %v4405 = vadd.f32 %v4355, %v4389
    %v4406 = vadd.f32 %v4356, %v4390
    %v4407 = vadd.f32 %v4357, %v4391
    %v4408 = vadd.f32 %v4358, %v4392
    %v4409 = vadd.f32 %v4359, %v4393
    %v4410 = vadd.f32 %v4360, %v4394
    %v4411 = vadd.f32 %v4361, %v4395
    %v4412 = vadd.f32 %v4362, %v4396
    %v4413 = vadd.f32 %v4363, %v4397
    %v4414 = vld [vmem:[%s1 + $0x290] sm:$0xff]
    %v4415 = vld [vmem:[%s1 + $0x298] sm:$0xff]
    %v4416 = vld [vmem:[%s1 + $0x2a0] sm:$0xff]
    %v4417 = vld [vmem:[%s1 + $0x2a8] sm:$0xff]
    %v4418 = vld [vmem:[%s1 + $0x2b0] sm:$0xff]
    %v4419 = vld [vmem:[%s1 + $0x2b8] sm:$0xff]
    %v4420 = vld [vmem:[%s1 + $0x2c0] sm:$0xff]
    %v4421 = vld [vmem:[%s1 + $0x2c8] sm:$0xff]
    %v4422 = vld [vmem:[%s1 + $0x2d0] sm:$0xff]
    %v4423 = vld [vmem:[%s1 + $0x2d8] sm:$0xff]
    %v4424 = vld [vmem:[%s1 + $0x2e0] sm:$0xff]
    %v4425 = vld [vmem:[%s1 + $0x2e8] sm:$0xff]
    %v4426 = vld [vmem:[%s1 + $0x2f0] sm:$0xff]
    %v4427 = vld [vmem:[%s1 + $0x2f8] sm:$0xff]
    %v4428 = vld [vmem:[%s1 + $0x300] sm:$0xff]
    %v4429 = vld [vmem:[%s1 + $0x308] sm:$0xff]
    %v4430 = vld [vmem:[%s1 + $0x7c] sm:$0x1]
    %v4431 = vperm.slane %v4430, 0
    %4432 = vmatpush.msra.mxu0 %v4429
    %4433 = vmatpush.msra.mxu0 %v4428
    %4434 = vmatpush.msra.mxu0 %v4427
    %4435 = vmatpush.msra.mxu0 %v4426
    %4436 = vmatpush.msra.mxu0 %v4425
    %4437 = vmatpush.msra.mxu0 %v4424
    %4438 = vmatpush.msra.mxu0 %v4423
    %4439 = vmatpush.msra.mxu0 %v4422
    %4440 = vmatpush.msra.mxu0 %v4421
    %4441 = vmatpush.msra.mxu0 %v4420
    %4442 = vmatpush.msra.mxu0 %v4419
    %4443 = vmatpush.msra.mxu0 %v4418
    %4444 = vmatpush.msra.mxu0 %v4417
    %4445 = vmatpush.msra.mxu0 %v4416
    %4446 = vmatpush.msra.mxu0 %v4415
    %4447 = vmatpush.msra.mxu0 %v4414
    %4448 = vmatmul.f32.gmra.mxu0 %v4398
    %v4449 = vpop.f32.mrf.mxu0
    %v4450 = vadd.f32 %v4431, %v4449
    %4451 = vmatmul.f32.gmra.mxu0 %v4399
    %v4452 = vpop.f32.mrf.mxu0
    %v4453 = vadd.f32 %v4431, %v4452
    %4454 = vmatmul.f32.gmra.mxu0 %v4400
    %v4455 = vpop.f32.mrf.mxu0
    %v4456 = vadd.f32 %v4431, %v4455
    %4457 = vmatmul.f32.gmra.mxu0 %v4401
    %v4458 = vpop.f32.mrf.mxu0
    %v4459 = vadd.f32 %v4431, %v4458
    %4460 = vmatmul.f32.gmra.mxu0 %v4402
    %v4461 = vpop.f32.mrf.mxu0
    %v4462 = vadd.f32 %v4431, %v4461
    %4463 = vmatmul.f32.gmra.mxu0 %v4403
    %v4464 = vpop.f32.mrf.mxu0
    %v4465 = vadd.f32 %v4431, %v4464
    %4466 = vmatmul.f32.gmra.mxu0 %v4404
    %v4467 = vpop.f32.mrf.mxu0
    %v4468 = vadd.f32 %v4431, %v4467
    %4469 = vmatmul.f32.gmra.mxu0 %v4405
    %v4470 = vpop.f32.mrf.mxu0
    %v4471 = vadd.f32 %v4431, %v4470
    %4472 = vmatmul.f32.gmra.mxu0 %v4406
    %v4473 = vpop.f32.mrf.mxu0
    %v4474 = vadd.f32 %v4431, %v4473
    %4475 = vmatmul.f32.gmra.mxu0 %v4407
    %v4476 = vpop.f32.mrf.mxu0
    %v4477 = vadd.f32 %v4431, %v4476
    %4478 = vmatmul.f32.gmra.mxu0 %v4408
    %v4479 = vpop.f32.mrf.mxu0
    %v4480 = vadd.f32 %v4431, %v4479
    %4481 = vmatmul.f32.gmra.mxu0 %v4409
    %v4482 = vpop.f32.mrf.mxu0
    %v4483 = vadd.f32 %v4431, %v4482
    %4484 = vmatmul.f32.gmra.mxu0 %v4410
    %v4485 = vpop.f32.mrf.mxu0
    %v4486 = vadd.f32 %v4431, %v4485
    %4487 = vmatmul.f32.gmra.mxu0 %v4411
    %v4488 = vpop.f32.mrf.mxu0
    %v4489 = vadd.f32 %v4431, %v4488
    %4490 = vmatmul.f32.gmra.mxu0 %v4412
    %v4491 = vpop.f32.mrf.mxu0
    %v4492 = vadd.f32 %v4431, %v4491
    %4493 = vmatmul.f32.gmra.mxu0 %v4413
    %v4494 = vpop.f32.mrf.mxu0
    %v4495 = vadd.f32 %v4431, %v4494
    %4496 = vdwg.mxu0
    %v4497 = vld [vmem:[%s1 + $0x84] sm:$0x1]
    %v4498 = vld [vmem:[%s1 + $0x8c] sm:$0x1]
    %v4499 = vadd.f32 %v4450, %v4453
    %v4500 = vadd.f32 %v4499, %v4456
    %v4501 = vadd.f32 %v4500, %v4459
    %v4502 = vadd.f32 %v4501, %v4462
    %v4503 = vadd.f32 %v4502, %v4465
    %v4504 = vadd.f32 %v4503, %v4468
    %v4505 = vadd.f32 %v4504, %v4471
    %v4506 = vadd.f32 %v4505, %v4474
    %v4507 = vadd.f32 %v4506, %v4477
    %v4508 = vadd.f32 %v4507, %v4480
    %v4509 = vadd.f32 %v4508, %v4483
    %v4510 = vadd.f32 %v4509, %v4486
    %v4511 = vadd.f32 %v4510, %v4489
    %v4512 = vadd.f32 %v4511, %v4492
    %v4513 = vadd.f32 %v4512, %v4495
    %v4514 = vrot.slane %v4513, 4
    %v4515 = vadd.f32 %v4513, %v4514
    %v4516 = vrot.slane %v4515, 2
    %v4517 = vadd.f32 %v4515, %v4516
    %v4518 = vrot.slane %v4517, 1
    %v4519 = vadd.f32 %v4517, %v4518
    %v4520 = vmul.f32 %v4450, %v4450
    %v4521 = vmul.f32 %v4453, %v4453
    %v4522 = vmul.f32 %v4456, %v4456
    %v4523 = vmul.f32 %v4459, %v4459
    %v4524 = vmul.f32 %v4462, %v4462
    %v4525 = vmul.f32 %v4465, %v4465
    %v4526 = vmul.f32 %v4468, %v4468
    %v4527 = vmul.f32 %v4471, %v4471
    %v4528 = vmul.f32 %v4474, %v4474
    %v4529 = vmul.f32 %v4477, %v4477
    %v4530 = vmul.f32 %v4480, %v4480
    %v4531 = vmul.f32 %v4483, %v4483
    %v4532 = vmul.f32 %v4486, %v4486
    %v4533 = vmul.f32 %v4489, %v4489
    %v4534 = vmul.f32 %v4492, %v4492
    %v4535 = vmul.f32 %v4495, %v4495
    %v4536 = vadd.f32 %v4520, %v4521
    %v4537 = vadd.f32 %v4536, %v4522
    %v4538 = vadd.f32 %v4537, %v4523
    %v4539 = vadd.f32 %v4538, %v4524
    %v4540 = vadd.f32 %v4539, %v4525
    %v4541 = vadd.f32 %v4540, %v4526
    %v4542 = vadd.f32 %v4541, %v4527
    %v4543 = vadd.f32 %v4542, %v4528
    %v4544 = vadd.f32 %v4543, %v4529
    %v4545 = vadd.f32 %v4544, %v4530
    %v4546 = vadd.f32 %v4545, %v4531
    %v4547 = vadd.f32 %v4546, %v4532
    %v4548 = vadd.f32 %v4547, %v4533
    %v4549 = vadd.f32 %v4548, %v4534
    %v4550 = vadd.f32 %v4549, %v4535
    %v4551 = vrot.slane %v4550, 4
    %v4552 = vadd.f32 %v4550, %v4551
    %v4553 = vrot.slane %v4552, 2
    %v4554 = vadd.f32 %v4552, %v4553
    %v4555 = vrot.slane %v4554, 1
    %v4556 = vadd.f32 %v4554, %v4555
    %v4557 = vmul.f32 %v4519, 0.0078125
    %v4558 = vmul.f32 %v4556, 0.0078125
    %v4559 = vmul.f32 %v4557, %v4557
    %v4560 = vsub.f32 %v4558, %v4559
    %v4561 = vadd.f32 %v4560, 1e-05
    %v4562 = vrsqrt.pop %v4561
    %v4563 = vmul.f32 %v4562, %v4561
    %v4564 = vmul.f32 %v4563, %v4562
    %v4565 = vmul.f32 0.5, %v4564
    %v4566 = vsub.f32 1.5, %v4565
    %v4567 = vmul.f32 %v4562, %v4566
    %vm4568 = vweird.f32 %v4561
    %vm4569 = vweird.f32 %v4562
    %vm4570 = vmor %vm4568, %vm4569
    %v4571 = vsel %vm4570, %v4562, %v4567
    %v4572 = vmul.f32 %v4497, %v4571
    %v4573 = vmul.f32 %v4557, %v4572
    %v4574 = vsub.f32 %v4498, %v4573
    %v4575 = vperm.slane %v4572, 0
    %v4576 = vmul.f32 %v4450, %v4575
    %v4577 = vmul.f32 %v4453, %v4575
    %v4578 = vmul.f32 %v4456, %v4575
    %v4579 = vmul.f32 %v4459, %v4575
    %v4580 = vmul.f32 %v4462, %v4575
    %v4581 = vmul.f32 %v4465, %v4575
    %v4582 = vmul.f32 %v4468, %v4575
    %v4583 = vmul.f32 %v4471, %v4575
    %v4584 = vmul.f32 %v4474, %v4575
    %v4585 = vmul.f32 %v4477, %v4575
    %v4586 = vmul.f32 %v4480, %v4575
    %v4587 = vmul.f32 %v4483, %v4575
    %v4588 = vmul.f32 %v4486, %v4575
    %v4589 = vmul.f32 %v4489, %v4575
    %v4590 = vmul.f32 %v4492, %v4575
    %v4591 = vmul.f32 %v4495, %v4575
    %v4592 = vperm.slane %v4574, 0
    %v4593 = vadd.f32 %v4576, %v4592
    %v4594 = vadd.f32 %v4577, %v4592
    %v4595 = vadd.f32 %v4578, %v4592
    %v4596 = vadd.f32 %v4579, %v4592
    %v4597 = vadd.f32 %v4580, %v4592
    %v4598 = vadd.f32 %v4581, %v4592
    %v4599 = vadd.f32 %v4582, %v4592
    %v4600 = vadd.f32 %v4583, %v4592
    %v4601 = vadd.f32 %v4584, %v4592
    %v4602 = vadd.f32 %v4585, %v4592
    %v4603 = vadd.f32 %v4586, %v4592
    %v4604 = vadd.f32 %v4587, %v4592
    %v4605 = vadd.f32 %v4588, %v4592
    %v4606 = vadd.f32 %v4589, %v4592
    %v4607 = vadd.f32 %v4590, %v4592
    %v4608 = vadd.f32 %v4591, %v4592
    %v4609 = vmax.f32 %v4593, 0.0
    %v4610 = vmax.f32 %v4594, 0.0
    %v4611 = vmax.f32 %v4595, 0.0
    %v4612 = vmax.f32 %v4596, 0.0
    %v4613 = vmax.f32 %v4597, 0.0
    %v4614 = vmax.f32 %v4598, 0.0
    %v4615 = vmax.f32 %v4599, 0.0
    %v4616 = vmax.f32 %v4600, 0.0
    %v4617 = vmax.f32 %v4601, 0.0
    %v4618 = vmax.f32 %v4602, 0.0
    %v4619 = vmax.f32 %v4603, 0.0
    %v4620 = vmax.f32 %v4604, 0.0
    %v4621 = vmax.f32 %v4605, 0.0
    %v4622 = vmax.f32 %v4606, 0.0
    %v4623 = vmax.f32 %v4607, 0.0
    %v4624 = vmax.f32 %v4608, 0.0
    %v4625 = vlaneseq
    %v4626 = vand.u32 %v4625, 127
    %v4627 = vmul.u32 %v281, 64
    %vm4628 = vcmp.ge.s32.totalorder %v4626, %v4627
    %v4629 = vadd.s32 %v281, 1
    %v4630 = vmul.u32 %v4629, 64
    %vm4631 = vcmp.lt.s32.totalorder %v4626, %v4630
    %vm4632 = vmand %vm4628, %vm4631
    %v4633 = vsel %vm4632, 0.015625, 0.0
    %4634 = vmatpush.msra.mxu0 %v4624
    %4635 = vmatpush.msra.mxu0 %v4623
    %4636 = vmatpush.msra.mxu0 %v4622
    %4637 = vmatpush.msra.mxu0 %v4621
    %4638 = vmatpush.msra.mxu0 %v4620
    %4639 = vmatpush.msra.mxu0 %v4619
    %4640 = vmatpush.msra.mxu0 %v4618
    %4641 = vmatpush.msra.mxu0 %v4617
    %4642 = vmatpush.msra.mxu0 %v4616
    %4643 = vmatpush.msra.mxu0 %v4615
    %4644 = vmatpush.msra.mxu0 %v4614
    %4645 = vmatpush.msra.mxu0 %v4613
    %4646 = vmatpush.msra.mxu0 %v4612
    %4647 = vmatpush.msra.mxu0 %v4611
    %4648 = vmatpush.msra.mxu0 %v4610
    %4649 = vmatpush.msra.mxu0 %v4609
    %4650 = vmatmul.f32.gmra.mxu0 %v4633
    %v4651 = vpop.f32.mrf.mxu0
    %v4652 = vadd.f32 0.0, %v4651
    %4653 = vdwg.mxu0
    %4654 = vst [vmem:[#allocation2] sm:$0x3] %v4652
    %v4655 = vld [vmem:[%s1 + $0x310] sm:$0xff]
    %v4656 = vld [vmem:[%s1 + $0x318] sm:$0xff]
    %v4657 = vld [vmem:[%s1 + $0x320] sm:$0xff]
    %v4658 = vld [vmem:[%s1 + $0x328] sm:$0xff]
    %v4659 = vld [vmem:[%s1 + $0x330] sm:$0xff]
    %v4660 = vld [vmem:[%s1 + $0x338] sm:$0xff]
    %v4661 = vld [vmem:[%s1 + $0x340] sm:$0xff]
    %v4662 = vld [vmem:[%s1 + $0x348] sm:$0xff]
    %v4663 = vld [vmem:[%s1 + $0x350] sm:$0xff]
    %v4664 = vld [vmem:[%s1 + $0x358] sm:$0xff]
    %v4665 = vld [vmem:[%s1 + $0x360] sm:$0xff]
    %v4666 = vld [vmem:[%s1 + $0x368] sm:$0xff]
    %v4667 = vld [vmem:[%s1 + $0x370] sm:$0xff]
    %v4668 = vld [vmem:[%s1 + $0x378] sm:$0xff]
    %v4669 = vld [vmem:[%s1 + $0x380] sm:$0xff]
    %v4670 = vld [vmem:[%s1 + $0x388] sm:$0xff]
    %4671 = vmatpush.msra.mxu0 %v4670
    %4672 = vmatpush.msra.mxu0 %v4669
    %4673 = vmatpush.msra.mxu0 %v4668
    %4674 = vmatpush.msra.mxu0 %v4667
    %4675 = vmatpush.msra.mxu0 %v4666
    %4676 = vmatpush.msra.mxu0 %v4665
    %4677 = vmatpush.msra.mxu0 %v4664
    %4678 = vmatpush.msra.mxu0 %v4663
    %4679 = vmatpush.msra.mxu0 %v4662
    %4680 = vmatpush.msra.mxu0 %v4661
    %4681 = vmatpush.msra.mxu0 %v4660
    %4682 = vmatpush.msra.mxu0 %v4659
    %4683 = vmatpush.msra.mxu0 %v4658
    %4684 = vmatpush.msra.mxu0 %v4657
    %4685 = vmatpush.msra.mxu0 %v4656
    %4686 = vmatpush.msra.mxu0 %v4655
    %4687 = vmatmul.f32.gmra.mxu0 %v4652
    %v4688 = vpop.f32.mrf.mxu0
    %v4689 = vadd.f32 0.0, %v4688
    %4690 = vdwg.mxu0
    %4691 = vst [vmem:[#allocation4] sm:$0x3] %v4689
    // Predicated region
    $region10: #{audio_dscnn_forward.1} parent=1 // pred_check
      _
    $region11: #{audio_dscnn_forward.1} parent=1 // pred_check_branch
      %4693 = sbr.rel (0) target = $region13
    $region12: #{audio_dscnn_forward.1} parent=1 // pred_region
      %4695 = vsyncadd [#allocation3], 0
      %s4697 = sshll.u32 [#allocation2], 4
      %s4698 = int_to_ptr.vmem [resolvable:$true] %s4697
      %s4699 = sshll.u32 %s2, 4
      %s4700 = int_to_ptr.hbm [resolvable:$true] %s4699
      %4702 = dma.vmem_to_hbm [thread:$0]  %s4698, 32, %s4700, [#allocation3]
    $region13: #{audio_dscnn_forward.1} parent=1 // pred_fallthru
      _
    // Predicated region
    $region14: #{audio_dscnn_forward.1} parent=1 // pred_check
      _
    $region15: #{audio_dscnn_forward.1} parent=1 // pred_check_branch
      %4704 = sbr.rel (0) target = $region17
    $region16: #{audio_dscnn_forward.1} parent=1 // pred_region
      %4706 = vsyncadd [#allocation5], 0
      %s4708 = sshll.u32 [#allocation4], 4
      %s4709 = int_to_ptr.vmem [resolvable:$true] %s4708
      %s4710 = sshll.u32 %s3, 4
      %s4711 = int_to_ptr.hbm [resolvable:$true] %s4710
      %4713 = dma.vmem_to_hbm [thread:$0]  %s4709, 32, %s4711, [#allocation5]
    $region17: #{audio_dscnn_forward.1} parent=1 // pred_fallthru
      _
    // Predicated region
    $region18: #{audio_dscnn_forward.1} parent=1 // pred_check
      _
    $region19: #{audio_dscnn_forward.1} parent=1 // pred_check_branch
      %4715 = sbr.rel (0) target = $region21
    $region20: #{audio_dscnn_forward.1} parent=1 // pred_region
      %4717 = dma.done [#allocation3], 32
    $region21: #{audio_dscnn_forward.1} parent=1 // pred_fallthru
      _
    // Predicated region
    $region22: #{audio_dscnn_forward.1} parent=1 // pred_check
      _
    $region23: #{audio_dscnn_forward.1} parent=1 // pred_check_branch
      %4719 = sbr.rel (0) target = $region25
    $region24: #{audio_dscnn_forward.1} parent=1 // pred_region
      %4721 = dma.done [#allocation5], 32
    $region25: #{audio_dscnn_forward.1} parent=1 // pred_fallthru
      _
    %4722 = vsyncpa [#allocation3], 1
    %4723 = vsyncpa [#allocation5], 1

</llo_original>
